<compile_context>
chip_gen: v7x
topology: tpu7x:2x2x1
jax: 0.10.0
libtpu: 0.0.40
codegen_flags: <defaults>
</compile_context>

<pallas_src>
import functools

import numpy as np
import jax
import jax.numpy as jnp
from jax.experimental import pallas as pl
from jax.experimental.pallas import tpu as pltpu

# ---------------------------------------------------------------------------
# config (mirrors the cfg flags the module reads)
# ---------------------------------------------------------------------------
EMBED_DIM = 32                        # phrase_embed_dim (small demo size)
BIDIRECTIONAL = True
PHRASE_SELECT_TYPE = "Mean"           # cfg.MODEL.VG.PHRASE_SELECT_TYPE
# TODO(synk): cfg.MODEL.VG.USING_DET_KNOWLEDGE (GloVe pickle dict lookup) is a
# host-side python dict lookup with no Pallas equivalent; disabled here.
USING_DET_KNOWLEDGE = False


# ---------------------------------------------------------------------------
# Fused kernel:  HBM-table gather -> bidirectional GRU -> span Mean/Sum pool
# grid = (B,)   one grid step per sentence (phrases of a sentence are batched)
# ---------------------------------------------------------------------------
def _make_phrase_kernel(use_mean, P, L, H):
    """P = max phrases / sentence, L = max phrase length, H = hidden dim."""
    N = P * L

    def kernel(ids_ref,                       # SMEM (B, P*L) int32   (scalar prefetch)
               lens_ref,                      # VMEM (1, P, 1) int32
               table_ref,                     # HBM  (V, E)  (memory_space=pl.ANY)
               wi_ref, wh_ref, bi_ref, bh_ref,  # (6,E,H) (6,H,H) (6,1,H) (6,1,H)
               phr_ref, dec_ref,              # outputs (1,P,2H) (1,P*L,E)
               emb_t, emb_p,                  # scratch (P*L,E) time-major / phrase-major
               sem_t, sem_p):                 # DMA sems, (P*L,) each
        b = pl.program_id(0)

        # ---- 1) embedding gather: HBM rows -> VMEM, two layouts ------------
        #   emb_t : time-major   (row t*P + p) -> GRU input
        #   emb_p : phrase-major (row p*L + t) -> decoder word-embedding output
        # padded ids are 0 and table row 0 is the zero padding row.
        for p in range(P):
            for t in range(L):
                n = p * L + t                             # ids are phrase-major
                idx = ids_ref[b, n]                       # cheap SMEM scalar read
                pltpu.make_async_copy(table_ref.at[pl.ds(idx, 1)],
                                      emb_t.at[pl.ds(t * P + p, 1)],
                                      sem_t.at[n]).start()
                pltpu.make_async_copy(table_ref.at[pl.ds(idx, 1)],
                                      emb_p.at[pl.ds(n, 1)],
                                      sem_p.at[n]).start()

        # wait only for the GRU-input gather now; the decoder gather keeps
        # running on the DMA engine underneath the recurrence below.
        for p in range(P):
            for t in range(L):
                n = p * L + t
                pltpu.make_async_copy(table_ref.at[pl.ds(0, 1)],   # wait needs dst+sem only
                                      emb_t.at[pl.ds(t * P + p, 1)],
                                      sem_t.at[n]).wait()

        x = emb_t[...]                                # (L*P, E) time-major f32

        lens = lens_ref[0]                            # (P, 1) int32
        lens_m1 = lens - 1
        lens_f = lens.astype(jnp.float32)

        # ---- 2) input-side gate pre-activations for every token (MXU, once)
        # stacked gate index k: 0..2 = forward (r, z, n), 3..5 = backward (r, z, n)
        gx = [jnp.dot(x, wi_ref[k], preferred_element_type=jnp.float32) + bi_ref[k]
              for k in range(6)]                      # each (L*P, H)
        wh = [wh_ref[k] for k in range(6)]
        bh = [bh_ref[k] for k in range(6)]

        def gru_step(h_prev, gr, gz, gn, k0):
            # PyTorch gate order / formulas: r, z, n with n = tanh(gx_n + r*(W_hn h + b_hn))
            hr = jnp.dot(h_prev, wh[k0 + 0], preferred_element_type=jnp.float32) + bh[k0 + 0]
            hz = jnp.dot(h_prev, wh[k0 + 1], preferred_element_type=jnp.float32) + bh[k0 + 1]
            hn = jnp.dot(h_prev, wh[k0 + 2], preferred_element_type=jnp.float32) + bh[k0 + 2]
            r = jax.nn.sigmoid(gr + hr)
            z = jax.nn.sigmoid(gz + hz)
            n = jnp.tanh(gn + r * hn)
            return (1.0 - z) * n + z * h_prev

        zero_h = jnp.zeros((P, H), jnp.float32)

        # ---- 3) forward recurrence (statically unrolled over time) ---------
        h = zero_h
        acc_f = zero_h
        for t in range(L):
            sl = slice(t * P, (t + 1) * P)
            h = gru_step(h, gx[0][sl], gx[1][sl], gx[2][sl], 0)
            acc_f = acc_f + jnp.where(t < lens, h, 0.0)

        # ---- 4) backward recurrence: reset hidden at the last valid token --
        h = zero_h
        acc_b = zero_h
        for t in range(L - 1, -1, -1):
            h_in = jnp.where(t >= lens_m1, 0.0, h)    # h=0 entering t == len-1
            sl = slice(t * P, (t + 1) * P)
            h = gru_step(h_in, gx[3][sl], gx[4][sl], gx[5][sl], 3)
            acc_b = acc_b + jnp.where(t < lens, h, 0.0)

        # ---- 5) span pooling (Mean / Sum), single lane-dense (P, 2H) store -
        if use_mean:
            inv = pl.reciprocal(jnp.maximum(lens_f, 1.0), approx=True)
            acc_f = acc_f * inv
            acc_b = acc_b * inv
        phr_ref[0] = jnp.concatenate([acc_f, acc_b], axis=-1)

        # ---- 6) decoder word embeds: wait the phrase-major gather, one store
        for p in range(P):
            for t in range(L):
                n = p * L + t
                pltpu.make_async_copy(table_ref.at[pl.ds(0, 1)],
                                      emb_p.at[pl.ds(n, 1)],
                                      sem_p.at[n]).wait()
        dec_ref[0] = emb_p[...]                       # (P*L, E) phrase-major

    return kernel


@functools.lru_cache(maxsize=None)
def _build_phrase_embed_call(B, P, L, V, E, H, use_mean):
    """One fused pallas_call for the whole batch; cached by static shapes."""
    N = P * L
    kernel = _make_phrase_kernel(use_mean, P, L, H)
    grid_spec = pltpu.PrefetchScalarGridSpec(
        num_scalar_prefetch=1,                                     # ids -> SMEM
        grid=(B,),
        in_specs=[
            pl.BlockSpec((1, P, 1), lambda b, ids: (b, 0, 0)),     # phrase lengths
            pl.BlockSpec(memory_space=pl.ANY),                     # embedding table (HBM)
            pl.BlockSpec((6, E, H), lambda b, ids: (0, 0, 0)),     # W_i per gate (pre-T)
            pl.BlockSpec((6, H, H), lambda b, ids: (0, 0, 0)),     # W_h per gate (pre-T)
            pl.BlockSpec((6, 1, H), lambda b, ids: (0, 0, 0)),     # b_i per gate
            pl.BlockSpec((6, 1, H), lambda b, ids: (0, 0, 0)),     # b_h per gate
        ],
        out_specs=(
            pl.BlockSpec((1, P, 2 * H), lambda b, ids: (b, 0, 0)),  # phrase embeds
            pl.BlockSpec((1, N, E), lambda b, ids: (b, 0, 0)),      # decoder word embeds
        ),
        scratch_shapes=[
            pltpu.VMEM((N, E), jnp.float32),        # gathered embeddings (time-major)
            pltpu.VMEM((N, E), jnp.float32),        # gathered embeddings (phrase-major)
            pltpu.SemaphoreType.DMA((N,)),          # sems for time-major gather
            pltpu.SemaphoreType.DMA((N,)),          # sems for phrase-major gather
        ],
    )
    return pl.pallas_call(
        kernel,
        grid_spec=grid_spec,
        out_shape=(jax.ShapeDtypeStruct((B, P, 2 * H), jnp.float32),
                   jax.ShapeDtypeStruct((B, N, E), jnp.float32)),
        compiler_params=pltpu.CompilerParams(
            dimension_semantics=("parallel",),      # shard batch over TCs (v7x)
            vmem_limit_bytes=32 * 1024 * 1024),
    )


# ---------------------------------------------------------------------------
# Module: parameter init + forward (host bookkeeping mirrors the PyTorch code)
# ---------------------------------------------------------------------------
class PhraseEmbeddingPhrJAX:
    def __init__(self, phr_vocab, phrase_embed_dim=EMBED_DIM,
                 bidirectional=BIDIRECTIONAL, seed=0):
        # TODO(synk): only the bidirectional GRU branch of the reference is implemented.
        assert bidirectional, "unidirectional branch not implemented"
        self.phr_vocab = list(phr_vocab)
        self.phr_vocab_to_id = {v: i + 1 for i, v in enumerate(self.phr_vocab)}
        self.phr_vocab_size = len(self.phr_vocab) + 1
        self.embed_dim = phrase_embed_dim
        self.hidden_dim = phrase_embed_dim // 2
        E, H = self.embed_dim, self.hidden_dim

        key = jax.random.PRNGKey(seed)
        ks = jax.random.split(key, 9)
        k = 1.0 / np.sqrt(H)

        def u(kk, shape):
            return jax.random.uniform(kk, shape, jnp.float32, -k, k)

        table = jax.random.normal(ks[0], (self.phr_vocab_size, E), jnp.float32)
        self.enc_embedding = table.at[0].set(0.0)          # padding_idx = 0

        # PyTorch-layout GRU params (gate rows stacked [r, z, n]) kept for reference
        self.w_ih = {"f": np.asarray(u(ks[1], (3 * H, E))), "b": np.asarray(u(ks[2], (3 * H, E)))}
        self.w_hh = {"f": np.asarray(u(ks[3], (3 * H, H))), "b": np.asarray(u(ks[4], (3 * H, H)))}
        self.b_ih = {"f": np.asarray(u(ks[5], (3 * H,))), "b": np.asarray(u(ks[6], (3 * H,)))}
        self.b_hh = {"f": np.asarray(u(ks[7], (3 * H,))), "b": np.asarray(u(ks[8], (3 * H,)))}

        # repack per-gate, pre-transposed, stacked [f_r, f_z, f_n, b_r, b_z, b_n]
        def gate(w, g):
            return w[g * H:(g + 1) * H]

        dirs_gates = [(d, g) for d in ("f", "b") for g in range(3)]
        self.Wi = jnp.asarray(np.stack([gate(self.w_ih[d], g).T for d, g in dirs_gates]))        # (6,E,H)
        self.Wh = jnp.asarray(np.stack([gate(self.w_hh[d], g).T for d, g in dirs_gates]))        # (6,H,H)
        self.bi = jnp.asarray(np.stack([gate(self.b_ih[d], g).reshape(1, H) for d, g in dirs_gates]))
        self.bh = jnp.asarray(np.stack([gate(self.b_hh[d], g).reshape(1, H) for d, g in dirs_gates]))

    @staticmethod
    def filtering_phrase(phrases, all_phrase):
        return [phr for phr in phrases if phr["phrase_id"] in all_phrase]

    def forward(self, all_sentences, all_phrase_ids, all_sent_sgs=None):
        E, H = self.embed_dim, self.hidden_dim
        batch_phrase_ids, batch_phrase_types, batch_phrase_len = [], [], []
        batch_phrase_dec_ids, batch_phrase_mask, batch_glove_phrase_embed = [], [], []
        per_sent_enc_ids, per_sent_maxlen = [], []

        # ---- host tokenization / id bookkeeping (same as reference) --------
        for idx, sent in enumerate(all_sentences):
            valid_phrases = self.filtering_phrase(sent["phrases"], all_phrase_ids[idx])
            phrase_ids, phrase_types, lengths, tok_lists = [], [], [], []
            for phr in valid_phrases:
                phrase_ids.append(phr["phrase_id"])
                phrase_types.append(phr["phrase_type"])
                toks = phr["phrase"].lower().split(" ")
                tok_lists.append(toks)
                lengths.append(len(toks))
            max_len = int(np.array(lengths).max())
            P_s = len(valid_phrases)
            phrase_enc_ids = np.zeros((P_s, max_len), dtype=np.int32)
            phrase_dec_ids = np.zeros((P_s, max_len + 1))
            phrase_mask = np.zeros((P_s, max_len + 1), dtype=np.float32)
            for pid, toks in enumerate(tok_lists):
                for tid, w in enumerate(toks):
                    wid = self.phr_vocab_to_id[w]
                    phrase_enc_ids[pid, tid] = wid
                    phrase_dec_ids[pid, tid] = wid
                    phrase_mask[pid, tid] = 1.0
                phrase_mask[pid, len(toks)] = 1.0
            # TODO(synk): USING_DET_KNOWLEDGE GloVe per-word embedding omitted (host dict).
            batch_phrase_ids.append(phrase_ids)
            batch_phrase_types.append(phrase_types)
            batch_phrase_len.append(lengths)
            batch_phrase_dec_ids.append(phrase_dec_ids)
            batch_phrase_mask.append(jnp.asarray(phrase_mask))
            batch_glove_phrase_embed.append([])
            per_sent_enc_ids.append(phrase_enc_ids)
            per_sent_maxlen.append(max_len)

        # ---- pad to batch-wide (P_max, L_max) and run ONE fused Pallas call -
        B = len(all_sentences)
        P_max = max(ids.shape[0] for ids in per_sent_enc_ids)
        L_max = max(per_sent_maxlen)
        ids_np = np.zeros((B, P_max * L_max), dtype=np.int32)
        lens_np = np.zeros((B, P_max, 1), dtype=np.int32)
        for b, (enc, lens) in enumerate(zip(per_sent_enc_ids, batch_phrase_len)):
            P_s, L_s = enc.shape
            blk = np.zeros((P_max, L_max), dtype=np.int32)
            blk[:P_s, :L_s] = enc
            ids_np[b] = blk.reshape(-1)                      # phrase-major flatten
            lens_np[b, :P_s, 0] = np.asarray(lens, dtype=np.int32)

        call = _build_phrase_embed_call(B, P_max, L_max, self.phr_vocab_size,
                                        E, H, PHRASE_SELECT_TYPE == "Mean")
        phr_all, dec_all = call(jnp.asarray(ids_np), jnp.asarray(lens_np),
                                self.enc_embedding, self.Wi, self.Wh, self.bi, self.bh)
        dec_all = dec_all.reshape(B, P_max, L_max, E)

        batch_phrase_embed, batch_decoder_word_embed = [], []
        for b in range(B):
            P_s = len(batch_phrase_ids[b])
            L_s = per_sent_maxlen[b]
            batch_phrase_embed.append(phr_all[b, :P_s])              # (P_s, 2H)
            batch_decoder_word_embed.append(dec_all[b, :P_s, :L_s])  # (P_s, max_len_s, E)

        return (batch_phrase_ids, batch_phrase_types, batch_phrase_embed,
                batch_phrase_len, batch_phrase_dec_ids, batch_phrase_mask,
                batch_decoder_word_embed, batch_glove_phrase_embed)


# ---------------------------------------------------------------------------
# pure-numpy reference (PyTorch-faithful) for a single phrase — used as a check
# ---------------------------------------------------------------------------
def _np_sigmoid(x):
    return 1.0 / (1.0 + np.exp(-x))


def _np_phrase_embed_ref(model, toks):
    H = model.hidden_dim
    table = np.asarray(model.enc_embedding)
    ids = np.array([model.phr_vocab_to_id[w] for w in toks])
    x = table[ids]                                       # (L, E)

    def run(xs, w_ih, w_hh, b_ih, b_hh):
        h = np.zeros((H,), np.float32)
        out = []
        for t in range(xs.shape[0]):
            gi = w_ih @ xs[t] + b_ih
            gh = w_hh @ h + b_hh
            r = _np_sigmoid(gi[:H] + gh[:H])
            z = _np_sigmoid(gi[H:2 * H] + gh[H:2 * H])
            n = np.tanh(gi[2 * H:] + r * gh[2 * H:])
            h = (1.0 - z) * n + z * h
            out.append(h)
        return np.stack(out)

    f = run(x, model.w_ih["f"], model.w_hh["f"], model.b_ih["f"], model.b_hh["f"])
    bwd = run(x[::-1], model.w_ih["b"], model.w_hh["b"], model.b_ih["b"], model.b_hh["b"])[::-1]
    out = np.concatenate([f, bwd], axis=1)               # (L, 2H)
    return out.mean(axis=0) if PHRASE_SELECT_TYPE == "Mean" else out.sum(axis=0)


# ---------------------------------------------------------------------------
# main: deterministic synthetic inputs, run once, verify, print KERNEL_OK
# ---------------------------------------------------------------------------
if __name__ == "__main__":
    phr_vocab = ["a", "man", "red", "bike", "the", "street"]
    model = PhraseEmbeddingPhrJAX(phr_vocab, phrase_embed_dim=EMBED_DIM, seed=0)

    all_sentences = [
        {"sentence": "a man is riding a red bike on the street",
         "phrases": [
             {"phrase_id": 101, "phrase_type": "people", "phrase": "a man", "first_word_index": 0},
             {"phrase_id": 102, "phrase_type": "vehicle", "phrase": "a red bike", "first_word_index": 4},
             {"phrase_id": 103, "phrase_type": "scene", "phrase": "the street", "first_word_index": 8},
         ]},
        {"sentence": "the man is on the bike",
         "phrases": [
             {"phrase_id": 201, "phrase_type": "people", "phrase": "the man", "first_word_index": 0},
             {"phrase_id": 202, "phrase_type": "vehicle", "phrase": "the bike", "first_word_index": 4},
         ]},
    ]
    all_phrase_ids = [[101, 102, 103], [201, 202]]
    all_sent_sgs = [[], []]          # unused by this module (kept for signature parity)

    outs = model.forward(all_sentences, all_phrase_ids, all_sent_sgs)
    (b_ids, b_types, b_embed, b_len, b_dec_ids, b_mask, b_dec_embed, b_glove) = outs

    for item in jax.tree_util.tree_leaves(outs):
        if isinstance(item, jax.Array):
            jax.block_until_ready(item)

    # shape checks
    assert b_embed[0].shape == (3, EMBED_DIM)
    assert b_embed[1].shape == (2, EMBED_DIM)
    assert b_dec_embed[0].shape == (3, 3, EMBED_DIM)
    assert b_dec_embed[1].shape == (2, 2, EMBED_DIM)
    assert b_dec_ids[0].shape == (3, 4) and b_mask[0].shape == (3, 4)
    assert b_len == [[2, 3, 2], [2, 2]]

    # numeric check against a pure-numpy PyTorch-faithful reference
    table_np = np.asarray(model.enc_embedding)
    for b, sent in enumerate(all_sentences):
        valid = model.filtering_phrase(sent["phrases"], all_phrase_ids[b])
        for p, phr in enumerate(valid):
            toks = phr["phrase"].lower().split(" ")
            ref = _np_phrase_embed_ref(model, toks)
            got = np.asarray(b_embed[b][p])
            np.testing.assert_allclose(got, ref, rtol=5e-2, atol=5e-3)
            # decoder word embeds are exactly the embedding-table rows
            ids = np.array([model.phr_vocab_to_id[w] for w in toks])
            np.testing.assert_allclose(np.asarray(b_dec_embed[b][p, :len(toks)]),
                                       table_np[ids], rtol=0, atol=1e-6)

    print("KERNEL_OK")
</pallas_src>

<mosaic_0001>
module attributes {stable_mosaic.version = 11 : i64} {
  func.func @kernel(%arg0: i32, %arg1: memref<2x9xi32, #tpu.memory_space<smem>>, %arg2: memref<1x3x1xi32, #tpu.memory_space<vmem>>, %arg3: memref<7x32xf32, #tpu.memory_space<any>>, %arg4: memref<6x32x16xf32, #tpu.memory_space<vmem>>, %arg5: memref<6x16x16xf32, #tpu.memory_space<vmem>>, %arg6: memref<6x1x16xf32, #tpu.memory_space<vmem>>, %arg7: memref<6x1x16xf32, #tpu.memory_space<vmem>>, %arg8: memref<1x3x32xf32, #tpu.memory_space<vmem>>, %arg9: memref<1x9x32xf32, #tpu.memory_space<vmem>>, %arg10: memref<9x32xf32, #tpu.memory_space<vmem>>, %arg11: memref<9x32xf32, #tpu.memory_space<vmem>>, %arg12: memref<9x!tpu.dma_semaphore, #tpu.memory_space<semaphore_mem>>, %arg13: memref<9x!tpu.dma_semaphore, #tpu.memory_space<semaphore_mem>>) attributes {dimension_semantics = [#tpu.dimension_semantics<parallel>], iteration_bounds = array<i64: 2>, scalar_prefetch = 1 : i64, scratch_operands = 4 : i64, tpu.core_type = #tpu.core_type<tc>, window_params = [{transform_indices = @transform_0, window_bounds = array<i64: 1, 3, 1>}, {}, {pipeline_mode = #tpu.pipeline_mode<synchronous>, transform_indices = @transform_2, window_bounds = array<i64: 6, 32, 16>}, {pipeline_mode = #tpu.pipeline_mode<synchronous>, transform_indices = @transform_3, window_bounds = array<i64: 6, 16, 16>}, {pipeline_mode = #tpu.pipeline_mode<synchronous>, transform_indices = @transform_4, window_bounds = array<i64: 6, 1, 16>}, {pipeline_mode = #tpu.pipeline_mode<synchronous>, transform_indices = @transform_5, window_bounds = array<i64: 6, 1, 16>}, {transform_indices = @transform_6, window_bounds = array<i64: 1, 3, 32>}, {transform_indices = @transform_7, window_bounds = array<i64: 1, 9, 32>}]} {
    %0 = arith.index_cast %arg0 : i32 to index
    %c0 = arith.constant 0 : index
    %1 = memref.load %arg1[%0, %c0] : memref<2x9xi32, #tpu.memory_space<smem>>
    %c0_i32 = arith.constant 0 : i32
    %c0_i32_0 = arith.constant 0 : i32
    %2 = tpu.memref_slice %arg3[%1, %c0_i32_0] : memref<7x32xf32, #tpu.memory_space<any>> -> memref<1x32xf32, #tpu.memory_space<any>>
    %c0_i32_1 = arith.constant 0 : i32
    %c0_i32_2 = arith.constant 0 : i32
    %3 = tpu.memref_slice %arg10[%c0_i32_1, %c0_i32_2] : memref<9x32xf32, #tpu.memory_space<vmem>> -> memref<1x32xf32, #tpu.memory_space<vmem>>
    %4 = tpu.memref_slice %arg12[%c0_i32] : memref<9x!tpu.dma_semaphore, #tpu.memory_space<semaphore_mem>> -> memref<1x!tpu.dma_semaphore, #tpu.memory_space<semaphore_mem>>
    %5 = tpu.memref_squeeze %4 : memref<1x!tpu.dma_semaphore, #tpu.memory_space<semaphore_mem>> -> memref<!tpu.dma_semaphore, #tpu.memory_space<semaphore_mem>>
    tpu.enqueue_dma source(%2 : memref<1x32xf32, #tpu.memory_space<any>>) target(%3 : memref<1x32xf32, #tpu.memory_space<vmem>>) target_semaphore(%5 : memref<!tpu.dma_semaphore, #tpu.memory_space<semaphore_mem>>)
    %c0_i32_3 = arith.constant 0 : i32
    %c0_i32_4 = arith.constant 0 : i32
    %6 = tpu.memref_slice %arg3[%1, %c0_i32_4] : memref<7x32xf32, #tpu.memory_space<any>> -> memref<1x32xf32, #tpu.memory_space<any>>
    %c0_i32_5 = arith.constant 0 : i32
    %c0_i32_6 = arith.constant 0 : i32
    %7 = tpu.memref_slice %arg11[%c0_i32_5, %c0_i32_6] : memref<9x32xf32, #tpu.memory_space<vmem>> -> memref<1x32xf32, #tpu.memory_space<vmem>>
    %8 = tpu.memref_slice %arg13[%c0_i32_3] : memref<9x!tpu.dma_semaphore, #tpu.memory_space<semaphore_mem>> -> memref<1x!tpu.dma_semaphore, #tpu.memory_space<semaphore_mem>>
    %9 = tpu.memref_squeeze %8 : memref<1x!tpu.dma_semaphore, #tpu.memory_space<semaphore_mem>> -> memref<!tpu.dma_semaphore, #tpu.memory_space<semaphore_mem>>
    tpu.enqueue_dma source(%6 : memref<1x32xf32, #tpu.memory_space<any>>) target(%7 : memref<1x32xf32, #tpu.memory_space<vmem>>) target_semaphore(%9 : memref<!tpu.dma_semaphore, #tpu.memory_space<semaphore_mem>>)
    %10 = arith.index_cast %arg0 : i32 to index
    %c1 = arith.constant 1 : index
    %11 = memref.load %arg1[%10, %c1] : memref<2x9xi32, #tpu.memory_space<smem>>
    %c1_i32 = arith.constant 1 : i32
    %c0_i32_7 = arith.constant 0 : i32
    %12 = tpu.memref_slice %arg3[%11, %c0_i32_7] : memref<7x32xf32, #tpu.memory_space<any>> -> memref<1x32xf32, #tpu.memory_space<any>>
    %c3_i32 = arith.constant 3 : i32
    %c0_i32_8 = arith.constant 0 : i32
    %13 = tpu.memref_slice %arg10[%c3_i32, %c0_i32_8] : memref<9x32xf32, #tpu.memory_space<vmem>> -> memref<1x32xf32, #tpu.memory_space<vmem>>
    %14 = tpu.memref_slice %arg12[%c1_i32] : memref<9x!tpu.dma_semaphore, #tpu.memory_space<semaphore_mem>> -> memref<1x!tpu.dma_semaphore, #tpu.memory_space<semaphore_mem>>
    %15 = tpu.memref_squeeze %14 : memref<1x!tpu.dma_semaphore, #tpu.memory_space<semaphore_mem>> -> memref<!tpu.dma_semaphore, #tpu.memory_space<semaphore_mem>>
    tpu.enqueue_dma source(%12 : memref<1x32xf32, #tpu.memory_space<any>>) target(%13 : memref<1x32xf32, #tpu.memory_space<vmem>>) target_semaphore(%15 : memref<!tpu.dma_semaphore, #tpu.memory_space<semaphore_mem>>)
    %c1_i32_9 = arith.constant 1 : i32
    %c0_i32_10 = arith.constant 0 : i32
    %16 = tpu.memref_slice %arg3[%11, %c0_i32_10] : memref<7x32xf32, #tpu.memory_space<any>> -> memref<1x32xf32, #tpu.memory_space<any>>
    %c1_i32_11 = arith.constant 1 : i32
    %c0_i32_12 = arith.constant 0 : i32
    %17 = tpu.memref_slice %arg11[%c1_i32_11, %c0_i32_12] : memref<9x32xf32, #tpu.memory_space<vmem>> -> memref<1x32xf32, #tpu.memory_space<vmem>>
    %18 = tpu.memref_slice %arg13[%c1_i32_9] : memref<9x!tpu.dma_semaphore, #tpu.memory_space<semaphore_mem>> -> memref<1x!tpu.dma_semaphore, #tpu.memory_space<semaphore_mem>>
    %19 = tpu.memref_squeeze %18 : memref<1x!tpu.dma_semaphore, #tpu.memory_space<semaphore_mem>> -> memref<!tpu.dma_semaphore, #tpu.memory_space<semaphore_mem>>
    tpu.enqueue_dma source(%16 : memref<1x32xf32, #tpu.memory_space<any>>) target(%17 : memref<1x32xf32, #tpu.memory_space<vmem>>) target_semaphore(%19 : memref<!tpu.dma_semaphore, #tpu.memory_space<semaphore_mem>>)
    %20 = arith.index_cast %arg0 : i32 to index
    %c2 = arith.constant 2 : index
    %21 = memref.load %arg1[%20, %c2] : memref<2x9xi32, #tpu.memory_space<smem>>
    %c2_i32 = arith.constant 2 : i32
    %c0_i32_13 = arith.constant 0 : i32
    %22 = tpu.memref_slice %arg3[%21, %c0_i32_13] : memref<7x32xf32, #tpu.memory_space<any>> -> memref<1x32xf32, #tpu.memory_space<any>>
    %c6_i32 = arith.constant 6 : i32
    %c0_i32_14 = arith.constant 0 : i32
    %23 = tpu.memref_slice %arg10[%c6_i32, %c0_i32_14] : memref<9x32xf32, #tpu.memory_space<vmem>> -> memref<1x32xf32, #tpu.memory_space<vmem>>
    %24 = tpu.memref_slice %arg12[%c2_i32] : memref<9x!tpu.dma_semaphore, #tpu.memory_space<semaphore_mem>> -> memref<1x!tpu.dma_semaphore, #tpu.memory_space<semaphore_mem>>
    %25 = tpu.memref_squeeze %24 : memref<1x!tpu.dma_semaphore, #tpu.memory_space<semaphore_mem>> -> memref<!tpu.dma_semaphore, #tpu.memory_space<semaphore_mem>>
    tpu.enqueue_dma source(%22 : memref<1x32xf32, #tpu.memory_space<any>>) target(%23 : memref<1x32xf32, #tpu.memory_space<vmem>>) target_semaphore(%25 : memref<!tpu.dma_semaphore, #tpu.memory_space<semaphore_mem>>)
    %c2_i32_15 = arith.constant 2 : i32
    %c0_i32_16 = arith.constant 0 : i32
    %26 = tpu.memref_slice %arg3[%21, %c0_i32_16] : memref<7x32xf32, #tpu.memory_space<any>> -> memref<1x32xf32, #tpu.memory_space<any>>
    %c2_i32_17 = arith.constant 2 : i32
    %c0_i32_18 = arith.constant 0 : i32
    %27 = tpu.memref_slice %arg11[%c2_i32_17, %c0_i32_18] : memref<9x32xf32, #tpu.memory_space<vmem>> -> memref<1x32xf32, #tpu.memory_space<vmem>>
    %28 = tpu.memref_slice %arg13[%c2_i32_15] : memref<9x!tpu.dma_semaphore, #tpu.memory_space<semaphore_mem>> -> memref<1x!tpu.dma_semaphore, #tpu.memory_space<semaphore_mem>>
    %29 = tpu.memref_squeeze %28 : memref<1x!tpu.dma_semaphore, #tpu.memory_space<semaphore_mem>> -> memref<!tpu.dma_semaphore, #tpu.memory_space<semaphore_mem>>
    tpu.enqueue_dma source(%26 : memref<1x32xf32, #tpu.memory_space<any>>) target(%27 : memref<1x32xf32, #tpu.memory_space<vmem>>) target_semaphore(%29 : memref<!tpu.dma_semaphore, #tpu.memory_space<semaphore_mem>>)
    %30 = arith.index_cast %arg0 : i32 to index
    %c3 = arith.constant 3 : index
    %31 = memref.load %arg1[%30, %c3] : memref<2x9xi32, #tpu.memory_space<smem>>
    %c3_i32_19 = arith.constant 3 : i32
    %c0_i32_20 = arith.constant 0 : i32
    %32 = tpu.memref_slice %arg3[%31, %c0_i32_20] : memref<7x32xf32, #tpu.memory_space<any>> -> memref<1x32xf32, #tpu.memory_space<any>>
    %c1_i32_21 = arith.constant 1 : i32
    %c0_i32_22 = arith.constant 0 : i32
    %33 = tpu.memref_slice %arg10[%c1_i32_21, %c0_i32_22] : memref<9x32xf32, #tpu.memory_space<vmem>> -> memref<1x32xf32, #tpu.memory_space<vmem>>
    %34 = tpu.memref_slice %arg12[%c3_i32_19] : memref<9x!tpu.dma_semaphore, #tpu.memory_space<semaphore_mem>> -> memref<1x!tpu.dma_semaphore, #tpu.memory_space<semaphore_mem>>
    %35 = tpu.memref_squeeze %34 : memref<1x!tpu.dma_semaphore, #tpu.memory_space<semaphore_mem>> -> memref<!tpu.dma_semaphore, #tpu.memory_space<semaphore_mem>>
    tpu.enqueue_dma source(%32 : memref<1x32xf32, #tpu.memory_space<any>>) target(%33 : memref<1x32xf32, #tpu.memory_space<vmem>>) target_semaphore(%35 : memref<!tpu.dma_semaphore, #tpu.memory_space<semaphore_mem>>)
    %c3_i32_23 = arith.constant 3 : i32
    %c0_i32_24 = arith.constant 0 : i32
    %36 = tpu.memref_slice %arg3[%31, %c0_i32_24] : memref<7x32xf32, #tpu.memory_space<any>> -> memref<1x32xf32, #tpu.memory_space<any>>
    %c3_i32_25 = arith.constant 3 : i32
    %c0_i32_26 = arith.constant 0 : i32
    %37 = tpu.memref_slice %arg11[%c3_i32_25, %c0_i32_26] : memref<9x32xf32, #tpu.memory_space<vmem>> -> memref<1x32xf32, #tpu.memory_space<vmem>>
    %38 = tpu.memref_slice %arg13[%c3_i32_23] : memref<9x!tpu.dma_semaphore, #tpu.memory_space<semaphore_mem>> -> memref<1x!tpu.dma_semaphore, #tpu.memory_space<semaphore_mem>>
    %39 = tpu.memref_squeeze %38 : memref<1x!tpu.dma_semaphore, #tpu.memory_space<semaphore_mem>> -> memref<!tpu.dma_semaphore, #tpu.memory_space<semaphore_mem>>
    tpu.enqueue_dma source(%36 : memref<1x32xf32, #tpu.memory_space<any>>) target(%37 : memref<1x32xf32, #tpu.memory_space<vmem>>) target_semaphore(%39 : memref<!tpu.dma_semaphore, #tpu.memory_space<semaphore_mem>>)
    %40 = arith.index_cast %arg0 : i32 to index
    %c4 = arith.constant 4 : index
    %41 = memref.load %arg1[%40, %c4] : memref<2x9xi32, #tpu.memory_space<smem>>
    %c4_i32 = arith.constant 4 : i32
    %c0_i32_27 = arith.constant 0 : i32
    %42 = tpu.memref_slice %arg3[%41, %c0_i32_27] : memref<7x32xf32, #tpu.memory_space<any>> -> memref<1x32xf32, #tpu.memory_space<any>>
    %c4_i32_28 = arith.constant 4 : i32
    %c0_i32_29 = arith.constant 0 : i32
    %43 = tpu.memref_slice %arg10[%c4_i32_28, %c0_i32_29] : memref<9x32xf32, #tpu.memory_space<vmem>> -> memref<1x32xf32, #tpu.memory_space<vmem>>
    %44 = tpu.memref_slice %arg12[%c4_i32] : memref<9x!tpu.dma_semaphore, #tpu.memory_space<semaphore_mem>> -> memref<1x!tpu.dma_semaphore, #tpu.memory_space<semaphore_mem>>
    %45 = tpu.memref_squeeze %44 : memref<1x!tpu.dma_semaphore, #tpu.memory_space<semaphore_mem>> -> memref<!tpu.dma_semaphore, #tpu.memory_space<semaphore_mem>>
    tpu.enqueue_dma source(%42 : memref<1x32xf32, #tpu.memory_space<any>>) target(%43 : memref<1x32xf32, #tpu.memory_space<vmem>>) target_semaphore(%45 : memref<!tpu.dma_semaphore, #tpu.memory_space<semaphore_mem>>)
    %c4_i32_30 = arith.constant 4 : i32
    %c0_i32_31 = arith.constant 0 : i32
    %46 = tpu.memref_slice %arg3[%41, %c0_i32_31] : memref<7x32xf32, #tpu.memory_space<any>> -> memref<1x32xf32, #tpu.memory_space<any>>
    %c4_i32_32 = arith.constant 4 : i32
    %c0_i32_33 = arith.constant 0 : i32
    %47 = tpu.memref_slice %arg11[%c4_i32_32, %c0_i32_33] : memref<9x32xf32, #tpu.memory_space<vmem>> -> memref<1x32xf32, #tpu.memory_space<vmem>>
    %48 = tpu.memref_slice %arg13[%c4_i32_30] : memref<9x!tpu.dma_semaphore, #tpu.memory_space<semaphore_mem>> -> memref<1x!tpu.dma_semaphore, #tpu.memory_space<semaphore_mem>>
    %49 = tpu.memref_squeeze %48 : memref<1x!tpu.dma_semaphore, #tpu.memory_space<semaphore_mem>> -> memref<!tpu.dma_semaphore, #tpu.memory_space<semaphore_mem>>
    tpu.enqueue_dma source(%46 : memref<1x32xf32, #tpu.memory_space<any>>) target(%47 : memref<1x32xf32, #tpu.memory_space<vmem>>) target_semaphore(%49 : memref<!tpu.dma_semaphore, #tpu.memory_space<semaphore_mem>>)
    %50 = arith.index_cast %arg0 : i32 to index
    %c5 = arith.constant 5 : index
    %51 = memref.load %arg1[%50, %c5] : memref<2x9xi32, #tpu.memory_space<smem>>
    %c5_i32 = arith.constant 5 : i32
    %c0_i32_34 = arith.constant 0 : i32
    %52 = tpu.memref_slice %arg3[%51, %c0_i32_34] : memref<7x32xf32, #tpu.memory_space<any>> -> memref<1x32xf32, #tpu.memory_space<any>>
    %c7_i32 = arith.constant 7 : i32
    %c0_i32_35 = arith.constant 0 : i32
    %53 = tpu.memref_slice %arg10[%c7_i32, %c0_i32_35] : memref<9x32xf32, #tpu.memory_space<vmem>> -> memref<1x32xf32, #tpu.memory_space<vmem>>
    %54 = tpu.memref_slice %arg12[%c5_i32] : memref<9x!tpu.dma_semaphore, #tpu.memory_space<semaphore_mem>> -> memref<1x!tpu.dma_semaphore, #tpu.memory_space<semaphore_mem>>
    %55 = tpu.memref_squeeze %54 : memref<1x!tpu.dma_semaphore, #tpu.memory_space<semaphore_mem>> -> memref<!tpu.dma_semaphore, #tpu.memory_space<semaphore_mem>>
    tpu.enqueue_dma source(%52 : memref<1x32xf32, #tpu.memory_space<any>>) target(%53 : memref<1x32xf32, #tpu.memory_space<vmem>>) target_semaphore(%55 : memref<!tpu.dma_semaphore, #tpu.memory_space<semaphore_mem>>)
    %c5_i32_36 = arith.constant 5 : i32
    %c0_i32_37 = arith.constant 0 : i32
    %56 = tpu.memref_slice %arg3[%51, %c0_i32_37] : memref<7x32xf32, #tpu.memory_space<any>> -> memref<1x32xf32, #tpu.memory_space<any>>
    %c5_i32_38 = arith.constant 5 : i32
    %c0_i32_39 = arith.constant 0 : i32
    %57 = tpu.memref_slice %arg11[%c5_i32_38, %c0_i32_39] : memref<9x32xf32, #tpu.memory_space<vmem>> -> memref<1x32xf32, #tpu.memory_space<vmem>>
    %58 = tpu.memref_slice %arg13[%c5_i32_36] : memref<9x!tpu.dma_semaphore, #tpu.memory_space<semaphore_mem>> -> memref<1x!tpu.dma_semaphore, #tpu.memory_space<semaphore_mem>>
    %59 = tpu.memref_squeeze %58 : memref<1x!tpu.dma_semaphore, #tpu.memory_space<semaphore_mem>> -> memref<!tpu.dma_semaphore, #tpu.memory_space<semaphore_mem>>
    tpu.enqueue_dma source(%56 : memref<1x32xf32, #tpu.memory_space<any>>) target(%57 : memref<1x32xf32, #tpu.memory_space<vmem>>) target_semaphore(%59 : memref<!tpu.dma_semaphore, #tpu.memory_space<semaphore_mem>>)
    %60 = arith.index_cast %arg0 : i32 to index
    %c6 = arith.constant 6 : index
    %61 = memref.load %arg1[%60, %c6] : memref<2x9xi32, #tpu.memory_space<smem>>
    %c6_i32_40 = arith.constant 6 : i32
    %c0_i32_41 = arith.constant 0 : i32
    %62 = tpu.memref_slice %arg3[%61, %c0_i32_41] : memref<7x32xf32, #tpu.memory_space<any>> -> memref<1x32xf32, #tpu.memory_space<any>>
    %c2_i32_42 = arith.constant 2 : i32
    %c0_i32_43 = arith.constant 0 : i32
    %63 = tpu.memref_slice %arg10[%c2_i32_42, %c0_i32_43] : memref<9x32xf32, #tpu.memory_space<vmem>> -> memref<1x32xf32, #tpu.memory_space<vmem>>
    %64 = tpu.memref_slice %arg12[%c6_i32_40] : memref<9x!tpu.dma_semaphore, #tpu.memory_space<semaphore_mem>> -> memref<1x!tpu.dma_semaphore, #tpu.memory_space<semaphore_mem>>
    %65 = tpu.memref_squeeze %64 : memref<1x!tpu.dma_semaphore, #tpu.memory_space<semaphore_mem>> -> memref<!tpu.dma_semaphore, #tpu.memory_space<semaphore_mem>>
    tpu.enqueue_dma source(%62 : memref<1x32xf32, #tpu.memory_space<any>>) target(%63 : memref<1x32xf32, #tpu.memory_space<vmem>>) target_semaphore(%65 : memref<!tpu.dma_semaphore, #tpu.memory_space<semaphore_mem>>)
    %c6_i32_44 = arith.constant 6 : i32
    %c0_i32_45 = arith.constant 0 : i32
    %66 = tpu.memref_slice %arg3[%61, %c0_i32_45] : memref<7x32xf32, #tpu.memory_space<any>> -> memref<1x32xf32, #tpu.memory_space<any>>
    %c6_i32_46 = arith.constant 6 : i32
    %c0_i32_47 = arith.constant 0 : i32
    %67 = tpu.memref_slice %arg11[%c6_i32_46, %c0_i32_47] : memref<9x32xf32, #tpu.memory_space<vmem>> -> memref<1x32xf32, #tpu.memory_space<vmem>>
    %68 = tpu.memref_slice %arg13[%c6_i32_44] : memref<9x!tpu.dma_semaphore, #tpu.memory_space<semaphore_mem>> -> memref<1x!tpu.dma_semaphore, #tpu.memory_space<semaphore_mem>>
    %69 = tpu.memref_squeeze %68 : memref<1x!tpu.dma_semaphore, #tpu.memory_space<semaphore_mem>> -> memref<!tpu.dma_semaphore, #tpu.memory_space<semaphore_mem>>
    tpu.enqueue_dma source(%66 : memref<1x32xf32, #tpu.memory_space<any>>) target(%67 : memref<1x32xf32, #tpu.memory_space<vmem>>) target_semaphore(%69 : memref<!tpu.dma_semaphore, #tpu.memory_space<semaphore_mem>>)
    %70 = arith.index_cast %arg0 : i32 to index
    %c7 = arith.constant 7 : index
    %71 = memref.load %arg1[%70, %c7] : memref<2x9xi32, #tpu.memory_space<smem>>
    %c7_i32_48 = arith.constant 7 : i32
    %c0_i32_49 = arith.constant 0 : i32
    %72 = tpu.memref_slice %arg3[%71, %c0_i32_49] : memref<7x32xf32, #tpu.memory_space<any>> -> memref<1x32xf32, #tpu.memory_space<any>>
    %c5_i32_50 = arith.constant 5 : i32
    %c0_i32_51 = arith.constant 0 : i32
    %73 = tpu.memref_slice %arg10[%c5_i32_50, %c0_i32_51] : memref<9x32xf32, #tpu.memory_space<vmem>> -> memref<1x32xf32, #tpu.memory_space<vmem>>
    %74 = tpu.memref_slice %arg12[%c7_i32_48] : memref<9x!tpu.dma_semaphore, #tpu.memory_space<semaphore_mem>> -> memref<1x!tpu.dma_semaphore, #tpu.memory_space<semaphore_mem>>
    %75 = tpu.memref_squeeze %74 : memref<1x!tpu.dma_semaphore, #tpu.memory_space<semaphore_mem>> -> memref<!tpu.dma_semaphore, #tpu.memory_space<semaphore_mem>>
    tpu.enqueue_dma source(%72 : memref<1x32xf32, #tpu.memory_space<any>>) target(%73 : memref<1x32xf32, #tpu.memory_space<vmem>>) target_semaphore(%75 : memref<!tpu.dma_semaphore, #tpu.memory_space<semaphore_mem>>)
    %c7_i32_52 = arith.constant 7 : i32
    %c0_i32_53 = arith.constant 0 : i32
    %76 = tpu.memref_slice %arg3[%71, %c0_i32_53] : memref<7x32xf32, #tpu.memory_space<any>> -> memref<1x32xf32, #tpu.memory_space<any>>
    %c7_i32_54 = arith.constant 7 : i32
    %c0_i32_55 = arith.constant 0 : i32
    %77 = tpu.memref_slice %arg11[%c7_i32_54, %c0_i32_55] : memref<9x32xf32, #tpu.memory_space<vmem>> -> memref<1x32xf32, #tpu.memory_space<vmem>>
    %78 = tpu.memref_slice %arg13[%c7_i32_52] : memref<9x!tpu.dma_semaphore, #tpu.memory_space<semaphore_mem>> -> memref<1x!tpu.dma_semaphore, #tpu.memory_space<semaphore_mem>>
    %79 = tpu.memref_squeeze %78 : memref<1x!tpu.dma_semaphore, #tpu.memory_space<semaphore_mem>> -> memref<!tpu.dma_semaphore, #tpu.memory_space<semaphore_mem>>
    tpu.enqueue_dma source(%76 : memref<1x32xf32, #tpu.memory_space<any>>) target(%77 : memref<1x32xf32, #tpu.memory_space<vmem>>) target_semaphore(%79 : memref<!tpu.dma_semaphore, #tpu.memory_space<semaphore_mem>>)
    %80 = arith.index_cast %arg0 : i32 to index
    %c8 = arith.constant 8 : index
    %81 = memref.load %arg1[%80, %c8] : memref<2x9xi32, #tpu.memory_space<smem>>
    %c8_i32 = arith.constant 8 : i32
    %c0_i32_56 = arith.constant 0 : i32
    %82 = tpu.memref_slice %arg3[%81, %c0_i32_56] : memref<7x32xf32, #tpu.memory_space<any>> -> memref<1x32xf32, #tpu.memory_space<any>>
    %c8_i32_57 = arith.constant 8 : i32
    %c0_i32_58 = arith.constant 0 : i32
    %83 = tpu.memref_slice %arg10[%c8_i32_57, %c0_i32_58] : memref<9x32xf32, #tpu.memory_space<vmem>> -> memref<1x32xf32, #tpu.memory_space<vmem>>
    %84 = tpu.memref_slice %arg12[%c8_i32] : memref<9x!tpu.dma_semaphore, #tpu.memory_space<semaphore_mem>> -> memref<1x!tpu.dma_semaphore, #tpu.memory_space<semaphore_mem>>
    %85 = tpu.memref_squeeze %84 : memref<1x!tpu.dma_semaphore, #tpu.memory_space<semaphore_mem>> -> memref<!tpu.dma_semaphore, #tpu.memory_space<semaphore_mem>>
    tpu.enqueue_dma source(%82 : memref<1x32xf32, #tpu.memory_space<any>>) target(%83 : memref<1x32xf32, #tpu.memory_space<vmem>>) target_semaphore(%85 : memref<!tpu.dma_semaphore, #tpu.memory_space<semaphore_mem>>)
    %c8_i32_59 = arith.constant 8 : i32
    %c0_i32_60 = arith.constant 0 : i32
    %86 = tpu.memref_slice %arg3[%81, %c0_i32_60] : memref<7x32xf32, #tpu.memory_space<any>> -> memref<1x32xf32, #tpu.memory_space<any>>
    %c8_i32_61 = arith.constant 8 : i32
    %c0_i32_62 = arith.constant 0 : i32
    %87 = tpu.memref_slice %arg11[%c8_i32_61, %c0_i32_62] : memref<9x32xf32, #tpu.memory_space<vmem>> -> memref<1x32xf32, #tpu.memory_space<vmem>>
    %88 = tpu.memref_slice %arg13[%c8_i32_59] : memref<9x!tpu.dma_semaphore, #tpu.memory_space<semaphore_mem>> -> memref<1x!tpu.dma_semaphore, #tpu.memory_space<semaphore_mem>>
    %89 = tpu.memref_squeeze %88 : memref<1x!tpu.dma_semaphore, #tpu.memory_space<semaphore_mem>> -> memref<!tpu.dma_semaphore, #tpu.memory_space<semaphore_mem>>
    tpu.enqueue_dma source(%86 : memref<1x32xf32, #tpu.memory_space<any>>) target(%87 : memref<1x32xf32, #tpu.memory_space<vmem>>) target_semaphore(%89 : memref<!tpu.dma_semaphore, #tpu.memory_space<semaphore_mem>>)
    %c0_i32_63 = arith.constant 0 : i32
    %c0_i32_64 = arith.constant 0 : i32
    %c0_i32_65 = arith.constant 0 : i32
    %90 = tpu.memref_slice %arg3[%c0_i32_64, %c0_i32_65] : memref<7x32xf32, #tpu.memory_space<any>> -> memref<1x32xf32, #tpu.memory_space<any>>
    %c0_i32_66 = arith.constant 0 : i32
    %c0_i32_67 = arith.constant 0 : i32
    %91 = tpu.memref_slice %arg10[%c0_i32_66, %c0_i32_67] : memref<9x32xf32, #tpu.memory_space<vmem>> -> memref<1x32xf32, #tpu.memory_space<vmem>>
    %92 = tpu.memref_slice %arg12[%c0_i32_63] : memref<9x!tpu.dma_semaphore, #tpu.memory_space<semaphore_mem>> -> memref<1x!tpu.dma_semaphore, #tpu.memory_space<semaphore_mem>>
    %93 = tpu.memref_squeeze %92 : memref<1x!tpu.dma_semaphore, #tpu.memory_space<semaphore_mem>> -> memref<!tpu.dma_semaphore, #tpu.memory_space<semaphore_mem>>
    tpu.wait_dma2 semaphore(%93 : memref<!tpu.dma_semaphore, #tpu.memory_space<semaphore_mem>>) src(%90 : memref<1x32xf32, #tpu.memory_space<any>>) dst(%91 : memref<1x32xf32, #tpu.memory_space<vmem>>)
    %c1_i32_68 = arith.constant 1 : i32
    %c0_i32_69 = arith.constant 0 : i32
    %c0_i32_70 = arith.constant 0 : i32
    %94 = tpu.memref_slice %arg3[%c0_i32_69, %c0_i32_70] : memref<7x32xf32, #tpu.memory_space<any>> -> memref<1x32xf32, #tpu.memory_space<any>>
    %c3_i32_71 = arith.constant 3 : i32
    %c0_i32_72 = arith.constant 0 : i32
    %95 = tpu.memref_slice %arg10[%c3_i32_71, %c0_i32_72] : memref<9x32xf32, #tpu.memory_space<vmem>> -> memref<1x32xf32, #tpu.memory_space<vmem>>
    %96 = tpu.memref_slice %arg12[%c1_i32_68] : memref<9x!tpu.dma_semaphore, #tpu.memory_space<semaphore_mem>> -> memref<1x!tpu.dma_semaphore, #tpu.memory_space<semaphore_mem>>
    %97 = tpu.memref_squeeze %96 : memref<1x!tpu.dma_semaphore, #tpu.memory_space<semaphore_mem>> -> memref<!tpu.dma_semaphore, #tpu.memory_space<semaphore_mem>>
    tpu.wait_dma2 semaphore(%97 : memref<!tpu.dma_semaphore, #tpu.memory_space<semaphore_mem>>) src(%94 : memref<1x32xf32, #tpu.memory_space<any>>) dst(%95 : memref<1x32xf32, #tpu.memory_space<vmem>>)
    %c2_i32_73 = arith.constant 2 : i32
    %c0_i32_74 = arith.constant 0 : i32
    %c0_i32_75 = arith.constant 0 : i32
    %98 = tpu.memref_slice %arg3[%c0_i32_74, %c0_i32_75] : memref<7x32xf32, #tpu.memory_space<any>> -> memref<1x32xf32, #tpu.memory_space<any>>
    %c6_i32_76 = arith.constant 6 : i32
    %c0_i32_77 = arith.constant 0 : i32
    %99 = tpu.memref_slice %arg10[%c6_i32_76, %c0_i32_77] : memref<9x32xf32, #tpu.memory_space<vmem>> -> memref<1x32xf32, #tpu.memory_space<vmem>>
    %100 = tpu.memref_slice %arg12[%c2_i32_73] : memref<9x!tpu.dma_semaphore, #tpu.memory_space<semaphore_mem>> -> memref<1x!tpu.dma_semaphore, #tpu.memory_space<semaphore_mem>>
    %101 = tpu.memref_squeeze %100 : memref<1x!tpu.dma_semaphore, #tpu.memory_space<semaphore_mem>> -> memref<!tpu.dma_semaphore, #tpu.memory_space<semaphore_mem>>
    tpu.wait_dma2 semaphore(%101 : memref<!tpu.dma_semaphore, #tpu.memory_space<semaphore_mem>>) src(%98 : memref<1x32xf32, #tpu.memory_space<any>>) dst(%99 : memref<1x32xf32, #tpu.memory_space<vmem>>)
    %c3_i32_78 = arith.constant 3 : i32
    %c0_i32_79 = arith.constant 0 : i32
    %c0_i32_80 = arith.constant 0 : i32
    %102 = tpu.memref_slice %arg3[%c0_i32_79, %c0_i32_80] : memref<7x32xf32, #tpu.memory_space<any>> -> memref<1x32xf32, #tpu.memory_space<any>>
    %c1_i32_81 = arith.constant 1 : i32
    %c0_i32_82 = arith.constant 0 : i32
    %103 = tpu.memref_slice %arg10[%c1_i32_81, %c0_i32_82] : memref<9x32xf32, #tpu.memory_space<vmem>> -> memref<1x32xf32, #tpu.memory_space<vmem>>
    %104 = tpu.memref_slice %arg12[%c3_i32_78] : memref<9x!tpu.dma_semaphore, #tpu.memory_space<semaphore_mem>> -> memref<1x!tpu.dma_semaphore, #tpu.memory_space<semaphore_mem>>
    %105 = tpu.memref_squeeze %104 : memref<1x!tpu.dma_semaphore, #tpu.memory_space<semaphore_mem>> -> memref<!tpu.dma_semaphore, #tpu.memory_space<semaphore_mem>>
    tpu.wait_dma2 semaphore(%105 : memref<!tpu.dma_semaphore, #tpu.memory_space<semaphore_mem>>) src(%102 : memref<1x32xf32, #tpu.memory_space<any>>) dst(%103 : memref<1x32xf32, #tpu.memory_space<vmem>>)
    %c4_i32_83 = arith.constant 4 : i32
    %c0_i32_84 = arith.constant 0 : i32
    %c0_i32_85 = arith.constant 0 : i32
    %106 = tpu.memref_slice %arg3[%c0_i32_84, %c0_i32_85] : memref<7x32xf32, #tpu.memory_space<any>> -> memref<1x32xf32, #tpu.memory_space<any>>
    %c4_i32_86 = arith.constant 4 : i32
    %c0_i32_87 = arith.constant 0 : i32
    %107 = tpu.memref_slice %arg10[%c4_i32_86, %c0_i32_87] : memref<9x32xf32, #tpu.memory_space<vmem>> -> memref<1x32xf32, #tpu.memory_space<vmem>>
    %108 = tpu.memref_slice %arg12[%c4_i32_83] : memref<9x!tpu.dma_semaphore, #tpu.memory_space<semaphore_mem>> -> memref<1x!tpu.dma_semaphore, #tpu.memory_space<semaphore_mem>>
    %109 = tpu.memref_squeeze %108 : memref<1x!tpu.dma_semaphore, #tpu.memory_space<semaphore_mem>> -> memref<!tpu.dma_semaphore, #tpu.memory_space<semaphore_mem>>
    tpu.wait_dma2 semaphore(%109 : memref<!tpu.dma_semaphore, #tpu.memory_space<semaphore_mem>>) src(%106 : memref<1x32xf32, #tpu.memory_space<any>>) dst(%107 : memref<1x32xf32, #tpu.memory_space<vmem>>)
    %c5_i32_88 = arith.constant 5 : i32
    %c0_i32_89 = arith.constant 0 : i32
    %c0_i32_90 = arith.constant 0 : i32
    %110 = tpu.memref_slice %arg3[%c0_i32_89, %c0_i32_90] : memref<7x32xf32, #tpu.memory_space<any>> -> memref<1x32xf32, #tpu.memory_space<any>>
    %c7_i32_91 = arith.constant 7 : i32
    %c0_i32_92 = arith.constant 0 : i32
    %111 = tpu.memref_slice %arg10[%c7_i32_91, %c0_i32_92] : memref<9x32xf32, #tpu.memory_space<vmem>> -> memref<1x32xf32, #tpu.memory_space<vmem>>
    %112 = tpu.memref_slice %arg12[%c5_i32_88] : memref<9x!tpu.dma_semaphore, #tpu.memory_space<semaphore_mem>> -> memref<1x!tpu.dma_semaphore, #tpu.memory_space<semaphore_mem>>
    %113 = tpu.memref_squeeze %112 : memref<1x!tpu.dma_semaphore, #tpu.memory_space<semaphore_mem>> -> memref<!tpu.dma_semaphore, #tpu.memory_space<semaphore_mem>>
    tpu.wait_dma2 semaphore(%113 : memref<!tpu.dma_semaphore, #tpu.memory_space<semaphore_mem>>) src(%110 : memref<1x32xf32, #tpu.memory_space<any>>) dst(%111 : memref<1x32xf32, #tpu.memory_space<vmem>>)
    %c6_i32_93 = arith.constant 6 : i32
    %c0_i32_94 = arith.constant 0 : i32
    %c0_i32_95 = arith.constant 0 : i32
    %114 = tpu.memref_slice %arg3[%c0_i32_94, %c0_i32_95] : memref<7x32xf32, #tpu.memory_space<any>> -> memref<1x32xf32, #tpu.memory_space<any>>
    %c2_i32_96 = arith.constant 2 : i32
    %c0_i32_97 = arith.constant 0 : i32
    %115 = tpu.memref_slice %arg10[%c2_i32_96, %c0_i32_97] : memref<9x32xf32, #tpu.memory_space<vmem>> -> memref<1x32xf32, #tpu.memory_space<vmem>>
    %116 = tpu.memref_slice %arg12[%c6_i32_93] : memref<9x!tpu.dma_semaphore, #tpu.memory_space<semaphore_mem>> -> memref<1x!tpu.dma_semaphore, #tpu.memory_space<semaphore_mem>>
    %117 = tpu.memref_squeeze %116 : memref<1x!tpu.dma_semaphore, #tpu.memory_space<semaphore_mem>> -> memref<!tpu.dma_semaphore, #tpu.memory_space<semaphore_mem>>
    tpu.wait_dma2 semaphore(%117 : memref<!tpu.dma_semaphore, #tpu.memory_space<semaphore_mem>>) src(%114 : memref<1x32xf32, #tpu.memory_space<any>>) dst(%115 : memref<1x32xf32, #tpu.memory_space<vmem>>)
    %c7_i32_98 = arith.constant 7 : i32
    %c0_i32_99 = arith.constant 0 : i32
    %c0_i32_100 = arith.constant 0 : i32
    %118 = tpu.memref_slice %arg3[%c0_i32_99, %c0_i32_100] : memref<7x32xf32, #tpu.memory_space<any>> -> memref<1x32xf32, #tpu.memory_space<any>>
    %c5_i32_101 = arith.constant 5 : i32
    %c0_i32_102 = arith.constant 0 : i32
    %119 = tpu.memref_slice %arg10[%c5_i32_101, %c0_i32_102] : memref<9x32xf32, #tpu.memory_space<vmem>> -> memref<1x32xf32, #tpu.memory_space<vmem>>
    %120 = tpu.memref_slice %arg12[%c7_i32_98] : memref<9x!tpu.dma_semaphore, #tpu.memory_space<semaphore_mem>> -> memref<1x!tpu.dma_semaphore, #tpu.memory_space<semaphore_mem>>
    %121 = tpu.memref_squeeze %120 : memref<1x!tpu.dma_semaphore, #tpu.memory_space<semaphore_mem>> -> memref<!tpu.dma_semaphore, #tpu.memory_space<semaphore_mem>>
    tpu.wait_dma2 semaphore(%121 : memref<!tpu.dma_semaphore, #tpu.memory_space<semaphore_mem>>) src(%118 : memref<1x32xf32, #tpu.memory_space<any>>) dst(%119 : memref<1x32xf32, #tpu.memory_space<vmem>>)
    %c8_i32_103 = arith.constant 8 : i32
    %c0_i32_104 = arith.constant 0 : i32
    %c0_i32_105 = arith.constant 0 : i32
    %122 = tpu.memref_slice %arg3[%c0_i32_104, %c0_i32_105] : memref<7x32xf32, #tpu.memory_space<any>> -> memref<1x32xf32, #tpu.memory_space<any>>
    %c8_i32_106 = arith.constant 8 : i32
    %c0_i32_107 = arith.constant 0 : i32
    %123 = tpu.memref_slice %arg10[%c8_i32_106, %c0_i32_107] : memref<9x32xf32, #tpu.memory_space<vmem>> -> memref<1x32xf32, #tpu.memory_space<vmem>>
    %124 = tpu.memref_slice %arg12[%c8_i32_103] : memref<9x!tpu.dma_semaphore, #tpu.memory_space<semaphore_mem>> -> memref<1x!tpu.dma_semaphore, #tpu.memory_space<semaphore_mem>>
    %125 = tpu.memref_squeeze %124 : memref<1x!tpu.dma_semaphore, #tpu.memory_space<semaphore_mem>> -> memref<!tpu.dma_semaphore, #tpu.memory_space<semaphore_mem>>
    tpu.wait_dma2 semaphore(%125 : memref<!tpu.dma_semaphore, #tpu.memory_space<semaphore_mem>>) src(%122 : memref<1x32xf32, #tpu.memory_space<any>>) dst(%123 : memref<1x32xf32, #tpu.memory_space<vmem>>)
    %c0_108 = arith.constant 0 : index
    %c0_109 = arith.constant 0 : index
    %126 = vector.load %arg10[%c0_108, %c0_109] : memref<9x32xf32, #tpu.memory_space<vmem>>, vector<9x32xf32>
    %c0_110 = arith.constant 0 : index
    %c0_111 = arith.constant 0 : index
    %c0_112 = arith.constant 0 : index
    %127 = vector.load %arg2[%c0_110, %c0_111, %c0_112] : memref<1x3x1xi32, #tpu.memory_space<vmem>>, vector<1x3x1xi32>
    %128 = vector.shape_cast %127 : vector<1x3x1xi32> to vector<3x1xi32>
    %c1_i32_113 = arith.constant 1 : i32
    %129 = vector.broadcast %c1_i32_113 : i32 to vector<3x1xi32>
    %130 = arith.subi %128, %129 : vector<3x1xi32>
    %131 = arith.sitofp %128 : vector<3x1xi32> to vector<3x1xf32>
    %c0_114 = arith.constant 0 : index
    %c0_115 = arith.constant 0 : index
    %c0_116 = arith.constant 0 : index
    %132 = vector.load %arg4[%c0_114, %c0_115, %c0_116] : memref<6x32x16xf32, #tpu.memory_space<vmem>>, vector<1x32x16xf32>
    %133 = vector.shape_cast %132 : vector<1x32x16xf32> to vector<32x16xf32>
    %cst = arith.constant dense<0.000000e+00> : vector<9x16xf32>
    %134 = tpu.matmul %126, %133, %cst {dimension_numbers = #tpu.dot_dimension_numbers<[1], [0], [0], [1], [0, 0, 1, 1], [], []>} : vector<9x32xf32>, vector<32x16xf32>, vector<9x16xf32> -> vector<9x16xf32>
    %c0_117 = arith.constant 0 : index
    %c0_118 = arith.constant 0 : index
    %c0_119 = arith.constant 0 : index
    %135 = vector.load %arg6[%c0_117, %c0_118, %c0_119] : memref<6x1x16xf32, #tpu.memory_space<vmem>>, vector<1x1x16xf32>
    %136 = vector.shape_cast %135 : vector<1x1x16xf32> to vector<1x16xf32>
    %137 = vector.broadcast %136 : vector<1x16xf32> to vector<9x16xf32>
    %138 = arith.addf %134, %137 : vector<9x16xf32>
    %c1_120 = arith.constant 1 : index
    %c0_121 = arith.constant 0 : index
    %c0_122 = arith.constant 0 : index
    %139 = vector.load %arg4[%c1_120, %c0_121, %c0_122] : memref<6x32x16xf32, #tpu.memory_space<vmem>>, vector<1x32x16xf32>
    %140 = vector.shape_cast %139 : vector<1x32x16xf32> to vector<32x16xf32>
    %cst_123 = arith.constant dense<0.000000e+00> : vector<9x16xf32>
    %141 = tpu.matmul %126, %140, %cst_123 {dimension_numbers = #tpu.dot_dimension_numbers<[1], [0], [0], [1], [0, 0, 1, 1], [], []>} : vector<9x32xf32>, vector<32x16xf32>, vector<9x16xf32> -> vector<9x16xf32>
    %c1_124 = arith.constant 1 : index
    %c0_125 = arith.constant 0 : index
    %c0_126 = arith.constant 0 : index
    %142 = vector.load %arg6[%c1_124, %c0_125, %c0_126] : memref<6x1x16xf32, #tpu.memory_space<vmem>>, vector<1x1x16xf32>
    %143 = vector.shape_cast %142 : vector<1x1x16xf32> to vector<1x16xf32>
    %144 = vector.broadcast %143 : vector<1x16xf32> to vector<9x16xf32>
    %145 = arith.addf %141, %144 : vector<9x16xf32>
    %c2_127 = arith.constant 2 : index
    %c0_128 = arith.constant 0 : index
    %c0_129 = arith.constant 0 : index
    %146 = vector.load %arg4[%c2_127, %c0_128, %c0_129] : memref<6x32x16xf32, #tpu.memory_space<vmem>>, vector<1x32x16xf32>
    %147 = vector.shape_cast %146 : vector<1x32x16xf32> to vector<32x16xf32>
    %cst_130 = arith.constant dense<0.000000e+00> : vector<9x16xf32>
    %148 = tpu.matmul %126, %147, %cst_130 {dimension_numbers = #tpu.dot_dimension_numbers<[1], [0], [0], [1], [0, 0, 1, 1], [], []>} : vector<9x32xf32>, vector<32x16xf32>, vector<9x16xf32> -> vector<9x16xf32>
    %c2_131 = arith.constant 2 : index
    %c0_132 = arith.constant 0 : index
    %c0_133 = arith.constant 0 : index
    %149 = vector.load %arg6[%c2_131, %c0_132, %c0_133] : memref<6x1x16xf32, #tpu.memory_space<vmem>>, vector<1x1x16xf32>
    %150 = vector.shape_cast %149 : vector<1x1x16xf32> to vector<1x16xf32>
    %151 = vector.broadcast %150 : vector<1x16xf32> to vector<9x16xf32>
    %152 = arith.addf %148, %151 : vector<9x16xf32>
    %c3_134 = arith.constant 3 : index
    %c0_135 = arith.constant 0 : index
    %c0_136 = arith.constant 0 : index
    %153 = vector.load %arg4[%c3_134, %c0_135, %c0_136] : memref<6x32x16xf32, #tpu.memory_space<vmem>>, vector<1x32x16xf32>
    %154 = vector.shape_cast %153 : vector<1x32x16xf32> to vector<32x16xf32>
    %cst_137 = arith.constant dense<0.000000e+00> : vector<9x16xf32>
    %155 = tpu.matmul %126, %154, %cst_137 {dimension_numbers = #tpu.dot_dimension_numbers<[1], [0], [0], [1], [0, 0, 1, 1], [], []>} : vector<9x32xf32>, vector<32x16xf32>, vector<9x16xf32> -> vector<9x16xf32>
    %c3_138 = arith.constant 3 : index
    %c0_139 = arith.constant 0 : index
    %c0_140 = arith.constant 0 : index
    %156 = vector.load %arg6[%c3_138, %c0_139, %c0_140] : memref<6x1x16xf32, #tpu.memory_space<vmem>>, vector<1x1x16xf32>
    %157 = vector.shape_cast %156 : vector<1x1x16xf32> to vector<1x16xf32>
    %158 = vector.broadcast %157 : vector<1x16xf32> to vector<9x16xf32>
    %159 = arith.addf %155, %158 : vector<9x16xf32>
    %c4_141 = arith.constant 4 : index
    %c0_142 = arith.constant 0 : index
    %c0_143 = arith.constant 0 : index
    %160 = vector.load %arg4[%c4_141, %c0_142, %c0_143] : memref<6x32x16xf32, #tpu.memory_space<vmem>>, vector<1x32x16xf32>
    %161 = vector.shape_cast %160 : vector<1x32x16xf32> to vector<32x16xf32>
    %cst_144 = arith.constant dense<0.000000e+00> : vector<9x16xf32>
    %162 = tpu.matmul %126, %161, %cst_144 {dimension_numbers = #tpu.dot_dimension_numbers<[1], [0], [0], [1], [0, 0, 1, 1], [], []>} : vector<9x32xf32>, vector<32x16xf32>, vector<9x16xf32> -> vector<9x16xf32>
    %c4_145 = arith.constant 4 : index
    %c0_146 = arith.constant 0 : index
    %c0_147 = arith.constant 0 : index
    %163 = vector.load %arg6[%c4_145, %c0_146, %c0_147] : memref<6x1x16xf32, #tpu.memory_space<vmem>>, vector<1x1x16xf32>
    %164 = vector.shape_cast %163 : vector<1x1x16xf32> to vector<1x16xf32>
    %165 = vector.broadcast %164 : vector<1x16xf32> to vector<9x16xf32>
    %166 = arith.addf %162, %165 : vector<9x16xf32>
    %c5_148 = arith.constant 5 : index
    %c0_149 = arith.constant 0 : index
    %c0_150 = arith.constant 0 : index
    %167 = vector.load %arg4[%c5_148, %c0_149, %c0_150] : memref<6x32x16xf32, #tpu.memory_space<vmem>>, vector<1x32x16xf32>
    %168 = vector.shape_cast %167 : vector<1x32x16xf32> to vector<32x16xf32>
    %cst_151 = arith.constant dense<0.000000e+00> : vector<9x16xf32>
    %169 = tpu.matmul %126, %168, %cst_151 {dimension_numbers = #tpu.dot_dimension_numbers<[1], [0], [0], [1], [0, 0, 1, 1], [], []>} : vector<9x32xf32>, vector<32x16xf32>, vector<9x16xf32> -> vector<9x16xf32>
    %c5_152 = arith.constant 5 : index
    %c0_153 = arith.constant 0 : index
    %c0_154 = arith.constant 0 : index
    %170 = vector.load %arg6[%c5_152, %c0_153, %c0_154] : memref<6x1x16xf32, #tpu.memory_space<vmem>>, vector<1x1x16xf32>
    %171 = vector.shape_cast %170 : vector<1x1x16xf32> to vector<1x16xf32>
    %172 = vector.broadcast %171 : vector<1x16xf32> to vector<9x16xf32>
    %173 = arith.addf %169, %172 : vector<9x16xf32>
    %c0_155 = arith.constant 0 : index
    %c0_156 = arith.constant 0 : index
    %c0_157 = arith.constant 0 : index
    %174 = vector.load %arg5[%c0_155, %c0_156, %c0_157] : memref<6x16x16xf32, #tpu.memory_space<vmem>>, vector<1x16x16xf32>
    %175 = vector.shape_cast %174 : vector<1x16x16xf32> to vector<16x16xf32>
    %c1_158 = arith.constant 1 : index
    %c0_159 = arith.constant 0 : index
    %c0_160 = arith.constant 0 : index
    %176 = vector.load %arg5[%c1_158, %c0_159, %c0_160] : memref<6x16x16xf32, #tpu.memory_space<vmem>>, vector<1x16x16xf32>
    %177 = vector.shape_cast %176 : vector<1x16x16xf32> to vector<16x16xf32>
    %c2_161 = arith.constant 2 : index
    %c0_162 = arith.constant 0 : index
    %c0_163 = arith.constant 0 : index
    %178 = vector.load %arg5[%c2_161, %c0_162, %c0_163] : memref<6x16x16xf32, #tpu.memory_space<vmem>>, vector<1x16x16xf32>
    %179 = vector.shape_cast %178 : vector<1x16x16xf32> to vector<16x16xf32>
    %c3_164 = arith.constant 3 : index
    %c0_165 = arith.constant 0 : index
    %c0_166 = arith.constant 0 : index
    %180 = vector.load %arg5[%c3_164, %c0_165, %c0_166] : memref<6x16x16xf32, #tpu.memory_space<vmem>>, vector<1x16x16xf32>
    %181 = vector.shape_cast %180 : vector<1x16x16xf32> to vector<16x16xf32>
    %c4_167 = arith.constant 4 : index
    %c0_168 = arith.constant 0 : index
    %c0_169 = arith.constant 0 : index
    %182 = vector.load %arg5[%c4_167, %c0_168, %c0_169] : memref<6x16x16xf32, #tpu.memory_space<vmem>>, vector<1x16x16xf32>
    %183 = vector.shape_cast %182 : vector<1x16x16xf32> to vector<16x16xf32>
    %c5_170 = arith.constant 5 : index
    %c0_171 = arith.constant 0 : index
    %c0_172 = arith.constant 0 : index
    %184 = vector.load %arg5[%c5_170, %c0_171, %c0_172] : memref<6x16x16xf32, #tpu.memory_space<vmem>>, vector<1x16x16xf32>
    %185 = vector.shape_cast %184 : vector<1x16x16xf32> to vector<16x16xf32>
    %c0_173 = arith.constant 0 : index
    %c0_174 = arith.constant 0 : index
    %c0_175 = arith.constant 0 : index
    %186 = vector.load %arg7[%c0_173, %c0_174, %c0_175] : memref<6x1x16xf32, #tpu.memory_space<vmem>>, vector<1x1x16xf32>
    %187 = vector.shape_cast %186 : vector<1x1x16xf32> to vector<1x16xf32>
    %c1_176 = arith.constant 1 : index
    %c0_177 = arith.constant 0 : index
    %c0_178 = arith.constant 0 : index
    %188 = vector.load %arg7[%c1_176, %c0_177, %c0_178] : memref<6x1x16xf32, #tpu.memory_space<vmem>>, vector<1x1x16xf32>
    %189 = vector.shape_cast %188 : vector<1x1x16xf32> to vector<1x16xf32>
    %c2_179 = arith.constant 2 : index
    %c0_180 = arith.constant 0 : index
    %c0_181 = arith.constant 0 : index
    %190 = vector.load %arg7[%c2_179, %c0_180, %c0_181] : memref<6x1x16xf32, #tpu.memory_space<vmem>>, vector<1x1x16xf32>
    %191 = vector.shape_cast %190 : vector<1x1x16xf32> to vector<1x16xf32>
    %c3_182 = arith.constant 3 : index
    %c0_183 = arith.constant 0 : index
    %c0_184 = arith.constant 0 : index
    %192 = vector.load %arg7[%c3_182, %c0_183, %c0_184] : memref<6x1x16xf32, #tpu.memory_space<vmem>>, vector<1x1x16xf32>
    %193 = vector.shape_cast %192 : vector<1x1x16xf32> to vector<1x16xf32>
    %c4_185 = arith.constant 4 : index
    %c0_186 = arith.constant 0 : index
    %c0_187 = arith.constant 0 : index
    %194 = vector.load %arg7[%c4_185, %c0_186, %c0_187] : memref<6x1x16xf32, #tpu.memory_space<vmem>>, vector<1x1x16xf32>
    %195 = vector.shape_cast %194 : vector<1x1x16xf32> to vector<1x16xf32>
    %c5_188 = arith.constant 5 : index
    %c0_189 = arith.constant 0 : index
    %c0_190 = arith.constant 0 : index
    %196 = vector.load %arg7[%c5_188, %c0_189, %c0_190] : memref<6x1x16xf32, #tpu.memory_space<vmem>>, vector<1x1x16xf32>
    %197 = vector.shape_cast %196 : vector<1x1x16xf32> to vector<1x16xf32>
    %cst_191 = arith.constant 0.000000e+00 : f32
    %198 = vector.broadcast %cst_191 : f32 to vector<3x16xf32>
    %199 = vector.extract_strided_slice %138 {offsets = [0, 0], sizes = [3, 16], strides = [1, 1]} : vector<9x16xf32> to vector<3x16xf32>
    %200 = vector.extract_strided_slice %145 {offsets = [0, 0], sizes = [3, 16], strides = [1, 1]} : vector<9x16xf32> to vector<3x16xf32>
    %201 = vector.extract_strided_slice %152 {offsets = [0, 0], sizes = [3, 16], strides = [1, 1]} : vector<9x16xf32> to vector<3x16xf32>
    %cst_192 = arith.constant dense<0.000000e+00> : vector<3x16xf32>
    %202 = tpu.matmul %198, %175, %cst_192 {dimension_numbers = #tpu.dot_dimension_numbers<[1], [0], [0], [1], [0, 0, 1, 1], [], []>} : vector<3x16xf32>, vector<16x16xf32>, vector<3x16xf32> -> vector<3x16xf32>
    %203 = vector.broadcast %187 : vector<1x16xf32> to vector<3x16xf32>
    %204 = arith.addf %202, %203 : vector<3x16xf32>
    %cst_193 = arith.constant dense<0.000000e+00> : vector<3x16xf32>
    %205 = tpu.matmul %198, %177, %cst_193 {dimension_numbers = #tpu.dot_dimension_numbers<[1], [0], [0], [1], [0, 0, 1, 1], [], []>} : vector<3x16xf32>, vector<16x16xf32>, vector<3x16xf32> -> vector<3x16xf32>
    %206 = vector.broadcast %189 : vector<1x16xf32> to vector<3x16xf32>
    %207 = arith.addf %205, %206 : vector<3x16xf32>
    %cst_194 = arith.constant dense<0.000000e+00> : vector<3x16xf32>
    %208 = tpu.matmul %198, %179, %cst_194 {dimension_numbers = #tpu.dot_dimension_numbers<[1], [0], [0], [1], [0, 0, 1, 1], [], []>} : vector<3x16xf32>, vector<16x16xf32>, vector<3x16xf32> -> vector<3x16xf32>
    %209 = vector.broadcast %191 : vector<1x16xf32> to vector<3x16xf32>
    %210 = arith.addf %208, %209 : vector<3x16xf32>
    %211 = arith.addf %199, %204 : vector<3x16xf32>
    %212 = arith.negf %211 : vector<3x16xf32>
    %213 = math.exp %212 : vector<3x16xf32>
    %cst_195 = arith.constant 1.000000e+00 : f32
    %214 = vector.broadcast %cst_195 : f32 to vector<3x16xf32>
    %215 = arith.addf %214, %213 : vector<3x16xf32>
    %216 = arith.divf %214, %215 : vector<3x16xf32>
    %217 = arith.addf %200, %207 : vector<3x16xf32>
    %218 = arith.negf %217 : vector<3x16xf32>
    %219 = math.exp %218 : vector<3x16xf32>
    %cst_196 = arith.constant 1.000000e+00 : f32
    %220 = vector.broadcast %cst_196 : f32 to vector<3x16xf32>
    %221 = arith.addf %220, %219 : vector<3x16xf32>
    %222 = arith.divf %220, %221 : vector<3x16xf32>
    %223 = arith.mulf %216, %210 : vector<3x16xf32>
    %224 = arith.addf %201, %223 : vector<3x16xf32>
    %225 = math.tanh %224 : vector<3x16xf32>
    %cst_197 = arith.constant 1.000000e+00 : f32
    %226 = vector.broadcast %cst_197 : f32 to vector<3x16xf32>
    %227 = arith.subf %226, %222 : vector<3x16xf32>
    %228 = arith.mulf %227, %225 : vector<3x16xf32>
    %229 = arith.mulf %222, %198 : vector<3x16xf32>
    %230 = arith.addf %228, %229 : vector<3x16xf32>
    %c0_i32_198 = arith.constant 0 : i32
    %231 = vector.broadcast %c0_i32_198 : i32 to vector<3x1xi32>
    %232 = arith.cmpi sgt, %128, %231 : vector<3x1xi32>
    %cst_199 = arith.constant 0.000000e+00 : f32
    %233 = vector.shape_cast %232 : vector<3x1xi1> to vector<3x1xi1>
    %234 = vector.broadcast %233 : vector<3x1xi1> to vector<3x16xi1>
    %235 = vector.broadcast %cst_199 : f32 to vector<3x16xf32>
    %236 = arith.select %234, %230, %235 : vector<3x16xi1>, vector<3x16xf32>
    %237 = arith.addf %198, %236 : vector<3x16xf32>
    %238 = vector.extract_strided_slice %138 {offsets = [3, 0], sizes = [3, 16], strides = [1, 1]} : vector<9x16xf32> to vector<3x16xf32>
    %239 = vector.extract_strided_slice %145 {offsets = [3, 0], sizes = [3, 16], strides = [1, 1]} : vector<9x16xf32> to vector<3x16xf32>
    %240 = vector.extract_strided_slice %152 {offsets = [3, 0], sizes = [3, 16], strides = [1, 1]} : vector<9x16xf32> to vector<3x16xf32>
    %cst_200 = arith.constant dense<0.000000e+00> : vector<3x16xf32>
    %241 = tpu.matmul %230, %175, %cst_200 {dimension_numbers = #tpu.dot_dimension_numbers<[1], [0], [0], [1], [0, 0, 1, 1], [], []>} : vector<3x16xf32>, vector<16x16xf32>, vector<3x16xf32> -> vector<3x16xf32>
    %242 = vector.broadcast %187 : vector<1x16xf32> to vector<3x16xf32>
    %243 = arith.addf %241, %242 : vector<3x16xf32>
    %cst_201 = arith.constant dense<0.000000e+00> : vector<3x16xf32>
    %244 = tpu.matmul %230, %177, %cst_201 {dimension_numbers = #tpu.dot_dimension_numbers<[1], [0], [0], [1], [0, 0, 1, 1], [], []>} : vector<3x16xf32>, vector<16x16xf32>, vector<3x16xf32> -> vector<3x16xf32>
    %245 = vector.broadcast %189 : vector<1x16xf32> to vector<3x16xf32>
    %246 = arith.addf %244, %245 : vector<3x16xf32>
    %cst_202 = arith.constant dense<0.000000e+00> : vector<3x16xf32>
    %247 = tpu.matmul %230, %179, %cst_202 {dimension_numbers = #tpu.dot_dimension_numbers<[1], [0], [0], [1], [0, 0, 1, 1], [], []>} : vector<3x16xf32>, vector<16x16xf32>, vector<3x16xf32> -> vector<3x16xf32>
    %248 = vector.broadcast %191 : vector<1x16xf32> to vector<3x16xf32>
    %249 = arith.addf %247, %248 : vector<3x16xf32>
    %250 = arith.addf %238, %243 : vector<3x16xf32>
    %251 = arith.negf %250 : vector<3x16xf32>
    %252 = math.exp %251 : vector<3x16xf32>
    %cst_203 = arith.constant 1.000000e+00 : f32
    %253 = vector.broadcast %cst_203 : f32 to vector<3x16xf32>
    %254 = arith.addf %253, %252 : vector<3x16xf32>
    %255 = arith.divf %253, %254 : vector<3x16xf32>
    %256 = arith.addf %239, %246 : vector<3x16xf32>
    %257 = arith.negf %256 : vector<3x16xf32>
    %258 = math.exp %257 : vector<3x16xf32>
    %cst_204 = arith.constant 1.000000e+00 : f32
    %259 = vector.broadcast %cst_204 : f32 to vector<3x16xf32>
    %260 = arith.addf %259, %258 : vector<3x16xf32>
    %261 = arith.divf %259, %260 : vector<3x16xf32>
    %262 = arith.mulf %255, %249 : vector<3x16xf32>
    %263 = arith.addf %240, %262 : vector<3x16xf32>
    %264 = math.tanh %263 : vector<3x16xf32>
    %cst_205 = arith.constant 1.000000e+00 : f32
    %265 = vector.broadcast %cst_205 : f32 to vector<3x16xf32>
    %266 = arith.subf %265, %261 : vector<3x16xf32>
    %267 = arith.mulf %266, %264 : vector<3x16xf32>
    %268 = arith.mulf %261, %230 : vector<3x16xf32>
    %269 = arith.addf %267, %268 : vector<3x16xf32>
    %c1_i32_206 = arith.constant 1 : i32
    %270 = vector.broadcast %c1_i32_206 : i32 to vector<3x1xi32>
    %271 = arith.cmpi sgt, %128, %270 : vector<3x1xi32>
    %cst_207 = arith.constant 0.000000e+00 : f32
    %272 = vector.shape_cast %271 : vector<3x1xi1> to vector<3x1xi1>
    %273 = vector.broadcast %272 : vector<3x1xi1> to vector<3x16xi1>
    %274 = vector.broadcast %cst_207 : f32 to vector<3x16xf32>
    %275 = arith.select %273, %269, %274 : vector<3x16xi1>, vector<3x16xf32>
    %276 = arith.addf %237, %275 : vector<3x16xf32>
    %277 = vector.extract_strided_slice %138 {offsets = [6, 0], sizes = [3, 16], strides = [1, 1]} : vector<9x16xf32> to vector<3x16xf32>
    %278 = vector.extract_strided_slice %145 {offsets = [6, 0], sizes = [3, 16], strides = [1, 1]} : vector<9x16xf32> to vector<3x16xf32>
    %279 = vector.extract_strided_slice %152 {offsets = [6, 0], sizes = [3, 16], strides = [1, 1]} : vector<9x16xf32> to vector<3x16xf32>
    %cst_208 = arith.constant dense<0.000000e+00> : vector<3x16xf32>
    %280 = tpu.matmul %269, %175, %cst_208 {dimension_numbers = #tpu.dot_dimension_numbers<[1], [0], [0], [1], [0, 0, 1, 1], [], []>} : vector<3x16xf32>, vector<16x16xf32>, vector<3x16xf32> -> vector<3x16xf32>
    %281 = vector.broadcast %187 : vector<1x16xf32> to vector<3x16xf32>
    %282 = arith.addf %280, %281 : vector<3x16xf32>
    %cst_209 = arith.constant dense<0.000000e+00> : vector<3x16xf32>
    %283 = tpu.matmul %269, %177, %cst_209 {dimension_numbers = #tpu.dot_dimension_numbers<[1], [0], [0], [1], [0, 0, 1, 1], [], []>} : vector<3x16xf32>, vector<16x16xf32>, vector<3x16xf32> -> vector<3x16xf32>
    %284 = vector.broadcast %189 : vector<1x16xf32> to vector<3x16xf32>
    %285 = arith.addf %283, %284 : vector<3x16xf32>
    %cst_210 = arith.constant dense<0.000000e+00> : vector<3x16xf32>
    %286 = tpu.matmul %269, %179, %cst_210 {dimension_numbers = #tpu.dot_dimension_numbers<[1], [0], [0], [1], [0, 0, 1, 1], [], []>} : vector<3x16xf32>, vector<16x16xf32>, vector<3x16xf32> -> vector<3x16xf32>
    %287 = vector.broadcast %191 : vector<1x16xf32> to vector<3x16xf32>
    %288 = arith.addf %286, %287 : vector<3x16xf32>
    %289 = arith.addf %277, %282 : vector<3x16xf32>
    %290 = arith.negf %289 : vector<3x16xf32>
    %291 = math.exp %290 : vector<3x16xf32>
    %cst_211 = arith.constant 1.000000e+00 : f32
    %292 = vector.broadcast %cst_211 : f32 to vector<3x16xf32>
    %293 = arith.addf %292, %291 : vector<3x16xf32>
    %294 = arith.divf %292, %293 : vector<3x16xf32>
    %295 = arith.addf %278, %285 : vector<3x16xf32>
    %296 = arith.negf %295 : vector<3x16xf32>
    %297 = math.exp %296 : vector<3x16xf32>
    %cst_212 = arith.constant 1.000000e+00 : f32
    %298 = vector.broadcast %cst_212 : f32 to vector<3x16xf32>
    %299 = arith.addf %298, %297 : vector<3x16xf32>
    %300 = arith.divf %298, %299 : vector<3x16xf32>
    %301 = arith.mulf %294, %288 : vector<3x16xf32>
    %302 = arith.addf %279, %301 : vector<3x16xf32>
    %303 = math.tanh %302 : vector<3x16xf32>
    %cst_213 = arith.constant 1.000000e+00 : f32
    %304 = vector.broadcast %cst_213 : f32 to vector<3x16xf32>
    %305 = arith.subf %304, %300 : vector<3x16xf32>
    %306 = arith.mulf %305, %303 : vector<3x16xf32>
    %307 = arith.mulf %300, %269 : vector<3x16xf32>
    %308 = arith.addf %306, %307 : vector<3x16xf32>
    %c2_i32_214 = arith.constant 2 : i32
    %309 = vector.broadcast %c2_i32_214 : i32 to vector<3x1xi32>
    %310 = arith.cmpi sgt, %128, %309 : vector<3x1xi32>
    %cst_215 = arith.constant 0.000000e+00 : f32
    %311 = vector.shape_cast %310 : vector<3x1xi1> to vector<3x1xi1>
    %312 = vector.broadcast %311 : vector<3x1xi1> to vector<3x16xi1>
    %313 = vector.broadcast %cst_215 : f32 to vector<3x16xf32>
    %314 = arith.select %312, %308, %313 : vector<3x16xi1>, vector<3x16xf32>
    %315 = arith.addf %276, %314 : vector<3x16xf32>
    %c2_i32_216 = arith.constant 2 : i32
    %316 = vector.broadcast %c2_i32_216 : i32 to vector<3x1xi32>
    %317 = arith.cmpi sle, %130, %316 : vector<3x1xi32>
    %cst_217 = arith.constant 0.000000e+00 : f32
    %318 = vector.shape_cast %317 : vector<3x1xi1> to vector<3x1xi1>
    %319 = vector.broadcast %318 : vector<3x1xi1> to vector<3x16xi1>
    %320 = vector.broadcast %cst_217 : f32 to vector<3x16xf32>
    %321 = arith.select %319, %320, %198 : vector<3x16xi1>, vector<3x16xf32>
    %322 = vector.extract_strided_slice %159 {offsets = [6, 0], sizes = [3, 16], strides = [1, 1]} : vector<9x16xf32> to vector<3x16xf32>
    %323 = vector.extract_strided_slice %166 {offsets = [6, 0], sizes = [3, 16], strides = [1, 1]} : vector<9x16xf32> to vector<3x16xf32>
    %324 = vector.extract_strided_slice %173 {offsets = [6, 0], sizes = [3, 16], strides = [1, 1]} : vector<9x16xf32> to vector<3x16xf32>
    %cst_218 = arith.constant dense<0.000000e+00> : vector<3x16xf32>
    %325 = tpu.matmul %321, %181, %cst_218 {dimension_numbers = #tpu.dot_dimension_numbers<[1], [0], [0], [1], [0, 0, 1, 1], [], []>} : vector<3x16xf32>, vector<16x16xf32>, vector<3x16xf32> -> vector<3x16xf32>
    %326 = vector.broadcast %193 : vector<1x16xf32> to vector<3x16xf32>
    %327 = arith.addf %325, %326 : vector<3x16xf32>
    %cst_219 = arith.constant dense<0.000000e+00> : vector<3x16xf32>
    %328 = tpu.matmul %321, %183, %cst_219 {dimension_numbers = #tpu.dot_dimension_numbers<[1], [0], [0], [1], [0, 0, 1, 1], [], []>} : vector<3x16xf32>, vector<16x16xf32>, vector<3x16xf32> -> vector<3x16xf32>
    %329 = vector.broadcast %195 : vector<1x16xf32> to vector<3x16xf32>
    %330 = arith.addf %328, %329 : vector<3x16xf32>
    %cst_220 = arith.constant dense<0.000000e+00> : vector<3x16xf32>
    %331 = tpu.matmul %321, %185, %cst_220 {dimension_numbers = #tpu.dot_dimension_numbers<[1], [0], [0], [1], [0, 0, 1, 1], [], []>} : vector<3x16xf32>, vector<16x16xf32>, vector<3x16xf32> -> vector<3x16xf32>
    %332 = vector.broadcast %197 : vector<1x16xf32> to vector<3x16xf32>
    %333 = arith.addf %331, %332 : vector<3x16xf32>
    %334 = arith.addf %322, %327 : vector<3x16xf32>
    %335 = arith.negf %334 : vector<3x16xf32>
    %336 = math.exp %335 : vector<3x16xf32>
    %cst_221 = arith.constant 1.000000e+00 : f32
    %337 = vector.broadcast %cst_221 : f32 to vector<3x16xf32>
    %338 = arith.addf %337, %336 : vector<3x16xf32>
    %339 = arith.divf %337, %338 : vector<3x16xf32>
    %340 = arith.addf %323, %330 : vector<3x16xf32>
    %341 = arith.negf %340 : vector<3x16xf32>
    %342 = math.exp %341 : vector<3x16xf32>
    %cst_222 = arith.constant 1.000000e+00 : f32
    %343 = vector.broadcast %cst_222 : f32 to vector<3x16xf32>
    %344 = arith.addf %343, %342 : vector<3x16xf32>
    %345 = arith.divf %343, %344 : vector<3x16xf32>
    %346 = arith.mulf %339, %333 : vector<3x16xf32>
    %347 = arith.addf %324, %346 : vector<3x16xf32>
    %348 = math.tanh %347 : vector<3x16xf32>
    %cst_223 = arith.constant 1.000000e+00 : f32
    %349 = vector.broadcast %cst_223 : f32 to vector<3x16xf32>
    %350 = arith.subf %349, %345 : vector<3x16xf32>
    %351 = arith.mulf %350, %348 : vector<3x16xf32>
    %352 = arith.mulf %345, %321 : vector<3x16xf32>
    %353 = arith.addf %351, %352 : vector<3x16xf32>
    %c2_i32_224 = arith.constant 2 : i32
    %354 = vector.broadcast %c2_i32_224 : i32 to vector<3x1xi32>
    %355 = arith.cmpi sgt, %128, %354 : vector<3x1xi32>
    %cst_225 = arith.constant 0.000000e+00 : f32
    %356 = vector.shape_cast %355 : vector<3x1xi1> to vector<3x1xi1>
    %357 = vector.broadcast %356 : vector<3x1xi1> to vector<3x16xi1>
    %358 = vector.broadcast %cst_225 : f32 to vector<3x16xf32>
    %359 = arith.select %357, %353, %358 : vector<3x16xi1>, vector<3x16xf32>
    %360 = arith.addf %198, %359 : vector<3x16xf32>
    %c1_i32_226 = arith.constant 1 : i32
    %361 = vector.broadcast %c1_i32_226 : i32 to vector<3x1xi32>
    %362 = arith.cmpi sle, %130, %361 : vector<3x1xi32>
    %cst_227 = arith.constant 0.000000e+00 : f32
    %363 = vector.shape_cast %362 : vector<3x1xi1> to vector<3x1xi1>
    %364 = vector.broadcast %363 : vector<3x1xi1> to vector<3x16xi1>
    %365 = vector.broadcast %cst_227 : f32 to vector<3x16xf32>
    %366 = arith.select %364, %365, %353 : vector<3x16xi1>, vector<3x16xf32>
    %367 = vector.extract_strided_slice %159 {offsets = [3, 0], sizes = [3, 16], strides = [1, 1]} : vector<9x16xf32> to vector<3x16xf32>
    %368 = vector.extract_strided_slice %166 {offsets = [3, 0], sizes = [3, 16], strides = [1, 1]} : vector<9x16xf32> to vector<3x16xf32>
    %369 = vector.extract_strided_slice %173 {offsets = [3, 0], sizes = [3, 16], strides = [1, 1]} : vector<9x16xf32> to vector<3x16xf32>
    %cst_228 = arith.constant dense<0.000000e+00> : vector<3x16xf32>
    %370 = tpu.matmul %366, %181, %cst_228 {dimension_numbers = #tpu.dot_dimension_numbers<[1], [0], [0], [1], [0, 0, 1, 1], [], []>} : vector<3x16xf32>, vector<16x16xf32>, vector<3x16xf32> -> vector<3x16xf32>
    %371 = vector.broadcast %193 : vector<1x16xf32> to vector<3x16xf32>
    %372 = arith.addf %370, %371 : vector<3x16xf32>
    %cst_229 = arith.constant dense<0.000000e+00> : vector<3x16xf32>
    %373 = tpu.matmul %366, %183, %cst_229 {dimension_numbers = #tpu.dot_dimension_numbers<[1], [0], [0], [1], [0, 0, 1, 1], [], []>} : vector<3x16xf32>, vector<16x16xf32>, vector<3x16xf32> -> vector<3x16xf32>
    %374 = vector.broadcast %195 : vector<1x16xf32> to vector<3x16xf32>
    %375 = arith.addf %373, %374 : vector<3x16xf32>
    %cst_230 = arith.constant dense<0.000000e+00> : vector<3x16xf32>
    %376 = tpu.matmul %366, %185, %cst_230 {dimension_numbers = #tpu.dot_dimension_numbers<[1], [0], [0], [1], [0, 0, 1, 1], [], []>} : vector<3x16xf32>, vector<16x16xf32>, vector<3x16xf32> -> vector<3x16xf32>
    %377 = vector.broadcast %197 : vector<1x16xf32> to vector<3x16xf32>
    %378 = arith.addf %376, %377 : vector<3x16xf32>
    %379 = arith.addf %367, %372 : vector<3x16xf32>
    %380 = arith.negf %379 : vector<3x16xf32>
    %381 = math.exp %380 : vector<3x16xf32>
    %cst_231 = arith.constant 1.000000e+00 : f32
    %382 = vector.broadcast %cst_231 : f32 to vector<3x16xf32>
    %383 = arith.addf %382, %381 : vector<3x16xf32>
    %384 = arith.divf %382, %383 : vector<3x16xf32>
    %385 = arith.addf %368, %375 : vector<3x16xf32>
    %386 = arith.negf %385 : vector<3x16xf32>
    %387 = math.exp %386 : vector<3x16xf32>
    %cst_232 = arith.constant 1.000000e+00 : f32
    %388 = vector.broadcast %cst_232 : f32 to vector<3x16xf32>
    %389 = arith.addf %388, %387 : vector<3x16xf32>
    %390 = arith.divf %388, %389 : vector<3x16xf32>
    %391 = arith.mulf %384, %378 : vector<3x16xf32>
    %392 = arith.addf %369, %391 : vector<3x16xf32>
    %393 = math.tanh %392 : vector<3x16xf32>
    %cst_233 = arith.constant 1.000000e+00 : f32
    %394 = vector.broadcast %cst_233 : f32 to vector<3x16xf32>
    %395 = arith.subf %394, %390 : vector<3x16xf32>
    %396 = arith.mulf %395, %393 : vector<3x16xf32>
    %397 = arith.mulf %390, %366 : vector<3x16xf32>
    %398 = arith.addf %396, %397 : vector<3x16xf32>
    %c1_i32_234 = arith.constant 1 : i32
    %399 = vector.broadcast %c1_i32_234 : i32 to vector<3x1xi32>
    %400 = arith.cmpi sgt, %128, %399 : vector<3x1xi32>
    %cst_235 = arith.constant 0.000000e+00 : f32
    %401 = vector.shape_cast %400 : vector<3x1xi1> to vector<3x1xi1>
    %402 = vector.broadcast %401 : vector<3x1xi1> to vector<3x16xi1>
    %403 = vector.broadcast %cst_235 : f32 to vector<3x16xf32>
    %404 = arith.select %402, %398, %403 : vector<3x16xi1>, vector<3x16xf32>
    %405 = arith.addf %360, %404 : vector<3x16xf32>
    %c0_i32_236 = arith.constant 0 : i32
    %406 = vector.broadcast %c0_i32_236 : i32 to vector<3x1xi32>
    %407 = arith.cmpi sle, %130, %406 : vector<3x1xi32>
    %cst_237 = arith.constant 0.000000e+00 : f32
    %408 = vector.shape_cast %407 : vector<3x1xi1> to vector<3x1xi1>
    %409 = vector.broadcast %408 : vector<3x1xi1> to vector<3x16xi1>
    %410 = vector.broadcast %cst_237 : f32 to vector<3x16xf32>
    %411 = arith.select %409, %410, %398 : vector<3x16xi1>, vector<3x16xf32>
    %412 = vector.extract_strided_slice %159 {offsets = [0, 0], sizes = [3, 16], strides = [1, 1]} : vector<9x16xf32> to vector<3x16xf32>
    %413 = vector.extract_strided_slice %166 {offsets = [0, 0], sizes = [3, 16], strides = [1, 1]} : vector<9x16xf32> to vector<3x16xf32>
    %414 = vector.extract_strided_slice %173 {offsets = [0, 0], sizes = [3, 16], strides = [1, 1]} : vector<9x16xf32> to vector<3x16xf32>
    %cst_238 = arith.constant dense<0.000000e+00> : vector<3x16xf32>
    %415 = tpu.matmul %411, %181, %cst_238 {dimension_numbers = #tpu.dot_dimension_numbers<[1], [0], [0], [1], [0, 0, 1, 1], [], []>} : vector<3x16xf32>, vector<16x16xf32>, vector<3x16xf32> -> vector<3x16xf32>
    %416 = vector.broadcast %193 : vector<1x16xf32> to vector<3x16xf32>
    %417 = arith.addf %415, %416 : vector<3x16xf32>
    %cst_239 = arith.constant dense<0.000000e+00> : vector<3x16xf32>
    %418 = tpu.matmul %411, %183, %cst_239 {dimension_numbers = #tpu.dot_dimension_numbers<[1], [0], [0], [1], [0, 0, 1, 1], [], []>} : vector<3x16xf32>, vector<16x16xf32>, vector<3x16xf32> -> vector<3x16xf32>
    %419 = vector.broadcast %195 : vector<1x16xf32> to vector<3x16xf32>
    %420 = arith.addf %418, %419 : vector<3x16xf32>
    %cst_240 = arith.constant dense<0.000000e+00> : vector<3x16xf32>
    %421 = tpu.matmul %411, %185, %cst_240 {dimension_numbers = #tpu.dot_dimension_numbers<[1], [0], [0], [1], [0, 0, 1, 1], [], []>} : vector<3x16xf32>, vector<16x16xf32>, vector<3x16xf32> -> vector<3x16xf32>
    %422 = vector.broadcast %197 : vector<1x16xf32> to vector<3x16xf32>
    %423 = arith.addf %421, %422 : vector<3x16xf32>
    %424 = arith.addf %412, %417 : vector<3x16xf32>
    %425 = arith.negf %424 : vector<3x16xf32>
    %426 = math.exp %425 : vector<3x16xf32>
    %cst_241 = arith.constant 1.000000e+00 : f32
    %427 = vector.broadcast %cst_241 : f32 to vector<3x16xf32>
    %428 = arith.addf %427, %426 : vector<3x16xf32>
    %429 = arith.divf %427, %428 : vector<3x16xf32>
    %430 = arith.addf %413, %420 : vector<3x16xf32>
    %431 = arith.negf %430 : vector<3x16xf32>
    %432 = math.exp %431 : vector<3x16xf32>
    %cst_242 = arith.constant 1.000000e+00 : f32
    %433 = vector.broadcast %cst_242 : f32 to vector<3x16xf32>
    %434 = arith.addf %433, %432 : vector<3x16xf32>
    %435 = arith.divf %433, %434 : vector<3x16xf32>
    %436 = arith.mulf %429, %423 : vector<3x16xf32>
    %437 = arith.addf %414, %436 : vector<3x16xf32>
    %438 = math.tanh %437 : vector<3x16xf32>
    %cst_243 = arith.constant 1.000000e+00 : f32
    %439 = vector.broadcast %cst_243 : f32 to vector<3x16xf32>
    %440 = arith.subf %439, %435 : vector<3x16xf32>
    %441 = arith.mulf %440, %438 : vector<3x16xf32>
    %442 = arith.mulf %435, %411 : vector<3x16xf32>
    %443 = arith.addf %441, %442 : vector<3x16xf32>
    %c0_i32_244 = arith.constant 0 : i32
    %444 = vector.broadcast %c0_i32_244 : i32 to vector<3x1xi32>
    %445 = arith.cmpi sgt, %128, %444 : vector<3x1xi32>
    %cst_245 = arith.constant 0.000000e+00 : f32
    %446 = vector.shape_cast %445 : vector<3x1xi1> to vector<3x1xi1>
    %447 = vector.broadcast %446 : vector<3x1xi1> to vector<3x16xi1>
    %448 = vector.broadcast %cst_245 : f32 to vector<3x16xf32>
    %449 = arith.select %447, %443, %448 : vector<3x16xi1>, vector<3x16xf32>
    %450 = arith.addf %405, %449 : vector<3x16xf32>
    %cst_246 = arith.constant 1.000000e+00 : f32
    %451 = vector.broadcast %cst_246 : f32 to vector<3x1xf32>
    %452 = arith.maximumf %131, %451 : vector<3x1xf32>
    %453 = tpu.reciprocal %452 {approx = true} : vector<3x1xf32> -> vector<3x1xf32>
    %454 = vector.broadcast %453 : vector<3x1xf32> to vector<3x16xf32>
    %455 = arith.mulf %315, %454 : vector<3x16xf32>
    %456 = vector.broadcast %453 : vector<3x1xf32> to vector<3x16xf32>
    %457 = arith.mulf %450, %456 : vector<3x16xf32>
    %458 = tpu.concatenate %455, %457 in 1 : vector<3x16xf32>, vector<3x16xf32> -> vector<3x32xf32>
    %c0_247 = arith.constant 0 : index
    %c0_248 = arith.constant 0 : index
    %c0_249 = arith.constant 0 : index
    %459 = vector.load %arg8[%c0_247, %c0_248, %c0_249] : memref<1x3x32xf32, #tpu.memory_space<vmem>>, vector<1x3x32xf32>
    %460 = vector.shape_cast %459 : vector<1x3x32xf32> to vector<3x32xf32>
    %461 = vector.shape_cast %458 : vector<3x32xf32> to vector<1x3x32xf32>
    tpu.vector_store %arg8[%c0_247, %c0_248, %c0_249], %461 {strides = array<i32>} : memref<1x3x32xf32, #tpu.memory_space<vmem>>, vector<1x3x32xf32>,
    %c0_i32_250 = arith.constant 0 : i32
    %c0_i32_251 = arith.constant 0 : i32
    %c0_i32_252 = arith.constant 0 : i32
    %462 = tpu.memref_slice %arg3[%c0_i32_251, %c0_i32_252] : memref<7x32xf32, #tpu.memory_space<any>> -> memref<1x32xf32, #tpu.memory_space<any>>
    %c0_i32_253 = arith.constant 0 : i32
    %c0_i32_254 = arith.constant 0 : i32
    %463 = tpu.memref_slice %arg11[%c0_i32_253, %c0_i32_254] : memref<9x32xf32, #tpu.memory_space<vmem>> -> memref<1x32xf32, #tpu.memory_space<vmem>>
    %464 = tpu.memref_slice %arg13[%c0_i32_250] : memref<9x!tpu.dma_semaphore, #tpu.memory_space<semaphore_mem>> -> memref<1x!tpu.dma_semaphore, #tpu.memory_space<semaphore_mem>>
    %465 = tpu.memref_squeeze %464 : memref<1x!tpu.dma_semaphore, #tpu.memory_space<semaphore_mem>> -> memref<!tpu.dma_semaphore, #tpu.memory_space<semaphore_mem>>
    tpu.wait_dma2 semaphore(%465 : memref<!tpu.dma_semaphore, #tpu.memory_space<semaphore_mem>>) src(%462 : memref<1x32xf32, #tpu.memory_space<any>>) dst(%463 : memref<1x32xf32, #tpu.memory_space<vmem>>)
    %c1_i32_255 = arith.constant 1 : i32
    %c0_i32_256 = arith.constant 0 : i32
    %c0_i32_257 = arith.constant 0 : i32
    %466 = tpu.memref_slice %arg3[%c0_i32_256, %c0_i32_257] : memref<7x32xf32, #tpu.memory_space<any>> -> memref<1x32xf32, #tpu.memory_space<any>>
    %c1_i32_258 = arith.constant 1 : i32
    %c0_i32_259 = arith.constant 0 : i32
    %467 = tpu.memref_slice %arg11[%c1_i32_258, %c0_i32_259] : memref<9x32xf32, #tpu.memory_space<vmem>> -> memref<1x32xf32, #tpu.memory_space<vmem>>
    %468 = tpu.memref_slice %arg13[%c1_i32_255] : memref<9x!tpu.dma_semaphore, #tpu.memory_space<semaphore_mem>> -> memref<1x!tpu.dma_semaphore, #tpu.memory_space<semaphore_mem>>
    %469 = tpu.memref_squeeze %468 : memref<1x!tpu.dma_semaphore, #tpu.memory_space<semaphore_mem>> -> memref<!tpu.dma_semaphore, #tpu.memory_space<semaphore_mem>>
    tpu.wait_dma2 semaphore(%469 : memref<!tpu.dma_semaphore, #tpu.memory_space<semaphore_mem>>) src(%466 : memref<1x32xf32, #tpu.memory_space<any>>) dst(%467 : memref<1x32xf32, #tpu.memory_space<vmem>>)
    %c2_i32_260 = arith.constant 2 : i32
    %c0_i32_261 = arith.constant 0 : i32
    %c0_i32_262 = arith.constant 0 : i32
    %470 = tpu.memref_slice %arg3[%c0_i32_261, %c0_i32_262] : memref<7x32xf32, #tpu.memory_space<any>> -> memref<1x32xf32, #tpu.memory_space<any>>
    %c2_i32_263 = arith.constant 2 : i32
    %c0_i32_264 = arith.constant 0 : i32
    %471 = tpu.memref_slice %arg11[%c2_i32_263, %c0_i32_264] : memref<9x32xf32, #tpu.memory_space<vmem>> -> memref<1x32xf32, #tpu.memory_space<vmem>>
    %472 = tpu.memref_slice %arg13[%c2_i32_260] : memref<9x!tpu.dma_semaphore, #tpu.memory_space<semaphore_mem>> -> memref<1x!tpu.dma_semaphore, #tpu.memory_space<semaphore_mem>>
    %473 = tpu.memref_squeeze %472 : memref<1x!tpu.dma_semaphore, #tpu.memory_space<semaphore_mem>> -> memref<!tpu.dma_semaphore, #tpu.memory_space<semaphore_mem>>
    tpu.wait_dma2 semaphore(%473 : memref<!tpu.dma_semaphore, #tpu.memory_space<semaphore_mem>>) src(%470 : memref<1x32xf32, #tpu.memory_space<any>>) dst(%471 : memref<1x32xf32, #tpu.memory_space<vmem>>)
    %c3_i32_265 = arith.constant 3 : i32
    %c0_i32_266 = arith.constant 0 : i32
    %c0_i32_267 = arith.constant 0 : i32
    %474 = tpu.memref_slice %arg3[%c0_i32_266, %c0_i32_267] : memref<7x32xf32, #tpu.memory_space<any>> -> memref<1x32xf32, #tpu.memory_space<any>>
    %c3_i32_268 = arith.constant 3 : i32
    %c0_i32_269 = arith.constant 0 : i32
    %475 = tpu.memref_slice %arg11[%c3_i32_268, %c0_i32_269] : memref<9x32xf32, #tpu.memory_space<vmem>> -> memref<1x32xf32, #tpu.memory_space<vmem>>
    %476 = tpu.memref_slice %arg13[%c3_i32_265] : memref<9x!tpu.dma_semaphore, #tpu.memory_space<semaphore_mem>> -> memref<1x!tpu.dma_semaphore, #tpu.memory_space<semaphore_mem>>
    %477 = tpu.memref_squeeze %476 : memref<1x!tpu.dma_semaphore, #tpu.memory_space<semaphore_mem>> -> memref<!tpu.dma_semaphore, #tpu.memory_space<semaphore_mem>>
    tpu.wait_dma2 semaphore(%477 : memref<!tpu.dma_semaphore, #tpu.memory_space<semaphore_mem>>) src(%474 : memref<1x32xf32, #tpu.memory_space<any>>) dst(%475 : memref<1x32xf32, #tpu.memory_space<vmem>>)
    %c4_i32_270 = arith.constant 4 : i32
    %c0_i32_271 = arith.constant 0 : i32
    %c0_i32_272 = arith.constant 0 : i32
    %478 = tpu.memref_slice %arg3[%c0_i32_271, %c0_i32_272] : memref<7x32xf32, #tpu.memory_space<any>> -> memref<1x32xf32, #tpu.memory_space<any>>
    %c4_i32_273 = arith.constant 4 : i32
    %c0_i32_274 = arith.constant 0 : i32
    %479 = tpu.memref_slice %arg11[%c4_i32_273, %c0_i32_274] : memref<9x32xf32, #tpu.memory_space<vmem>> -> memref<1x32xf32, #tpu.memory_space<vmem>>
    %480 = tpu.memref_slice %arg13[%c4_i32_270] : memref<9x!tpu.dma_semaphore, #tpu.memory_space<semaphore_mem>> -> memref<1x!tpu.dma_semaphore, #tpu.memory_space<semaphore_mem>>
    %481 = tpu.memref_squeeze %480 : memref<1x!tpu.dma_semaphore, #tpu.memory_space<semaphore_mem>> -> memref<!tpu.dma_semaphore, #tpu.memory_space<semaphore_mem>>
    tpu.wait_dma2 semaphore(%481 : memref<!tpu.dma_semaphore, #tpu.memory_space<semaphore_mem>>) src(%478 : memref<1x32xf32, #tpu.memory_space<any>>) dst(%479 : memref<1x32xf32, #tpu.memory_space<vmem>>)
    %c5_i32_275 = arith.constant 5 : i32
    %c0_i32_276 = arith.constant 0 : i32
    %c0_i32_277 = arith.constant 0 : i32
    %482 = tpu.memref_slice %arg3[%c0_i32_276, %c0_i32_277] : memref<7x32xf32, #tpu.memory_space<any>> -> memref<1x32xf32, #tpu.memory_space<any>>
    %c5_i32_278 = arith.constant 5 : i32
    %c0_i32_279 = arith.constant 0 : i32
    %483 = tpu.memref_slice %arg11[%c5_i32_278, %c0_i32_279] : memref<9x32xf32, #tpu.memory_space<vmem>> -> memref<1x32xf32, #tpu.memory_space<vmem>>
    %484 = tpu.memref_slice %arg13[%c5_i32_275] : memref<9x!tpu.dma_semaphore, #tpu.memory_space<semaphore_mem>> -> memref<1x!tpu.dma_semaphore, #tpu.memory_space<semaphore_mem>>
    %485 = tpu.memref_squeeze %484 : memref<1x!tpu.dma_semaphore, #tpu.memory_space<semaphore_mem>> -> memref<!tpu.dma_semaphore, #tpu.memory_space<semaphore_mem>>
    tpu.wait_dma2 semaphore(%485 : memref<!tpu.dma_semaphore, #tpu.memory_space<semaphore_mem>>) src(%482 : memref<1x32xf32, #tpu.memory_space<any>>) dst(%483 : memref<1x32xf32, #tpu.memory_space<vmem>>)
    %c6_i32_280 = arith.constant 6 : i32
    %c0_i32_281 = arith.constant 0 : i32
    %c0_i32_282 = arith.constant 0 : i32
    %486 = tpu.memref_slice %arg3[%c0_i32_281, %c0_i32_282] : memref<7x32xf32, #tpu.memory_space<any>> -> memref<1x32xf32, #tpu.memory_space<any>>
    %c6_i32_283 = arith.constant 6 : i32
    %c0_i32_284 = arith.constant 0 : i32
    %487 = tpu.memref_slice %arg11[%c6_i32_283, %c0_i32_284] : memref<9x32xf32, #tpu.memory_space<vmem>> -> memref<1x32xf32, #tpu.memory_space<vmem>>
    %488 = tpu.memref_slice %arg13[%c6_i32_280] : memref<9x!tpu.dma_semaphore, #tpu.memory_space<semaphore_mem>> -> memref<1x!tpu.dma_semaphore, #tpu.memory_space<semaphore_mem>>
    %489 = tpu.memref_squeeze %488 : memref<1x!tpu.dma_semaphore, #tpu.memory_space<semaphore_mem>> -> memref<!tpu.dma_semaphore, #tpu.memory_space<semaphore_mem>>
    tpu.wait_dma2 semaphore(%489 : memref<!tpu.dma_semaphore, #tpu.memory_space<semaphore_mem>>) src(%486 : memref<1x32xf32, #tpu.memory_space<any>>) dst(%487 : memref<1x32xf32, #tpu.memory_space<vmem>>)
    %c7_i32_285 = arith.constant 7 : i32
    %c0_i32_286 = arith.constant 0 : i32
    %c0_i32_287 = arith.constant 0 : i32
    %490 = tpu.memref_slice %arg3[%c0_i32_286, %c0_i32_287] : memref<7x32xf32, #tpu.memory_space<any>> -> memref<1x32xf32, #tpu.memory_space<any>>
    %c7_i32_288 = arith.constant 7 : i32
    %c0_i32_289 = arith.constant 0 : i32
    %491 = tpu.memref_slice %arg11[%c7_i32_288, %c0_i32_289] : memref<9x32xf32, #tpu.memory_space<vmem>> -> memref<1x32xf32, #tpu.memory_space<vmem>>
    %492 = tpu.memref_slice %arg13[%c7_i32_285] : memref<9x!tpu.dma_semaphore, #tpu.memory_space<semaphore_mem>> -> memref<1x!tpu.dma_semaphore, #tpu.memory_space<semaphore_mem>>
    %493 = tpu.memref_squeeze %492 : memref<1x!tpu.dma_semaphore, #tpu.memory_space<semaphore_mem>> -> memref<!tpu.dma_semaphore, #tpu.memory_space<semaphore_mem>>
    tpu.wait_dma2 semaphore(%493 : memref<!tpu.dma_semaphore, #tpu.memory_space<semaphore_mem>>) src(%490 : memref<1x32xf32, #tpu.memory_space<any>>) dst(%491 : memref<1x32xf32, #tpu.memory_space<vmem>>)
    %c8_i32_290 = arith.constant 8 : i32
    %c0_i32_291 = arith.constant 0 : i32
    %c0_i32_292 = arith.constant 0 : i32
    %494 = tpu.memref_slice %arg3[%c0_i32_291, %c0_i32_292] : memref<7x32xf32, #tpu.memory_space<any>> -> memref<1x32xf32, #tpu.memory_space<any>>
    %c8_i32_293 = arith.constant 8 : i32
    %c0_i32_294 = arith.constant 0 : i32
    %495 = tpu.memref_slice %arg11[%c8_i32_293, %c0_i32_294] : memref<9x32xf32, #tpu.memory_space<vmem>> -> memref<1x32xf32, #tpu.memory_space<vmem>>
    %496 = tpu.memref_slice %arg13[%c8_i32_290] : memref<9x!tpu.dma_semaphore, #tpu.memory_space<semaphore_mem>> -> memref<1x!tpu.dma_semaphore, #tpu.memory_space<semaphore_mem>>
    %497 = tpu.memref_squeeze %496 : memref<1x!tpu.dma_semaphore, #tpu.memory_space<semaphore_mem>> -> memref<!tpu.dma_semaphore, #tpu.memory_space<semaphore_mem>>
    tpu.wait_dma2 semaphore(%497 : memref<!tpu.dma_semaphore, #tpu.memory_space<semaphore_mem>>) src(%494 : memref<1x32xf32, #tpu.memory_space<any>>) dst(%495 : memref<1x32xf32, #tpu.memory_space<vmem>>)
    %c0_295 = arith.constant 0 : index
    %c0_296 = arith.constant 0 : index
    %498 = vector.load %arg11[%c0_295, %c0_296] : memref<9x32xf32, #tpu.memory_space<vmem>>, vector<9x32xf32>
    %c0_297 = arith.constant 0 : index
    %c0_298 = arith.constant 0 : index
    %c0_299 = arith.constant 0 : index
    %499 = vector.load %arg9[%c0_297, %c0_298, %c0_299] : memref<1x9x32xf32, #tpu.memory_space<vmem>>, vector<1x9x32xf32>
    %500 = vector.shape_cast %499 : vector<1x9x32xf32> to vector<9x32xf32>
    %501 = vector.shape_cast %498 : vector<9x32xf32> to vector<1x9x32xf32>
    tpu.vector_store %arg9[%c0_297, %c0_298, %c0_299], %501 {strides = array<i32>} : memref<1x9x32xf32, #tpu.memory_space<vmem>>, vector<1x9x32xf32>,
    return
  }
  func.func @transform_0(%arg0: i32, %arg1: memref<2x9xi32, #tpu.memory_space<smem>>) -> (i32, i32, i32) {
    %c0_i32 = arith.constant 0 : i32
    %c0_i32_0 = arith.constant 0 : i32
    %c0_i32_1 = arith.constant 0 : i32
    return %arg0, %c0_i32, %c0_i32_0 : i32, i32, i32
  }
  func.func @transform_2(%arg0: i32, %arg1: memref<2x9xi32, #tpu.memory_space<smem>>) -> (i32, i32, i32) {
    %c0_i32 = arith.constant 0 : i32
    %c0_i32_0 = arith.constant 0 : i32
    %c0_i32_1 = arith.constant 0 : i32
    %c0_i32_2 = arith.constant 0 : i32
    return %c0_i32, %c0_i32_0, %c0_i32_1 : i32, i32, i32
  }
  func.func @transform_3(%arg0: i32, %arg1: memref<2x9xi32, #tpu.memory_space<smem>>) -> (i32, i32, i32) {
    %c0_i32 = arith.constant 0 : i32
    %c0_i32_0 = arith.constant 0 : i32
    %c0_i32_1 = arith.constant 0 : i32
    %c0_i32_2 = arith.constant 0 : i32
    return %c0_i32, %c0_i32_0, %c0_i32_1 : i32, i32, i32
  }
  func.func @transform_4(%arg0: i32, %arg1: memref<2x9xi32, #tpu.memory_space<smem>>) -> (i32, i32, i32) {
    %c0_i32 = arith.constant 0 : i32
    %c0_i32_0 = arith.constant 0 : i32
    %c0_i32_1 = arith.constant 0 : i32
    %c0_i32_2 = arith.constant 0 : i32
    return %c0_i32, %c0_i32_0, %c0_i32_1 : i32, i32, i32
  }
  func.func @transform_5(%arg0: i32, %arg1: memref<2x9xi32, #tpu.memory_space<smem>>) -> (i32, i32, i32) {
    %c0_i32 = arith.constant 0 : i32
    %c0_i32_0 = arith.constant 0 : i32
    %c0_i32_1 = arith.constant 0 : i32
    %c0_i32_2 = arith.constant 0 : i32
    return %c0_i32, %c0_i32_0, %c0_i32_1 : i32, i32, i32
  }
  func.func @transform_6(%arg0: i32, %arg1: memref<2x9xi32, #tpu.memory_space<smem>>) -> (i32, i32, i32) {
    %c0_i32 = arith.constant 0 : i32
    %c0_i32_0 = arith.constant 0 : i32
    %c0_i32_1 = arith.constant 0 : i32
    return %arg0, %c0_i32, %c0_i32_0 : i32, i32, i32
  }
  func.func @transform_7(%arg0: i32, %arg1: memref<2x9xi32, #tpu.memory_space<smem>>) -> (i32, i32, i32) {
    %c0_i32 = arith.constant 0 : i32
    %c0_i32_0 = arith.constant 0 : i32
    %c0_i32_1 = arith.constant 0 : i32
    return %arg0, %c0_i32, %c0_i32_0 : i32, i32, i32
  }
}

</mosaic_0001>

<llo_original>
// kernel: tpu_custom_call.1
$region0: #{tpu_custom_call.1}
  #allocation0 [shape = 'u32[]', space=smem, size = 0x4, offset = 0x4, fixed_abs, tag = 'smem constant byte address 0x4 - core index']
  #allocation1 [shape = 'u32[144,128]{1,0:T(1,128)}', space=vmem, size = 0x12000, scoped, tag = 'internal scratch']
  #allocation2 [shape = 'f32[9,32]{1,0:T(8,128)}', space=vmem, size = 0x2000, scoped, tag = 'scratch operand']
  #allocation3 [shape = 'f32[9,32]{1,0:T(8,128)}', space=vmem, size = 0x2000, scoped, tag = 'scratch operand']
  #allocation4 [shape = 's32[9]{0}', space=sflag, size = 0x24, scoped, tag = 'scratch operand']
  #allocation5 [shape = 's32[9]{0}', space=sflag, size = 0x24, scoped, tag = 'scratch operand']
  #allocation6 [shape = 's32[1]{0}', space=sflag, size = 0x4, scoped, tag = 'scoped memory for tpu_custom_call.1']
  #allocation7 [shape = 'u8[1024]{0}', space=smem, size = 0x400, scoped, tag = 'prefetched SMEM operand 0']
  #allocation8 [shape = 's32[]', space=sflag, size = 0x4, offset = 0, fixed_abs, tag = 'sflag constant byte address 0x0 - dummy sync flag']
  #allocation9 [shape = 's32[]', space=sflag, size = 0x4, offset = 0, fixed_abs, tag = 'sflag constant byte address 0x0 - dummy sync flag']
  #allocation10 [shape = 's32[]', space=sflag, size = 0x4, offset = 0, fixed_abs, tag = 'sflag constant byte address 0x0 - dummy sync flag']
  #allocation11 [shape = 's32[]', space=sflag, size = 0x4, offset = 0, fixed_abs, tag = 'sflag constant byte address 0x0 - dummy sync flag']
  #allocation12 [shape = 's32[]', space=sflag, size = 0x4, offset = 0, fixed_abs, tag = 'sflag constant byte address 0x0 - dummy sync flag']
  #allocation13 [shape = 's32[]', space=sflag, size = 0x4, offset = 0, fixed_abs, tag = 'sflag constant byte address 0x0 - dummy sync flag']
  #allocation14 [shape = 's32[]', space=sflag, size = 0x4, offset = 0, fixed_abs, tag = 'sflag constant byte address 0x0 - dummy sync flag']
  #allocation15 [shape = 's32[]', space=sflag, size = 0x4, offset = 0, fixed_abs, tag = 'sflag constant byte address 0x0 - dummy sync flag']
  #allocation16 [shape = 's32[]', space=sflag, size = 0x4, offset = 0, fixed_abs, tag = 'sflag constant byte address 0x0 - dummy sync flag']
  #allocation17 [shape = 's32[]', space=sflag, size = 0x4, offset = 0, fixed_abs, tag = 'sflag constant byte address 0x0 - dummy sync flag']
  #allocation18 [shape = 's32[]', space=sflag, size = 0x4, offset = 0, fixed_abs, tag = 'sflag constant byte address 0x0 - dummy sync flag']
  #allocation19 [shape = 's32[]', space=sflag, size = 0x4, offset = 0, fixed_abs, tag = 'sflag constant byte address 0x0 - dummy sync flag']
  #allocation20 [shape = 's32[]', space=sflag, size = 0x4, offset = 0, fixed_abs, tag = 'sflag constant byte address 0x0 - dummy sync flag']
  #allocation21 [shape = 's32[]', space=sflag, size = 0x4, offset = 0, fixed_abs, tag = 'sflag constant byte address 0x0 - dummy sync flag']
  #allocation22 [shape = 's32[]', space=sflag, size = 0x4, offset = 0, fixed_abs, tag = 'sflag constant byte address 0x0 - dummy sync flag']
  #allocation23 [shape = 's32[]', space=sflag, size = 0x4, offset = 0, fixed_abs, tag = 'sflag constant byte address 0x0 - dummy sync flag']
  #allocation24 [shape = 's32[]', space=sflag, size = 0x4, offset = 0, fixed_abs, tag = 'sflag constant byte address 0x0 - dummy sync flag']
  #allocation25 [shape = 's32[]', space=sflag, size = 0x4, offset = 0, fixed_abs, tag = 'sflag constant byte address 0x0 - dummy sync flag']
  %s0 = inlined_call_operand.vmem [shape: s32[2,9], index: 0, kind: input, shape index: {}]
  %s1 = inlined_call_operand.vmem [shape: s32[2,3,1], index: 1, kind: input, shape index: {}]
  %s2 = inlined_call_operand.vmem [shape: f32[7,32], index: 2, kind: input, shape index: {}]
  %s3 = inlined_call_operand.vmem [shape: f32[6,32,16], index: 3, kind: input, shape index: {}]
  %s4 = inlined_call_operand.vmem [shape: f32[6,16,16], index: 4, kind: input, shape index: {}]
  %s5 = inlined_call_operand.vmem [shape: f32[6,1,16], index: 5, kind: input, shape index: {}]
  %s6 = inlined_call_operand.vmem [shape: f32[6,1,16], index: 6, kind: input, shape index: {}]
  %s7 = inlined_call_operand.vmem [shape: f32[2,3,32], index: 7, kind: output, shape index: {0}]
  %s8 = inlined_call_operand.vmem [shape: f32[2,9,32], index: 8, kind: output, shape index: {1}]
  %9 = xla_tuple %s7, %s8
  %s10 = sld [smem:[#allocation0]]
  $region601: #{tpu_custom_call.1} parent=0
    _
  %s12 = ssub.s32 1, %s10
  %s13 = scalar_select 0, %s12, %s10
  %s14 = sshll.u32 %s0, 4
  %s15 = int_to_ptr.vmem [resolvable:$true] %s14
  %17 = dma.vmem_to_smem %s15, 32, [#allocation7], [#allocation6]
  %18 = dma.done [#allocation6], 32
  %19 = sfence
  loop: start=0, step=1, limit=4
  $region2: #{tpu_custom_call.1} parent=0 // loop_pre_header
    _
  $region3: #{tpu_custom_call.1} parent=0 // loop_header
    %s21 = sphi 0, %s25
    %p22 = scmp.ge.s32.totalorder %s21, 4
    %s31 = sphi 0, %s33
    %s34 = sphi 0, %s31
    %s35 = sphi 0, %s34
    %s51 = sphi 0, %s35
    %s55 = sphi 0, %s55
    %s57 = sphi 0, %s55
    %s58 = sphi 0, %s57
    %s72 = sphi 0, %s58
    %s76 = sphi 0, %s76
    %s78 = sphi 0, %s76
    %s79 = sphi 0, %s78
    %s93 = sphi 0, %s79
    %s97 = sphi 0, %s97
    %s99 = sphi 0, %s97
    %s100 = sphi 0, %s99
    %s114 = sphi 0, %s100
    %s118 = sphi 0, %s118
    %s120 = sphi 0, %s118
    %s121 = sphi 0, %s120
    %s135 = sphi 0, %s121
    %s141 = sphi 0, %s143
    %s144 = sphi 0, %s141
    %s145 = sphi 0, %s144
    %s161 = sphi 0, %s145
    %s167 = sphi 0, %s169
    %s170 = sphi 0, %s167
    %s171 = sphi 0, %s170
    %s187 = sphi 0, %s171
  $region4: #{tpu_custom_call.1} parent=0 // loop_header_branch
    %24 = sbr.rel (%p22) target = $region8
  $region5: #{tpu_custom_call.1} parent=0 // loop_body
    %s26 = ssub.s32 %s21, 1
    %s27 = ssub.s32 %s21, 2
    %s28 = sadd.s32 %s21, 1
    %s29 = ssub.s32 %s21, %s28
    %p30 = scmp.eq.s32.totalorder %s29, 0
    %s32 = sadd.s32 %s31, 1
    %s33 = scalar_select %p30, %s31, %s32
    %p36 = pneg %p30
    %p37 = scmp.eq.s32.totalorder %s21, 1
    %p38 = por %p36, %p37
    %p39 = scmp.ne.s32.totalorder %s31, %s34
    %p40 = scmp.eq.s32.totalorder %s21, 0
    %p41 = por %p39, %p40
    %p42 = scmp.ne.s32.totalorder %s31, %s34
    %p43 = scmp.eq.s32.totalorder %s26, 1
    %p44 = por %p42, %p43
    %p45 = scmp.ne.s32.totalorder %s34, %s35
    %p46 = scmp.eq.s32.totalorder %s26, 0
    %p47 = por %p45, %p46
    %p48 = scmp.ne.s32.totalorder %s34, %s35
    %p49 = scmp.eq.s32.totalorder %s27, 1
    %p50 = por %p48, %p49
    %p52 = scmp.ne.s32.totalorder %s35, %s51
    %p53 = scmp.eq.s32.totalorder %s27, 0
    %p54 = por %p52, %p53
    %s56 = sadd.s32 %s55, 1
    %p59 = scmp.eq.s32.totalorder %s21, 1
    %p60 = scmp.ne.s32.totalorder %s55, %s57
    %p61 = scmp.eq.s32.totalorder %s21, 0
    %p62 = por %p60, %p61
    %p63 = scmp.ne.s32.totalorder %s55, %s57
    %p64 = scmp.eq.s32.totalorder %s26, 1
    %p65 = por %p63, %p64
    %p66 = scmp.ne.s32.totalorder %s57, %s58
    %p67 = scmp.eq.s32.totalorder %s26, 0
    %p68 = por %p66, %p67
    %p69 = scmp.ne.s32.totalorder %s57, %s58
    %p70 = scmp.eq.s32.totalorder %s27, 1
    %p71 = por %p69, %p70
    %p73 = scmp.ne.s32.totalorder %s58, %s72
    %p74 = scmp.eq.s32.totalorder %s27, 0
    %p75 = por %p73, %p74
    %s77 = sadd.s32 %s76, 1
    %p80 = scmp.eq.s32.totalorder %s21, 1
    %p81 = scmp.ne.s32.totalorder %s76, %s78
    %p82 = scmp.eq.s32.totalorder %s21, 0
    %p83 = por %p81, %p82
    %p84 = scmp.ne.s32.totalorder %s76, %s78
    %p85 = scmp.eq.s32.totalorder %s26, 1
    %p86 = por %p84, %p85
    %p87 = scmp.ne.s32.totalorder %s78, %s79
    %p88 = scmp.eq.s32.totalorder %s26, 0
    %p89 = por %p87, %p88
    %p90 = scmp.ne.s32.totalorder %s78, %s79
    %p91 = scmp.eq.s32.totalorder %s27, 1
    %p92 = por %p90, %p91
    %p94 = scmp.ne.s32.totalorder %s79, %s93
    %p95 = scmp.eq.s32.totalorder %s27, 0
    %p96 = por %p94, %p95
    %s98 = sadd.s32 %s97, 1
    %p101 = scmp.eq.s32.totalorder %s21, 1
    %p102 = scmp.ne.s32.totalorder %s97, %s99
    %p103 = scmp.eq.s32.totalorder %s21, 0
    %p104 = por %p102, %p103
    %p105 = scmp.ne.s32.totalorder %s97, %s99
    %p106 = scmp.eq.s32.totalorder %s26, 1
    %p107 = por %p105, %p106
    %p108 = scmp.ne.s32.totalorder %s99, %s100
    %p109 = scmp.eq.s32.totalorder %s26, 0
    %p110 = por %p108, %p109
    %p111 = scmp.ne.s32.totalorder %s99, %s100
    %p112 = scmp.eq.s32.totalorder %s27, 1
    %p113 = por %p111, %p112
    %p115 = scmp.ne.s32.totalorder %s100, %s114
    %p116 = scmp.eq.s32.totalorder %s27, 0
    %p117 = por %p115, %p116
    %s119 = sadd.s32 %s118, 1
    %p122 = scmp.eq.s32.totalorder %s21, 1
    %p123 = scmp.ne.s32.totalorder %s118, %s120
    %p124 = scmp.eq.s32.totalorder %s21, 0
    %p125 = por %p123, %p124
    %p126 = scmp.ne.s32.totalorder %s118, %s120
    %p127 = scmp.eq.s32.totalorder %s26, 1
    %p128 = por %p126, %p127
    %p129 = scmp.ne.s32.totalorder %s120, %s121
    %p130 = scmp.eq.s32.totalorder %s26, 0
    %p131 = por %p129, %p130
    %p132 = scmp.ne.s32.totalorder %s120, %s121
    %p133 = scmp.eq.s32.totalorder %s27, 1
    %p134 = por %p132, %p133
    %p136 = scmp.ne.s32.totalorder %s121, %s135
    %p137 = scmp.eq.s32.totalorder %s27, 0
    %p138 = por %p136, %p137
    %s139 = ssub.s32 %s21, %s28
    %p140 = scmp.eq.s32.totalorder %s139, 0
    %s142 = sadd.s32 %s141, 1
    %s143 = scalar_select %p140, %s141, %s142
    %p146 = pneg %p140
    %p147 = scmp.eq.s32.totalorder %s21, 1
    %p148 = por %p146, %p147
    %p149 = scmp.ne.s32.totalorder %s141, %s144
    %p150 = scmp.eq.s32.totalorder %s21, 0
    %p151 = por %p149, %p150
    %p152 = scmp.ne.s32.totalorder %s141, %s144
    %p153 = scmp.eq.s32.totalorder %s26, 1
    %p154 = por %p152, %p153
    %p155 = scmp.ne.s32.totalorder %s144, %s145
    %p156 = scmp.eq.s32.totalorder %s26, 0
    %p157 = por %p155, %p156
    %p158 = scmp.ne.s32.totalorder %s144, %s145
    %p159 = scmp.eq.s32.totalorder %s27, 1
    %p160 = por %p158, %p159
    %p162 = scmp.ne.s32.totalorder %s145, %s161
    %p163 = scmp.eq.s32.totalorder %s27, 0
    %p164 = por %p162, %p163
    %s165 = ssub.s32 %s21, %s28
    %p166 = scmp.eq.s32.totalorder %s165, 0
    %s168 = sadd.s32 %s167, 1
    %s169 = scalar_select %p166, %s167, %s168
    %p172 = pneg %p166
    %p173 = scmp.eq.s32.totalorder %s21, 1
    %p174 = por %p172, %p173
    %p175 = scmp.ne.s32.totalorder %s167, %s170
    %p176 = scmp.eq.s32.totalorder %s21, 0
    %p177 = por %p175, %p176
    %p178 = scmp.ne.s32.totalorder %s167, %s170
    %p179 = scmp.eq.s32.totalorder %s26, 1
    %p180 = por %p178, %p179
    %p181 = scmp.ne.s32.totalorder %s170, %s171
    %p182 = scmp.eq.s32.totalorder %s26, 0
    %p183 = por %p181, %p182
    %p184 = scmp.ne.s32.totalorder %s170, %s171
    %p185 = scmp.eq.s32.totalorder %s27, 1
    %p186 = por %p184, %p185
    %p188 = scmp.ne.s32.totalorder %s171, %s187
    %p189 = scmp.eq.s32.totalorder %s27, 0
    %p190 = por %p188, %p189
    %p191 = scmp.le.s32.totalorder 1, %s21
    %p192 = scmp.lt.s32.totalorder %s21, 3
    %p193 = pnand %p191, %p192
    %p194 = pneg %p193
    // Predicated region
    $region9: #{tpu_custom_call.1} parent=5 // pred_check
      _
    $region10: #{tpu_custom_call.1} parent=5 // pred_check_branch
      %196 = sbr.rel (%p193) target = $region12
    $region11: #{tpu_custom_call.1} parent=5 // pred_region
      %s197 = ssub.s32 %s21, 1
      // Predicated region
      $region13: #{tpu_custom_call.1} parent=11 // pred_check
        %p198 = pneg %p68
      $region14: #{tpu_custom_call.1} parent=11 // pred_check_branch
        %200 = sbr.rel (%p198) target = $region16
      $region15: #{tpu_custom_call.1} parent=11 // pred_region
        _
      $region16: #{tpu_custom_call.1} parent=11 // pred_fallthru
        _
      // Predicated region
      $region17: #{tpu_custom_call.1} parent=11 // pred_check
        %p201 = pneg %p89
      $region18: #{tpu_custom_call.1} parent=11 // pred_check_branch
        %203 = sbr.rel (%p201) target = $region20
      $region19: #{tpu_custom_call.1} parent=11 // pred_region
        _
      $region20: #{tpu_custom_call.1} parent=11 // pred_fallthru
        _
      // Predicated region
      $region21: #{tpu_custom_call.1} parent=11 // pred_check
        %p204 = pneg %p110
      $region22: #{tpu_custom_call.1} parent=11 // pred_check_branch
        %206 = sbr.rel (%p204) target = $region24
      $region23: #{tpu_custom_call.1} parent=11 // pred_region
        _
      $region24: #{tpu_custom_call.1} parent=11 // pred_fallthru
        _
      // Predicated region
      $region25: #{tpu_custom_call.1} parent=11 // pred_check
        %p207 = pneg %p131
      $region26: #{tpu_custom_call.1} parent=11 // pred_check_branch
        %209 = sbr.rel (%p207) target = $region28
      $region27: #{tpu_custom_call.1} parent=11 // pred_region
        _
      $region28: #{tpu_custom_call.1} parent=11 // pred_fallthru
        _
    $region12: #{tpu_custom_call.1} parent=5 // pred_fallthru
      _
    %p210 = scmp.lt.s32.totalorder %s21, 2
    // Predicated region
    $region29: #{tpu_custom_call.1} parent=5 // pred_check
      %p211 = pneg %p210
    $region30: #{tpu_custom_call.1} parent=5 // pred_check_branch
      %213 = sbr.rel (%p211) target = $region32
    $region31: #{tpu_custom_call.1} parent=5 // pred_region
      // Predicated region
      $region33: #{tpu_custom_call.1} parent=31 // pred_check
        %p214 = pneg %p41
      $region34: #{tpu_custom_call.1} parent=31 // pred_check_branch
        %216 = sbr.rel (%p214) target = $region36
      $region35: #{tpu_custom_call.1} parent=31 // pred_region
        %p217 = scmp.lt.s32.totalorder %s21, 1
        %s218 = scalar_select %p217, %s21, 1
        %s219 = smul.addr %s218, 4
        %s220 = scalar_lea.vmem %s1, %s219
      $region36: #{tpu_custom_call.1} parent=31 // pred_fallthru
        _
    $region32: #{tpu_custom_call.1} parent=5 // pred_fallthru
      _
    %p221 = scmp.le.s32.totalorder 1, %s21
    %p222 = scmp.lt.s32.totalorder %s21, 3
    %p223 = pnand %p221, %p222
    %p224 = pneg %p223
    // Predicated region
    $region37: #{tpu_custom_call.1} parent=5 // pred_check
      _
    $region38: #{tpu_custom_call.1} parent=5 // pred_check_branch
      %226 = sbr.rel (%p223) target = $region40
    $region39: #{tpu_custom_call.1} parent=5 // pred_region
      %s227 = ssub.s32 %s21, 1
      %p228 = scmp.lt.s32.totalorder %s26, 1
      %s229 = scalar_select %p228, %s26, 1
      %s230 = smul.addr %s229, 4
      %s231 = scalar_lea.vmem %s1, %s230
      %p232 = pneg %p47
      %p233 = pneg %p44
      %p234 = pneg %p68
      %p235 = pneg %p65
      %p236 = pneg %p89
      %p237 = pneg %p86
      %p238 = pneg %p110
      %p239 = pneg %p107
      %p240 = pneg %p131
      %p241 = pneg %p128
      %p242 = pneg %p157
      %p243 = pneg %p154
      %p244 = scmp.lt.s32.totalorder %s26, 1
      %s245 = scalar_select %p244, %s26, 1
      %s246 = smul.addr %s245, 4
      %s247 = scalar_lea.vmem %s7, %s246
      %p248 = pneg %p183
      %p249 = pneg %p180
      %p250 = scmp.lt.s32.totalorder %s26, 1
      %s251 = scalar_select %p250, %s26, 1
      %s252 = smul.addr %s251, 2
      %s253 = smul.addr %s252, 8
      %s254 = scalar_lea.vmem %s8, %s253
      %p255 = scmp.lt.s32.totalorder %s26, 1
      %s256 = scalar_select %p255, %s26, 1
      %s257 = smul.addr %s256, 4
      %s258 = scalar_lea.vmem %s1, %s257
      %p259 = scmp.lt.s32.totalorder %s26, 1
      %s260 = scalar_select %p259, %s26, 1
      %s261 = smul.addr %s260, 4
      %s262 = scalar_lea.vmem %s7, %s261
      %p263 = scmp.lt.s32.totalorder %s26, 1
      %s264 = scalar_select %p263, %s26, 1
      %s265 = smul.addr %s264, 2
      %s266 = smul.addr %s265, 8
      %s267 = scalar_lea.vmem %s8, %s266
      %s268 = smul.u32 %s26, 128
      %s269 = sld [smem:[#allocation7 + %s268]]
      %s270 = scalar_lea.vmem %s2, %s269
      %p272 = scmp.lt.u32.totalorder 1, 8
      %p273 = pneg %p272
      // Predicated region
      $region41: #{tpu_custom_call.1} parent=39 // pred_check
        _
      $region42: #{tpu_custom_call.1} parent=39 // pred_check_branch
        %275 = sbr.rel (%p272) target = $region44
      $region43: #{tpu_custom_call.1} parent=39 // pred_region
        %s290 = sand.u32 1, 7
        %p291 = scmp.eq.s32.totalorder %s290, 0
        %p292 = pneg %p291
        // Predicated region
        $region56: #{tpu_custom_call.1} parent=43 // pred_check
          _
        $region57: #{tpu_custom_call.1} parent=43 // pred_check_branch
          %294 = sbr.rel (%p291) target = $region59
        $region58: #{tpu_custom_call.1} parent=43 // pred_region
          %s295 = sand.u32 1, 7
          %s296 = ssub.s32 1, %s295
          %s297 = scalar_lea.vmem %s270, %s296
          %s298 = ssub.s32 1, %s295
          %s299 = scalar_lea.vmem [#allocation2], %s298
          %s300 = sshllo.u32 0, %s295
          loop: start=0, step=1, limit=1
          $region60: #{tpu_custom_call.1} parent=58 // loop_pre_header
            _
          $region61: #{tpu_custom_call.1} parent=58 // loop_header
            %s302 = sphi 0, %s306
            %p303 = scmp.ge.s32.totalorder %s302, 1
            %s307 = sphi %s297, %s297
            %s308 = sphi %s299, %s299
          $region62: #{tpu_custom_call.1} parent=58 // loop_header_branch
            %305 = sbr.rel (%p303) target = $region66
          $region63: #{tpu_custom_call.1} parent=58 // loop_body
            %v309 = vld [vmem:[%s307] sm:%s300]
            %310 = vst [vmem:[%s308] sm:%s300] %v309
          $region64: #{tpu_custom_call.1} parent=58 // loop_footer
            %s306 = sadd.s32 1, %s302
          $region65: #{tpu_custom_call.1} parent=58 // loop_footer_branch
            %301 = sbr.rel target = $region61
          $region66: #{tpu_custom_call.1} parent=58 // loop_exit
            _
        $region59: #{tpu_custom_call.1} parent=43 // pred_fallthru
          _
      $region44: #{tpu_custom_call.1} parent=39 // pred_fallthru
        _
      // Predicated region
      $region45: #{tpu_custom_call.1} parent=39 // pred_check
        %p276 = pneg %p272
      $region46: #{tpu_custom_call.1} parent=39 // pred_check_branch
        %278 = sbr.rel (%p276) target = $region48
      $region47: #{tpu_custom_call.1} parent=39 // pred_region
        %s279 = sshllo.u32 0, 1
        loop: start=0, step=1, limit=1
        $region49: #{tpu_custom_call.1} parent=47 // loop_pre_header
          _
        $region50: #{tpu_custom_call.1} parent=47 // loop_header
          %s281 = sphi 0, %s285
          %p282 = scmp.ge.s32.totalorder %s281, 1
          %s286 = sphi %s270, %s270
          %s287 = sphi [#allocation2], [#allocation2]
        $region51: #{tpu_custom_call.1} parent=47 // loop_header_branch
          %284 = sbr.rel (%p282) target = $region55
        $region52: #{tpu_custom_call.1} parent=47 // loop_body
          %v288 = vld [vmem:[%s286] sm:%s279]
          %289 = vst [vmem:[%s287] sm:%s279] %v288
        $region53: #{tpu_custom_call.1} parent=47 // loop_footer
          %s285 = sadd.s32 1, %s281
        $region54: #{tpu_custom_call.1} parent=47 // loop_footer_branch
          %280 = sbr.rel target = $region50
        $region55: #{tpu_custom_call.1} parent=47 // loop_exit
          _
      $region48: #{tpu_custom_call.1} parent=39 // pred_fallthru
        _
      // Predicated region
      $region67: #{tpu_custom_call.1} parent=39 // pred_check
        _
      $region68: #{tpu_custom_call.1} parent=39 // pred_check_branch
        %313 = sbr.rel (0) target = $region70
      $region69: #{tpu_custom_call.1} parent=39 // pred_region
        %314 = vsyncadd [#allocation4], 16
      $region70: #{tpu_custom_call.1} parent=39 // pred_fallthru
        _
      %p316 = scmp.lt.u32.totalorder 1, 8
      %p317 = pneg %p316
      // Predicated region
      $region71: #{tpu_custom_call.1} parent=39 // pred_check
        _
      $region72: #{tpu_custom_call.1} parent=39 // pred_check_branch
        %319 = sbr.rel (%p316) target = $region74
      $region73: #{tpu_custom_call.1} parent=39 // pred_region
        %s334 = sand.u32 1, 7
        %p335 = scmp.eq.s32.totalorder %s334, 0
        %p336 = pneg %p335
        // Predicated region
        $region86: #{tpu_custom_call.1} parent=73 // pred_check
          _
        $region87: #{tpu_custom_call.1} parent=73 // pred_check_branch
          %338 = sbr.rel (%p335) target = $region89
        $region88: #{tpu_custom_call.1} parent=73 // pred_region
          %s339 = sand.u32 1, 7
          %s340 = ssub.s32 1, %s339
          %s341 = scalar_lea.vmem %s270, %s340
          %s342 = ssub.s32 1, %s339
          %s343 = scalar_lea.vmem [#allocation3], %s342
          %s344 = sshllo.u32 0, %s339
          loop: start=0, step=1, limit=1
          $region90: #{tpu_custom_call.1} parent=88 // loop_pre_header
            _
          $region91: #{tpu_custom_call.1} parent=88 // loop_header
            %s346 = sphi 0, %s350
            %p347 = scmp.ge.s32.totalorder %s346, 1
            %s351 = sphi %s341, %s341
            %s352 = sphi %s343, %s343
          $region92: #{tpu_custom_call.1} parent=88 // loop_header_branch
            %349 = sbr.rel (%p347) target = $region96
          $region93: #{tpu_custom_call.1} parent=88 // loop_body
            %v353 = vld [vmem:[%s351] sm:%s344]
            %354 = vst [vmem:[%s352] sm:%s344] %v353
          $region94: #{tpu_custom_call.1} parent=88 // loop_footer
            %s350 = sadd.s32 1, %s346
          $region95: #{tpu_custom_call.1} parent=88 // loop_footer_branch
            %345 = sbr.rel target = $region91
          $region96: #{tpu_custom_call.1} parent=88 // loop_exit
            _
        $region89: #{tpu_custom_call.1} parent=73 // pred_fallthru
          _
      $region74: #{tpu_custom_call.1} parent=39 // pred_fallthru
        _
      // Predicated region
      $region75: #{tpu_custom_call.1} parent=39 // pred_check
        %p320 = pneg %p316
      $region76: #{tpu_custom_call.1} parent=39 // pred_check_branch
        %322 = sbr.rel (%p320) target = $region78
      $region77: #{tpu_custom_call.1} parent=39 // pred_region
        %s323 = sshllo.u32 0, 1
        loop: start=0, step=1, limit=1
        $region79: #{tpu_custom_call.1} parent=77 // loop_pre_header
          _
        $region80: #{tpu_custom_call.1} parent=77 // loop_header
          %s325 = sphi 0, %s329
          %p326 = scmp.ge.s32.totalorder %s325, 1
          %s330 = sphi %s270, %s270
          %s331 = sphi [#allocation3], [#allocation3]
        $region81: #{tpu_custom_call.1} parent=77 // loop_header_branch
          %328 = sbr.rel (%p326) target = $region85
        $region82: #{tpu_custom_call.1} parent=77 // loop_body
          %v332 = vld [vmem:[%s330] sm:%s323]
          %333 = vst [vmem:[%s331] sm:%s323] %v332
        $region83: #{tpu_custom_call.1} parent=77 // loop_footer
          %s329 = sadd.s32 1, %s325
        $region84: #{tpu_custom_call.1} parent=77 // loop_footer_branch
          %324 = sbr.rel target = $region80
        $region85: #{tpu_custom_call.1} parent=77 // loop_exit
          _
      $region78: #{tpu_custom_call.1} parent=39 // pred_fallthru
        _
      // Predicated region
      $region97: #{tpu_custom_call.1} parent=39 // pred_check
        _
      $region98: #{tpu_custom_call.1} parent=39 // pred_check_branch
        %357 = sbr.rel (0) target = $region100
      $region99: #{tpu_custom_call.1} parent=39 // pred_region
        %358 = vsyncadd [#allocation5], 16
      $region100: #{tpu_custom_call.1} parent=39 // pred_fallthru
        _
      %s359 = sadd.s32 %s268, 1
      %s360 = sld [smem:[#allocation7 + %s359]]
      %s361 = scalar_lea.vmem %s2, %s360
      %s362 = scalar_lea.vmem [#allocation2], 3
      %s363 = scalar_lea.sflag [#allocation4], 1
      %p365 = scmp.lt.u32.totalorder 1, 8
      %p366 = pneg %p365
      // Predicated region
      $region101: #{tpu_custom_call.1} parent=39 // pred_check
        _
      $region102: #{tpu_custom_call.1} parent=39 // pred_check_branch
        %368 = sbr.rel (%p365) target = $region104
      $region103: #{tpu_custom_call.1} parent=39 // pred_region
        %s383 = sand.u32 1, 7
        %p384 = scmp.eq.s32.totalorder %s383, 0
        %p385 = pneg %p384
        // Predicated region
        $region116: #{tpu_custom_call.1} parent=103 // pred_check
          _
        $region117: #{tpu_custom_call.1} parent=103 // pred_check_branch
          %387 = sbr.rel (%p384) target = $region119
        $region118: #{tpu_custom_call.1} parent=103 // pred_region
          %s388 = sand.u32 1, 7
          %s389 = ssub.s32 1, %s388
          %s390 = scalar_lea.vmem %s361, %s389
          %s391 = ssub.s32 1, %s388
          %s392 = scalar_lea.vmem %s362, %s391 [#allocation2]
          %s393 = sshllo.u32 0, %s388
          loop: start=0, step=1, limit=1
          $region120: #{tpu_custom_call.1} parent=118 // loop_pre_header
            _
          $region121: #{tpu_custom_call.1} parent=118 // loop_header
            %s395 = sphi 0, %s399
            %p396 = scmp.ge.s32.totalorder %s395, 1
            %s400 = sphi %s390, %s390
            %s401 = sphi %s392, %s392
          $region122: #{tpu_custom_call.1} parent=118 // loop_header_branch
            %398 = sbr.rel (%p396) target = $region126
          $region123: #{tpu_custom_call.1} parent=118 // loop_body
            %v402 = vld [vmem:[%s400] sm:%s393]
            %403 = vst [vmem:[%s401] sm:%s393] %v402
          $region124: #{tpu_custom_call.1} parent=118 // loop_footer
            %s399 = sadd.s32 1, %s395
          $region125: #{tpu_custom_call.1} parent=118 // loop_footer_branch
            %394 = sbr.rel target = $region121
          $region126: #{tpu_custom_call.1} parent=118 // loop_exit
            _
        $region119: #{tpu_custom_call.1} parent=103 // pred_fallthru
          _
      $region104: #{tpu_custom_call.1} parent=39 // pred_fallthru
        _
      // Predicated region
      $region105: #{tpu_custom_call.1} parent=39 // pred_check
        %p369 = pneg %p365
      $region106: #{tpu_custom_call.1} parent=39 // pred_check_branch
        %371 = sbr.rel (%p369) target = $region108
      $region107: #{tpu_custom_call.1} parent=39 // pred_region
        %s372 = sshllo.u32 0, 1
        loop: start=0, step=1, limit=1
        $region109: #{tpu_custom_call.1} parent=107 // loop_pre_header
          _
        $region110: #{tpu_custom_call.1} parent=107 // loop_header
          %s374 = sphi 0, %s378
          %p375 = scmp.ge.s32.totalorder %s374, 1
          %s379 = sphi %s361, %s361
          %s380 = sphi %s362, %s362
        $region111: #{tpu_custom_call.1} parent=107 // loop_header_branch
          %377 = sbr.rel (%p375) target = $region115
        $region112: #{tpu_custom_call.1} parent=107 // loop_body
          %v381 = vld [vmem:[%s379] sm:%s372]
          %382 = vst [vmem:[%s380] sm:%s372] %v381
        $region113: #{tpu_custom_call.1} parent=107 // loop_footer
          %s378 = sadd.s32 1, %s374
        $region114: #{tpu_custom_call.1} parent=107 // loop_footer_branch
          %373 = sbr.rel target = $region110
        $region115: #{tpu_custom_call.1} parent=107 // loop_exit
          _
      $region108: #{tpu_custom_call.1} parent=39 // pred_fallthru
        _
      // Predicated region
      $region127: #{tpu_custom_call.1} parent=39 // pred_check
        _
      $region128: #{tpu_custom_call.1} parent=39 // pred_check_branch
        %406 = sbr.rel (0) target = $region130
      $region129: #{tpu_custom_call.1} parent=39 // pred_region
        %407 = vsyncadd %s363, 16
      $region130: #{tpu_custom_call.1} parent=39 // pred_fallthru
        _
      %s408 = scalar_lea.vmem [#allocation3], 1
      %s409 = scalar_lea.sflag [#allocation5], 1
      %p411 = scmp.lt.u32.totalorder 1, 8
      %p412 = pneg %p411
      // Predicated region
      $region131: #{tpu_custom_call.1} parent=39 // pred_check
        _
      $region132: #{tpu_custom_call.1} parent=39 // pred_check_branch
        %414 = sbr.rel (%p411) target = $region134
      $region133: #{tpu_custom_call.1} parent=39 // pred_region
        %s429 = sand.u32 1, 7
        %p430 = scmp.eq.s32.totalorder %s429, 0
        %p431 = pneg %p430
        // Predicated region
        $region146: #{tpu_custom_call.1} parent=133 // pred_check
          _
        $region147: #{tpu_custom_call.1} parent=133 // pred_check_branch
          %433 = sbr.rel (%p430) target = $region149
        $region148: #{tpu_custom_call.1} parent=133 // pred_region
          %s434 = sand.u32 1, 7
          %s435 = ssub.s32 1, %s434
          %s436 = scalar_lea.vmem %s361, %s435
          %s437 = ssub.s32 1, %s434
          %s438 = scalar_lea.vmem %s408, %s437 [#allocation3]
          %s439 = sshllo.u32 0, %s434
          loop: start=0, step=1, limit=1
          $region150: #{tpu_custom_call.1} parent=148 // loop_pre_header
            _
          $region151: #{tpu_custom_call.1} parent=148 // loop_header
            %s441 = sphi 0, %s445
            %p442 = scmp.ge.s32.totalorder %s441, 1
            %s446 = sphi %s436, %s436
            %s447 = sphi %s438, %s438
          $region152: #{tpu_custom_call.1} parent=148 // loop_header_branch
            %444 = sbr.rel (%p442) target = $region156
          $region153: #{tpu_custom_call.1} parent=148 // loop_body
            %v448 = vld [vmem:[%s446] sm:%s439]
            %449 = vst [vmem:[%s447] sm:%s439] %v448
          $region154: #{tpu_custom_call.1} parent=148 // loop_footer
            %s445 = sadd.s32 1, %s441
          $region155: #{tpu_custom_call.1} parent=148 // loop_footer_branch
            %440 = sbr.rel target = $region151
          $region156: #{tpu_custom_call.1} parent=148 // loop_exit
            _
        $region149: #{tpu_custom_call.1} parent=133 // pred_fallthru
          _
      $region134: #{tpu_custom_call.1} parent=39 // pred_fallthru
        _
      // Predicated region
      $region135: #{tpu_custom_call.1} parent=39 // pred_check
        %p415 = pneg %p411
      $region136: #{tpu_custom_call.1} parent=39 // pred_check_branch
        %417 = sbr.rel (%p415) target = $region138
      $region137: #{tpu_custom_call.1} parent=39 // pred_region
        %s418 = sshllo.u32 0, 1
        loop: start=0, step=1, limit=1
        $region139: #{tpu_custom_call.1} parent=137 // loop_pre_header
          _
        $region140: #{tpu_custom_call.1} parent=137 // loop_header
          %s420 = sphi 0, %s424
          %p421 = scmp.ge.s32.totalorder %s420, 1
          %s425 = sphi %s361, %s361
          %s426 = sphi %s408, %s408
        $region141: #{tpu_custom_call.1} parent=137 // loop_header_branch
          %423 = sbr.rel (%p421) target = $region145
        $region142: #{tpu_custom_call.1} parent=137 // loop_body
          %v427 = vld [vmem:[%s425] sm:%s418]
          %428 = vst [vmem:[%s426] sm:%s418] %v427
        $region143: #{tpu_custom_call.1} parent=137 // loop_footer
          %s424 = sadd.s32 1, %s420
        $region144: #{tpu_custom_call.1} parent=137 // loop_footer_branch
          %419 = sbr.rel target = $region140
        $region145: #{tpu_custom_call.1} parent=137 // loop_exit
          _
      $region138: #{tpu_custom_call.1} parent=39 // pred_fallthru
        _
      // Predicated region
      $region157: #{tpu_custom_call.1} parent=39 // pred_check
        _
      $region158: #{tpu_custom_call.1} parent=39 // pred_check_branch
        %452 = sbr.rel (0) target = $region160
      $region159: #{tpu_custom_call.1} parent=39 // pred_region
        %453 = vsyncadd %s409, 16
      $region160: #{tpu_custom_call.1} parent=39 // pred_fallthru
        _
      %s454 = sadd.s32 %s268, 2
      %s455 = sld [smem:[#allocation7 + %s454]]
      %s456 = scalar_lea.vmem %s2, %s455
      %s457 = scalar_lea.vmem [#allocation2], 6
      %s458 = scalar_lea.sflag [#allocation4], 2
      %p460 = scmp.lt.u32.totalorder 1, 8
      %p461 = pneg %p460
      // Predicated region
      $region161: #{tpu_custom_call.1} parent=39 // pred_check
        _
      $region162: #{tpu_custom_call.1} parent=39 // pred_check_branch
        %463 = sbr.rel (%p460) target = $region164
      $region163: #{tpu_custom_call.1} parent=39 // pred_region
        %s478 = sand.u32 1, 7
        %p479 = scmp.eq.s32.totalorder %s478, 0
        %p480 = pneg %p479
        // Predicated region
        $region176: #{tpu_custom_call.1} parent=163 // pred_check
          _
        $region177: #{tpu_custom_call.1} parent=163 // pred_check_branch
          %482 = sbr.rel (%p479) target = $region179
        $region178: #{tpu_custom_call.1} parent=163 // pred_region
          %s483 = sand.u32 1, 7
          %s484 = ssub.s32 1, %s483
          %s485 = scalar_lea.vmem %s456, %s484
          %s486 = ssub.s32 1, %s483
          %s487 = scalar_lea.vmem %s457, %s486 [#allocation2]
          %s488 = sshllo.u32 0, %s483
          loop: start=0, step=1, limit=1
          $region180: #{tpu_custom_call.1} parent=178 // loop_pre_header
            _
          $region181: #{tpu_custom_call.1} parent=178 // loop_header
            %s490 = sphi 0, %s494
            %p491 = scmp.ge.s32.totalorder %s490, 1
            %s495 = sphi %s485, %s485
            %s496 = sphi %s487, %s487
          $region182: #{tpu_custom_call.1} parent=178 // loop_header_branch
            %493 = sbr.rel (%p491) target = $region186
          $region183: #{tpu_custom_call.1} parent=178 // loop_body
            %v497 = vld [vmem:[%s495] sm:%s488]
            %498 = vst [vmem:[%s496] sm:%s488] %v497
          $region184: #{tpu_custom_call.1} parent=178 // loop_footer
            %s494 = sadd.s32 1, %s490
          $region185: #{tpu_custom_call.1} parent=178 // loop_footer_branch
            %489 = sbr.rel target = $region181
          $region186: #{tpu_custom_call.1} parent=178 // loop_exit
            _
        $region179: #{tpu_custom_call.1} parent=163 // pred_fallthru
          _
      $region164: #{tpu_custom_call.1} parent=39 // pred_fallthru
        _
      // Predicated region
      $region165: #{tpu_custom_call.1} parent=39 // pred_check
        %p464 = pneg %p460
      $region166: #{tpu_custom_call.1} parent=39 // pred_check_branch
        %466 = sbr.rel (%p464) target = $region168
      $region167: #{tpu_custom_call.1} parent=39 // pred_region
        %s467 = sshllo.u32 0, 1
        loop: start=0, step=1, limit=1
        $region169: #{tpu_custom_call.1} parent=167 // loop_pre_header
          _
        $region170: #{tpu_custom_call.1} parent=167 // loop_header
          %s469 = sphi 0, %s473
          %p470 = scmp.ge.s32.totalorder %s469, 1
          %s474 = sphi %s456, %s456
          %s475 = sphi %s457, %s457
        $region171: #{tpu_custom_call.1} parent=167 // loop_header_branch
          %472 = sbr.rel (%p470) target = $region175
        $region172: #{tpu_custom_call.1} parent=167 // loop_body
          %v476 = vld [vmem:[%s474] sm:%s467]
          %477 = vst [vmem:[%s475] sm:%s467] %v476
        $region173: #{tpu_custom_call.1} parent=167 // loop_footer
          %s473 = sadd.s32 1, %s469
        $region174: #{tpu_custom_call.1} parent=167 // loop_footer_branch
          %468 = sbr.rel target = $region170
        $region175: #{tpu_custom_call.1} parent=167 // loop_exit
          _
      $region168: #{tpu_custom_call.1} parent=39 // pred_fallthru
        _
      // Predicated region
      $region187: #{tpu_custom_call.1} parent=39 // pred_check
        _
      $region188: #{tpu_custom_call.1} parent=39 // pred_check_branch
        %501 = sbr.rel (0) target = $region190
      $region189: #{tpu_custom_call.1} parent=39 // pred_region
        %502 = vsyncadd %s458, 16
      $region190: #{tpu_custom_call.1} parent=39 // pred_fallthru
        _
      %s503 = scalar_lea.vmem [#allocation3], 2
      %s504 = scalar_lea.sflag [#allocation5], 2
      %p506 = scmp.lt.u32.totalorder 1, 8
      %p507 = pneg %p506
      // Predicated region
      $region191: #{tpu_custom_call.1} parent=39 // pred_check
        _
      $region192: #{tpu_custom_call.1} parent=39 // pred_check_branch
        %509 = sbr.rel (%p506) target = $region194
      $region193: #{tpu_custom_call.1} parent=39 // pred_region
        %s524 = sand.u32 1, 7
        %p525 = scmp.eq.s32.totalorder %s524, 0
        %p526 = pneg %p525
        // Predicated region
        $region206: #{tpu_custom_call.1} parent=193 // pred_check
          _
        $region207: #{tpu_custom_call.1} parent=193 // pred_check_branch
          %528 = sbr.rel (%p525) target = $region209
        $region208: #{tpu_custom_call.1} parent=193 // pred_region
          %s529 = sand.u32 1, 7
          %s530 = ssub.s32 1, %s529
          %s531 = scalar_lea.vmem %s456, %s530
          %s532 = ssub.s32 1, %s529
          %s533 = scalar_lea.vmem %s503, %s532 [#allocation3]
          %s534 = sshllo.u32 0, %s529
          loop: start=0, step=1, limit=1
          $region210: #{tpu_custom_call.1} parent=208 // loop_pre_header
            _
          $region211: #{tpu_custom_call.1} parent=208 // loop_header
            %s536 = sphi 0, %s540
            %p537 = scmp.ge.s32.totalorder %s536, 1
            %s541 = sphi %s531, %s531
            %s542 = sphi %s533, %s533
          $region212: #{tpu_custom_call.1} parent=208 // loop_header_branch
            %539 = sbr.rel (%p537) target = $region216
          $region213: #{tpu_custom_call.1} parent=208 // loop_body
            %v543 = vld [vmem:[%s541] sm:%s534]
            %544 = vst [vmem:[%s542] sm:%s534] %v543
          $region214: #{tpu_custom_call.1} parent=208 // loop_footer
            %s540 = sadd.s32 1, %s536
          $region215: #{tpu_custom_call.1} parent=208 // loop_footer_branch
            %535 = sbr.rel target = $region211
          $region216: #{tpu_custom_call.1} parent=208 // loop_exit
            _
        $region209: #{tpu_custom_call.1} parent=193 // pred_fallthru
          _
      $region194: #{tpu_custom_call.1} parent=39 // pred_fallthru
        _
      // Predicated region
      $region195: #{tpu_custom_call.1} parent=39 // pred_check
        %p510 = pneg %p506
      $region196: #{tpu_custom_call.1} parent=39 // pred_check_branch
        %512 = sbr.rel (%p510) target = $region198
      $region197: #{tpu_custom_call.1} parent=39 // pred_region
        %s513 = sshllo.u32 0, 1
        loop: start=0, step=1, limit=1
        $region199: #{tpu_custom_call.1} parent=197 // loop_pre_header
          _
        $region200: #{tpu_custom_call.1} parent=197 // loop_header
          %s515 = sphi 0, %s519
          %p516 = scmp.ge.s32.totalorder %s515, 1
          %s520 = sphi %s456, %s456
          %s521 = sphi %s503, %s503
        $region201: #{tpu_custom_call.1} parent=197 // loop_header_branch
          %518 = sbr.rel (%p516) target = $region205
        $region202: #{tpu_custom_call.1} parent=197 // loop_body
          %v522 = vld [vmem:[%s520] sm:%s513]
          %523 = vst [vmem:[%s521] sm:%s513] %v522
        $region203: #{tpu_custom_call.1} parent=197 // loop_footer
          %s519 = sadd.s32 1, %s515
        $region204: #{tpu_custom_call.1} parent=197 // loop_footer_branch
          %514 = sbr.rel target = $region200
        $region205: #{tpu_custom_call.1} parent=197 // loop_exit
          _
      $region198: #{tpu_custom_call.1} parent=39 // pred_fallthru
        _
      // Predicated region
      $region217: #{tpu_custom_call.1} parent=39 // pred_check
        _
      $region218: #{tpu_custom_call.1} parent=39 // pred_check_branch
        %547 = sbr.rel (0) target = $region220
      $region219: #{tpu_custom_call.1} parent=39 // pred_region
        %548 = vsyncadd %s504, 16
      $region220: #{tpu_custom_call.1} parent=39 // pred_fallthru
        _
      %s549 = sadd.s32 %s268, 3
      %s550 = sld [smem:[#allocation7 + %s549]]
      %s551 = scalar_lea.vmem %s2, %s550
      %s552 = scalar_lea.vmem [#allocation2], 1
      %s553 = scalar_lea.sflag [#allocation4], 3
      %p555 = scmp.lt.u32.totalorder 1, 8
      %p556 = pneg %p555
      // Predicated region
      $region221: #{tpu_custom_call.1} parent=39 // pred_check
        _
      $region222: #{tpu_custom_call.1} parent=39 // pred_check_branch
        %558 = sbr.rel (%p555) target = $region224
      $region223: #{tpu_custom_call.1} parent=39 // pred_region
        %s573 = sand.u32 1, 7
        %p574 = scmp.eq.s32.totalorder %s573, 0
        %p575 = pneg %p574
        // Predicated region
        $region236: #{tpu_custom_call.1} parent=223 // pred_check
          _
        $region237: #{tpu_custom_call.1} parent=223 // pred_check_branch
          %577 = sbr.rel (%p574) target = $region239
        $region238: #{tpu_custom_call.1} parent=223 // pred_region
          %s578 = sand.u32 1, 7
          %s579 = ssub.s32 1, %s578
          %s580 = scalar_lea.vmem %s551, %s579
          %s581 = ssub.s32 1, %s578
          %s582 = scalar_lea.vmem %s552, %s581 [#allocation2]
          %s583 = sshllo.u32 0, %s578
          loop: start=0, step=1, limit=1
          $region240: #{tpu_custom_call.1} parent=238 // loop_pre_header
            _
          $region241: #{tpu_custom_call.1} parent=238 // loop_header
            %s585 = sphi 0, %s589
            %p586 = scmp.ge.s32.totalorder %s585, 1
            %s590 = sphi %s580, %s580
            %s591 = sphi %s582, %s582
          $region242: #{tpu_custom_call.1} parent=238 // loop_header_branch
            %588 = sbr.rel (%p586) target = $region246
          $region243: #{tpu_custom_call.1} parent=238 // loop_body
            %v592 = vld [vmem:[%s590] sm:%s583]
            %593 = vst [vmem:[%s591] sm:%s583] %v592
          $region244: #{tpu_custom_call.1} parent=238 // loop_footer
            %s589 = sadd.s32 1, %s585
          $region245: #{tpu_custom_call.1} parent=238 // loop_footer_branch
            %584 = sbr.rel target = $region241
          $region246: #{tpu_custom_call.1} parent=238 // loop_exit
            _
        $region239: #{tpu_custom_call.1} parent=223 // pred_fallthru
          _
      $region224: #{tpu_custom_call.1} parent=39 // pred_fallthru
        _
      // Predicated region
      $region225: #{tpu_custom_call.1} parent=39 // pred_check
        %p559 = pneg %p555
      $region226: #{tpu_custom_call.1} parent=39 // pred_check_branch
        %561 = sbr.rel (%p559) target = $region228
      $region227: #{tpu_custom_call.1} parent=39 // pred_region
        %s562 = sshllo.u32 0, 1
        loop: start=0, step=1, limit=1
        $region229: #{tpu_custom_call.1} parent=227 // loop_pre_header
          _
        $region230: #{tpu_custom_call.1} parent=227 // loop_header
          %s564 = sphi 0, %s568
          %p565 = scmp.ge.s32.totalorder %s564, 1
          %s569 = sphi %s551, %s551
          %s570 = sphi %s552, %s552
        $region231: #{tpu_custom_call.1} parent=227 // loop_header_branch
          %567 = sbr.rel (%p565) target = $region235
        $region232: #{tpu_custom_call.1} parent=227 // loop_body
          %v571 = vld [vmem:[%s569] sm:%s562]
          %572 = vst [vmem:[%s570] sm:%s562] %v571
        $region233: #{tpu_custom_call.1} parent=227 // loop_footer
          %s568 = sadd.s32 1, %s564
        $region234: #{tpu_custom_call.1} parent=227 // loop_footer_branch
          %563 = sbr.rel target = $region230
        $region235: #{tpu_custom_call.1} parent=227 // loop_exit
          _
      $region228: #{tpu_custom_call.1} parent=39 // pred_fallthru
        _
      // Predicated region
      $region247: #{tpu_custom_call.1} parent=39 // pred_check
        _
      $region248: #{tpu_custom_call.1} parent=39 // pred_check_branch
        %596 = sbr.rel (0) target = $region250
      $region249: #{tpu_custom_call.1} parent=39 // pred_region
        %597 = vsyncadd %s553, 16
      $region250: #{tpu_custom_call.1} parent=39 // pred_fallthru
        _
      %s598 = scalar_lea.vmem [#allocation3], 3
      %s599 = scalar_lea.sflag [#allocation5], 3
      %p601 = scmp.lt.u32.totalorder 1, 8
      %p602 = pneg %p601
      // Predicated region
      $region251: #{tpu_custom_call.1} parent=39 // pred_check
        _
      $region252: #{tpu_custom_call.1} parent=39 // pred_check_branch
        %604 = sbr.rel (%p601) target = $region254
      $region253: #{tpu_custom_call.1} parent=39 // pred_region
        %s619 = sand.u32 1, 7
        %p620 = scmp.eq.s32.totalorder %s619, 0
        %p621 = pneg %p620
        // Predicated region
        $region266: #{tpu_custom_call.1} parent=253 // pred_check
          _
        $region267: #{tpu_custom_call.1} parent=253 // pred_check_branch
          %623 = sbr.rel (%p620) target = $region269
        $region268: #{tpu_custom_call.1} parent=253 // pred_region
          %s624 = sand.u32 1, 7
          %s625 = ssub.s32 1, %s624
          %s626 = scalar_lea.vmem %s551, %s625
          %s627 = ssub.s32 1, %s624
          %s628 = scalar_lea.vmem %s598, %s627 [#allocation3]
          %s629 = sshllo.u32 0, %s624
          loop: start=0, step=1, limit=1
          $region270: #{tpu_custom_call.1} parent=268 // loop_pre_header
            _
          $region271: #{tpu_custom_call.1} parent=268 // loop_header
            %s631 = sphi 0, %s635
            %p632 = scmp.ge.s32.totalorder %s631, 1
            %s636 = sphi %s626, %s626
            %s637 = sphi %s628, %s628
          $region272: #{tpu_custom_call.1} parent=268 // loop_header_branch
            %634 = sbr.rel (%p632) target = $region276
          $region273: #{tpu_custom_call.1} parent=268 // loop_body
            %v638 = vld [vmem:[%s636] sm:%s629]
            %639 = vst [vmem:[%s637] sm:%s629] %v638
          $region274: #{tpu_custom_call.1} parent=268 // loop_footer
            %s635 = sadd.s32 1, %s631
          $region275: #{tpu_custom_call.1} parent=268 // loop_footer_branch
            %630 = sbr.rel target = $region271
          $region276: #{tpu_custom_call.1} parent=268 // loop_exit
            _
        $region269: #{tpu_custom_call.1} parent=253 // pred_fallthru
          _
      $region254: #{tpu_custom_call.1} parent=39 // pred_fallthru
        _
      // Predicated region
      $region255: #{tpu_custom_call.1} parent=39 // pred_check
        %p605 = pneg %p601
      $region256: #{tpu_custom_call.1} parent=39 // pred_check_branch
        %607 = sbr.rel (%p605) target = $region258
      $region257: #{tpu_custom_call.1} parent=39 // pred_region
        %s608 = sshllo.u32 0, 1
        loop: start=0, step=1, limit=1
        $region259: #{tpu_custom_call.1} parent=257 // loop_pre_header
          _
        $region260: #{tpu_custom_call.1} parent=257 // loop_header
          %s610 = sphi 0, %s614
          %p611 = scmp.ge.s32.totalorder %s610, 1
          %s615 = sphi %s551, %s551
          %s616 = sphi %s598, %s598
        $region261: #{tpu_custom_call.1} parent=257 // loop_header_branch
          %613 = sbr.rel (%p611) target = $region265
        $region262: #{tpu_custom_call.1} parent=257 // loop_body
          %v617 = vld [vmem:[%s615] sm:%s608]
          %618 = vst [vmem:[%s616] sm:%s608] %v617
        $region263: #{tpu_custom_call.1} parent=257 // loop_footer
          %s614 = sadd.s32 1, %s610
        $region264: #{tpu_custom_call.1} parent=257 // loop_footer_branch
          %609 = sbr.rel target = $region260
        $region265: #{tpu_custom_call.1} parent=257 // loop_exit
          _
      $region258: #{tpu_custom_call.1} parent=39 // pred_fallthru
        _
      // Predicated region
      $region277: #{tpu_custom_call.1} parent=39 // pred_check
        _
      $region278: #{tpu_custom_call.1} parent=39 // pred_check_branch
        %642 = sbr.rel (0) target = $region280
      $region279: #{tpu_custom_call.1} parent=39 // pred_region
        %643 = vsyncadd %s599, 16
      $region280: #{tpu_custom_call.1} parent=39 // pred_fallthru
        _
      %s644 = sadd.s32 %s268, 4
      %s645 = sld [smem:[#allocation7 + %s644]]
      %s646 = scalar_lea.vmem %s2, %s645
      %s647 = scalar_lea.vmem [#allocation2], 4
      %s648 = scalar_lea.sflag [#allocation4], 4
      %p650 = scmp.lt.u32.totalorder 1, 8
      %p651 = pneg %p650
      // Predicated region
      $region281: #{tpu_custom_call.1} parent=39 // pred_check
        _
      $region282: #{tpu_custom_call.1} parent=39 // pred_check_branch
        %653 = sbr.rel (%p650) target = $region284
      $region283: #{tpu_custom_call.1} parent=39 // pred_region
        %s668 = sand.u32 1, 7
        %p669 = scmp.eq.s32.totalorder %s668, 0
        %p670 = pneg %p669
        // Predicated region
        $region296: #{tpu_custom_call.1} parent=283 // pred_check
          _
        $region297: #{tpu_custom_call.1} parent=283 // pred_check_branch
          %672 = sbr.rel (%p669) target = $region299
        $region298: #{tpu_custom_call.1} parent=283 // pred_region
          %s673 = sand.u32 1, 7
          %s674 = ssub.s32 1, %s673
          %s675 = scalar_lea.vmem %s646, %s674
          %s676 = ssub.s32 1, %s673
          %s677 = scalar_lea.vmem %s647, %s676 [#allocation2]
          %s678 = sshllo.u32 0, %s673
          loop: start=0, step=1, limit=1
          $region300: #{tpu_custom_call.1} parent=298 // loop_pre_header
            _
          $region301: #{tpu_custom_call.1} parent=298 // loop_header
            %s680 = sphi 0, %s684
            %p681 = scmp.ge.s32.totalorder %s680, 1
            %s685 = sphi %s675, %s675
            %s686 = sphi %s677, %s677
          $region302: #{tpu_custom_call.1} parent=298 // loop_header_branch
            %683 = sbr.rel (%p681) target = $region306
          $region303: #{tpu_custom_call.1} parent=298 // loop_body
            %v687 = vld [vmem:[%s685] sm:%s678]
            %688 = vst [vmem:[%s686] sm:%s678] %v687
          $region304: #{tpu_custom_call.1} parent=298 // loop_footer
            %s684 = sadd.s32 1, %s680
          $region305: #{tpu_custom_call.1} parent=298 // loop_footer_branch
            %679 = sbr.rel target = $region301
          $region306: #{tpu_custom_call.1} parent=298 // loop_exit
            _
        $region299: #{tpu_custom_call.1} parent=283 // pred_fallthru
          _
      $region284: #{tpu_custom_call.1} parent=39 // pred_fallthru
        _
      // Predicated region
      $region285: #{tpu_custom_call.1} parent=39 // pred_check
        %p654 = pneg %p650
      $region286: #{tpu_custom_call.1} parent=39 // pred_check_branch
        %656 = sbr.rel (%p654) target = $region288
      $region287: #{tpu_custom_call.1} parent=39 // pred_region
        %s657 = sshllo.u32 0, 1
        loop: start=0, step=1, limit=1
        $region289: #{tpu_custom_call.1} parent=287 // loop_pre_header
          _
        $region290: #{tpu_custom_call.1} parent=287 // loop_header
          %s659 = sphi 0, %s663
          %p660 = scmp.ge.s32.totalorder %s659, 1
          %s664 = sphi %s646, %s646
          %s665 = sphi %s647, %s647
        $region291: #{tpu_custom_call.1} parent=287 // loop_header_branch
          %662 = sbr.rel (%p660) target = $region295
        $region292: #{tpu_custom_call.1} parent=287 // loop_body
          %v666 = vld [vmem:[%s664] sm:%s657]
          %667 = vst [vmem:[%s665] sm:%s657] %v666
        $region293: #{tpu_custom_call.1} parent=287 // loop_footer
          %s663 = sadd.s32 1, %s659
        $region294: #{tpu_custom_call.1} parent=287 // loop_footer_branch
          %658 = sbr.rel target = $region290
        $region295: #{tpu_custom_call.1} parent=287 // loop_exit
          _
      $region288: #{tpu_custom_call.1} parent=39 // pred_fallthru
        _
      // Predicated region
      $region307: #{tpu_custom_call.1} parent=39 // pred_check
        _
      $region308: #{tpu_custom_call.1} parent=39 // pred_check_branch
        %691 = sbr.rel (0) target = $region310
      $region309: #{tpu_custom_call.1} parent=39 // pred_region
        %692 = vsyncadd %s648, 16
      $region310: #{tpu_custom_call.1} parent=39 // pred_fallthru
        _
      %s693 = scalar_lea.vmem [#allocation3], 4
      %s694 = scalar_lea.sflag [#allocation5], 4
      %p696 = scmp.lt.u32.totalorder 1, 8
      %p697 = pneg %p696
      // Predicated region
      $region311: #{tpu_custom_call.1} parent=39 // pred_check
        _
      $region312: #{tpu_custom_call.1} parent=39 // pred_check_branch
        %699 = sbr.rel (%p696) target = $region314
      $region313: #{tpu_custom_call.1} parent=39 // pred_region
        %s714 = sand.u32 1, 7
        %p715 = scmp.eq.s32.totalorder %s714, 0
        %p716 = pneg %p715
        // Predicated region
        $region326: #{tpu_custom_call.1} parent=313 // pred_check
          _
        $region327: #{tpu_custom_call.1} parent=313 // pred_check_branch
          %718 = sbr.rel (%p715) target = $region329
        $region328: #{tpu_custom_call.1} parent=313 // pred_region
          %s719 = sand.u32 1, 7
          %s720 = ssub.s32 1, %s719
          %s721 = scalar_lea.vmem %s646, %s720
          %s722 = ssub.s32 1, %s719
          %s723 = scalar_lea.vmem %s693, %s722 [#allocation3]
          %s724 = sshllo.u32 0, %s719
          loop: start=0, step=1, limit=1
          $region330: #{tpu_custom_call.1} parent=328 // loop_pre_header
            _
          $region331: #{tpu_custom_call.1} parent=328 // loop_header
            %s726 = sphi 0, %s730
            %p727 = scmp.ge.s32.totalorder %s726, 1
            %s731 = sphi %s721, %s721
            %s732 = sphi %s723, %s723
          $region332: #{tpu_custom_call.1} parent=328 // loop_header_branch
            %729 = sbr.rel (%p727) target = $region336
          $region333: #{tpu_custom_call.1} parent=328 // loop_body
            %v733 = vld [vmem:[%s731] sm:%s724]
            %734 = vst [vmem:[%s732] sm:%s724] %v733
          $region334: #{tpu_custom_call.1} parent=328 // loop_footer
            %s730 = sadd.s32 1, %s726
          $region335: #{tpu_custom_call.1} parent=328 // loop_footer_branch
            %725 = sbr.rel target = $region331
          $region336: #{tpu_custom_call.1} parent=328 // loop_exit
            _
        $region329: #{tpu_custom_call.1} parent=313 // pred_fallthru
          _
      $region314: #{tpu_custom_call.1} parent=39 // pred_fallthru
        _
      // Predicated region
      $region315: #{tpu_custom_call.1} parent=39 // pred_check
        %p700 = pneg %p696
      $region316: #{tpu_custom_call.1} parent=39 // pred_check_branch
        %702 = sbr.rel (%p700) target = $region318
      $region317: #{tpu_custom_call.1} parent=39 // pred_region
        %s703 = sshllo.u32 0, 1
        loop: start=0, step=1, limit=1
        $region319: #{tpu_custom_call.1} parent=317 // loop_pre_header
          _
        $region320: #{tpu_custom_call.1} parent=317 // loop_header
          %s705 = sphi 0, %s709
          %p706 = scmp.ge.s32.totalorder %s705, 1
          %s710 = sphi %s646, %s646
          %s711 = sphi %s693, %s693
        $region321: #{tpu_custom_call.1} parent=317 // loop_header_branch
          %708 = sbr.rel (%p706) target = $region325
        $region322: #{tpu_custom_call.1} parent=317 // loop_body
          %v712 = vld [vmem:[%s710] sm:%s703]
          %713 = vst [vmem:[%s711] sm:%s703] %v712
        $region323: #{tpu_custom_call.1} parent=317 // loop_footer
          %s709 = sadd.s32 1, %s705
        $region324: #{tpu_custom_call.1} parent=317 // loop_footer_branch
          %704 = sbr.rel target = $region320
        $region325: #{tpu_custom_call.1} parent=317 // loop_exit
          _
      $region318: #{tpu_custom_call.1} parent=39 // pred_fallthru
        _
      // Predicated region
      $region337: #{tpu_custom_call.1} parent=39 // pred_check
        _
      $region338: #{tpu_custom_call.1} parent=39 // pred_check_branch
        %737 = sbr.rel (0) target = $region340
      $region339: #{tpu_custom_call.1} parent=39 // pred_region
        %738 = vsyncadd %s694, 16
      $region340: #{tpu_custom_call.1} parent=39 // pred_fallthru
        _
      %s739 = sadd.s32 %s268, 5
      %s740 = sld [smem:[#allocation7 + %s739]]
      %s741 = scalar_lea.vmem %s2, %s740
      %s742 = scalar_lea.vmem [#allocation2], 7
      %s743 = scalar_lea.sflag [#allocation4], 5
      %p745 = scmp.lt.u32.totalorder 1, 8
      %p746 = pneg %p745
      // Predicated region
      $region341: #{tpu_custom_call.1} parent=39 // pred_check
        _
      $region342: #{tpu_custom_call.1} parent=39 // pred_check_branch
        %748 = sbr.rel (%p745) target = $region344
      $region343: #{tpu_custom_call.1} parent=39 // pred_region
        %s763 = sand.u32 1, 7
        %p764 = scmp.eq.s32.totalorder %s763, 0
        %p765 = pneg %p764
        // Predicated region
        $region356: #{tpu_custom_call.1} parent=343 // pred_check
          _
        $region357: #{tpu_custom_call.1} parent=343 // pred_check_branch
          %767 = sbr.rel (%p764) target = $region359
        $region358: #{tpu_custom_call.1} parent=343 // pred_region
          %s768 = sand.u32 1, 7
          %s769 = ssub.s32 1, %s768
          %s770 = scalar_lea.vmem %s741, %s769
          %s771 = ssub.s32 1, %s768
          %s772 = scalar_lea.vmem %s742, %s771 [#allocation2]
          %s773 = sshllo.u32 0, %s768
          loop: start=0, step=1, limit=1
          $region360: #{tpu_custom_call.1} parent=358 // loop_pre_header
            _
          $region361: #{tpu_custom_call.1} parent=358 // loop_header
            %s775 = sphi 0, %s779
            %p776 = scmp.ge.s32.totalorder %s775, 1
            %s780 = sphi %s770, %s770
            %s781 = sphi %s772, %s772
          $region362: #{tpu_custom_call.1} parent=358 // loop_header_branch
            %778 = sbr.rel (%p776) target = $region366
          $region363: #{tpu_custom_call.1} parent=358 // loop_body
            %v782 = vld [vmem:[%s780] sm:%s773]
            %783 = vst [vmem:[%s781] sm:%s773] %v782
          $region364: #{tpu_custom_call.1} parent=358 // loop_footer
            %s779 = sadd.s32 1, %s775
          $region365: #{tpu_custom_call.1} parent=358 // loop_footer_branch
            %774 = sbr.rel target = $region361
          $region366: #{tpu_custom_call.1} parent=358 // loop_exit
            _
        $region359: #{tpu_custom_call.1} parent=343 // pred_fallthru
          _
      $region344: #{tpu_custom_call.1} parent=39 // pred_fallthru
        _
      // Predicated region
      $region345: #{tpu_custom_call.1} parent=39 // pred_check
        %p749 = pneg %p745
      $region346: #{tpu_custom_call.1} parent=39 // pred_check_branch
        %751 = sbr.rel (%p749) target = $region348
      $region347: #{tpu_custom_call.1} parent=39 // pred_region
        %s752 = sshllo.u32 0, 1
        loop: start=0, step=1, limit=1
        $region349: #{tpu_custom_call.1} parent=347 // loop_pre_header
          _
        $region350: #{tpu_custom_call.1} parent=347 // loop_header
          %s754 = sphi 0, %s758
          %p755 = scmp.ge.s32.totalorder %s754, 1
          %s759 = sphi %s741, %s741
          %s760 = sphi %s742, %s742
        $region351: #{tpu_custom_call.1} parent=347 // loop_header_branch
          %757 = sbr.rel (%p755) target = $region355
        $region352: #{tpu_custom_call.1} parent=347 // loop_body
          %v761 = vld [vmem:[%s759] sm:%s752]
          %762 = vst [vmem:[%s760] sm:%s752] %v761
        $region353: #{tpu_custom_call.1} parent=347 // loop_footer
          %s758 = sadd.s32 1, %s754
        $region354: #{tpu_custom_call.1} parent=347 // loop_footer_branch
          %753 = sbr.rel target = $region350
        $region355: #{tpu_custom_call.1} parent=347 // loop_exit
          _
      $region348: #{tpu_custom_call.1} parent=39 // pred_fallthru
        _
      // Predicated region
      $region367: #{tpu_custom_call.1} parent=39 // pred_check
        _
      $region368: #{tpu_custom_call.1} parent=39 // pred_check_branch
        %786 = sbr.rel (0) target = $region370
      $region369: #{tpu_custom_call.1} parent=39 // pred_region
        %787 = vsyncadd %s743, 16
      $region370: #{tpu_custom_call.1} parent=39 // pred_fallthru
        _
      %s788 = scalar_lea.vmem [#allocation3], 5
      %s789 = scalar_lea.sflag [#allocation5], 5
      %p791 = scmp.lt.u32.totalorder 1, 8
      %p792 = pneg %p791
      // Predicated region
      $region371: #{tpu_custom_call.1} parent=39 // pred_check
        _
      $region372: #{tpu_custom_call.1} parent=39 // pred_check_branch
        %794 = sbr.rel (%p791) target = $region374
      $region373: #{tpu_custom_call.1} parent=39 // pred_region
        %s809 = sand.u32 1, 7
        %p810 = scmp.eq.s32.totalorder %s809, 0
        %p811 = pneg %p810
        // Predicated region
        $region386: #{tpu_custom_call.1} parent=373 // pred_check
          _
        $region387: #{tpu_custom_call.1} parent=373 // pred_check_branch
          %813 = sbr.rel (%p810) target = $region389
        $region388: #{tpu_custom_call.1} parent=373 // pred_region
          %s814 = sand.u32 1, 7
          %s815 = ssub.s32 1, %s814
          %s816 = scalar_lea.vmem %s741, %s815
          %s817 = ssub.s32 1, %s814
          %s818 = scalar_lea.vmem %s788, %s817 [#allocation3]
          %s819 = sshllo.u32 0, %s814
          loop: start=0, step=1, limit=1
          $region390: #{tpu_custom_call.1} parent=388 // loop_pre_header
            _
          $region391: #{tpu_custom_call.1} parent=388 // loop_header
            %s821 = sphi 0, %s825
            %p822 = scmp.ge.s32.totalorder %s821, 1
            %s826 = sphi %s816, %s816
            %s827 = sphi %s818, %s818
          $region392: #{tpu_custom_call.1} parent=388 // loop_header_branch
            %824 = sbr.rel (%p822) target = $region396
          $region393: #{tpu_custom_call.1} parent=388 // loop_body
            %v828 = vld [vmem:[%s826] sm:%s819]
            %829 = vst [vmem:[%s827] sm:%s819] %v828
          $region394: #{tpu_custom_call.1} parent=388 // loop_footer
            %s825 = sadd.s32 1, %s821
          $region395: #{tpu_custom_call.1} parent=388 // loop_footer_branch
            %820 = sbr.rel target = $region391
          $region396: #{tpu_custom_call.1} parent=388 // loop_exit
            _
        $region389: #{tpu_custom_call.1} parent=373 // pred_fallthru
          _
      $region374: #{tpu_custom_call.1} parent=39 // pred_fallthru
        _
      // Predicated region
      $region375: #{tpu_custom_call.1} parent=39 // pred_check
        %p795 = pneg %p791
      $region376: #{tpu_custom_call.1} parent=39 // pred_check_branch
        %797 = sbr.rel (%p795) target = $region378
      $region377: #{tpu_custom_call.1} parent=39 // pred_region
        %s798 = sshllo.u32 0, 1
        loop: start=0, step=1, limit=1
        $region379: #{tpu_custom_call.1} parent=377 // loop_pre_header
          _
        $region380: #{tpu_custom_call.1} parent=377 // loop_header
          %s800 = sphi 0, %s804
          %p801 = scmp.ge.s32.totalorder %s800, 1
          %s805 = sphi %s741, %s741
          %s806 = sphi %s788, %s788
        $region381: #{tpu_custom_call.1} parent=377 // loop_header_branch
          %803 = sbr.rel (%p801) target = $region385
        $region382: #{tpu_custom_call.1} parent=377 // loop_body
          %v807 = vld [vmem:[%s805] sm:%s798]
          %808 = vst [vmem:[%s806] sm:%s798] %v807
        $region383: #{tpu_custom_call.1} parent=377 // loop_footer
          %s804 = sadd.s32 1, %s800
        $region384: #{tpu_custom_call.1} parent=377 // loop_footer_branch
          %799 = sbr.rel target = $region380
        $region385: #{tpu_custom_call.1} parent=377 // loop_exit
          _
      $region378: #{tpu_custom_call.1} parent=39 // pred_fallthru
        _
      // Predicated region
      $region397: #{tpu_custom_call.1} parent=39 // pred_check
        _
      $region398: #{tpu_custom_call.1} parent=39 // pred_check_branch
        %832 = sbr.rel (0) target = $region400
      $region399: #{tpu_custom_call.1} parent=39 // pred_region
        %833 = vsyncadd %s789, 16
      $region400: #{tpu_custom_call.1} parent=39 // pred_fallthru
        _
      %s834 = sadd.s32 %s268, 6
      %s835 = sld [smem:[#allocation7 + %s834]]
      %s836 = scalar_lea.vmem %s2, %s835
      %s837 = scalar_lea.vmem [#allocation2], 2
      %s838 = scalar_lea.sflag [#allocation4], 6
      %p840 = scmp.lt.u32.totalorder 1, 8
      %p841 = pneg %p840
      // Predicated region
      $region401: #{tpu_custom_call.1} parent=39 // pred_check
        _
      $region402: #{tpu_custom_call.1} parent=39 // pred_check_branch
        %843 = sbr.rel (%p840) target = $region404
      $region403: #{tpu_custom_call.1} parent=39 // pred_region
        %s858 = sand.u32 1, 7
        %p859 = scmp.eq.s32.totalorder %s858, 0
        %p860 = pneg %p859
        // Predicated region
        $region416: #{tpu_custom_call.1} parent=403 // pred_check
          _
        $region417: #{tpu_custom_call.1} parent=403 // pred_check_branch
          %862 = sbr.rel (%p859) target = $region419
        $region418: #{tpu_custom_call.1} parent=403 // pred_region
          %s863 = sand.u32 1, 7
          %s864 = ssub.s32 1, %s863
          %s865 = scalar_lea.vmem %s836, %s864
          %s866 = ssub.s32 1, %s863
          %s867 = scalar_lea.vmem %s837, %s866 [#allocation2]
          %s868 = sshllo.u32 0, %s863
          loop: start=0, step=1, limit=1
          $region420: #{tpu_custom_call.1} parent=418 // loop_pre_header
            _
          $region421: #{tpu_custom_call.1} parent=418 // loop_header
            %s870 = sphi 0, %s874
            %p871 = scmp.ge.s32.totalorder %s870, 1
            %s875 = sphi %s865, %s865
            %s876 = sphi %s867, %s867
          $region422: #{tpu_custom_call.1} parent=418 // loop_header_branch
            %873 = sbr.rel (%p871) target = $region426
          $region423: #{tpu_custom_call.1} parent=418 // loop_body
            %v877 = vld [vmem:[%s875] sm:%s868]
            %878 = vst [vmem:[%s876] sm:%s868] %v877
          $region424: #{tpu_custom_call.1} parent=418 // loop_footer
            %s874 = sadd.s32 1, %s870
          $region425: #{tpu_custom_call.1} parent=418 // loop_footer_branch
            %869 = sbr.rel target = $region421
          $region426: #{tpu_custom_call.1} parent=418 // loop_exit
            _
        $region419: #{tpu_custom_call.1} parent=403 // pred_fallthru
          _
      $region404: #{tpu_custom_call.1} parent=39 // pred_fallthru
        _
      // Predicated region
      $region405: #{tpu_custom_call.1} parent=39 // pred_check
        %p844 = pneg %p840
      $region406: #{tpu_custom_call.1} parent=39 // pred_check_branch
        %846 = sbr.rel (%p844) target = $region408
      $region407: #{tpu_custom_call.1} parent=39 // pred_region
        %s847 = sshllo.u32 0, 1
        loop: start=0, step=1, limit=1
        $region409: #{tpu_custom_call.1} parent=407 // loop_pre_header
          _
        $region410: #{tpu_custom_call.1} parent=407 // loop_header
          %s849 = sphi 0, %s853
          %p850 = scmp.ge.s32.totalorder %s849, 1
          %s854 = sphi %s836, %s836
          %s855 = sphi %s837, %s837
        $region411: #{tpu_custom_call.1} parent=407 // loop_header_branch
          %852 = sbr.rel (%p850) target = $region415
        $region412: #{tpu_custom_call.1} parent=407 // loop_body
          %v856 = vld [vmem:[%s854] sm:%s847]
          %857 = vst [vmem:[%s855] sm:%s847] %v856
        $region413: #{tpu_custom_call.1} parent=407 // loop_footer
          %s853 = sadd.s32 1, %s849
        $region414: #{tpu_custom_call.1} parent=407 // loop_footer_branch
          %848 = sbr.rel target = $region410
        $region415: #{tpu_custom_call.1} parent=407 // loop_exit
          _
      $region408: #{tpu_custom_call.1} parent=39 // pred_fallthru
        _
      // Predicated region
      $region427: #{tpu_custom_call.1} parent=39 // pred_check
        _
      $region428: #{tpu_custom_call.1} parent=39 // pred_check_branch
        %881 = sbr.rel (0) target = $region430
      $region429: #{tpu_custom_call.1} parent=39 // pred_region
        %882 = vsyncadd %s838, 16
      $region430: #{tpu_custom_call.1} parent=39 // pred_fallthru
        _
      %s883 = scalar_lea.vmem [#allocation3], 6
      %s884 = scalar_lea.sflag [#allocation5], 6
      %p886 = scmp.lt.u32.totalorder 1, 8
      %p887 = pneg %p886
      // Predicated region
      $region431: #{tpu_custom_call.1} parent=39 // pred_check
        _
      $region432: #{tpu_custom_call.1} parent=39 // pred_check_branch
        %889 = sbr.rel (%p886) target = $region434
      $region433: #{tpu_custom_call.1} parent=39 // pred_region
        %s904 = sand.u32 1, 7
        %p905 = scmp.eq.s32.totalorder %s904, 0
        %p906 = pneg %p905
        // Predicated region
        $region446: #{tpu_custom_call.1} parent=433 // pred_check
          _
        $region447: #{tpu_custom_call.1} parent=433 // pred_check_branch
          %908 = sbr.rel (%p905) target = $region449
        $region448: #{tpu_custom_call.1} parent=433 // pred_region
          %s909 = sand.u32 1, 7
          %s910 = ssub.s32 1, %s909
          %s911 = scalar_lea.vmem %s836, %s910
          %s912 = ssub.s32 1, %s909
          %s913 = scalar_lea.vmem %s883, %s912 [#allocation3]
          %s914 = sshllo.u32 0, %s909
          loop: start=0, step=1, limit=1
          $region450: #{tpu_custom_call.1} parent=448 // loop_pre_header
            _
          $region451: #{tpu_custom_call.1} parent=448 // loop_header
            %s916 = sphi 0, %s920
            %p917 = scmp.ge.s32.totalorder %s916, 1
            %s921 = sphi %s911, %s911
            %s922 = sphi %s913, %s913
          $region452: #{tpu_custom_call.1} parent=448 // loop_header_branch
            %919 = sbr.rel (%p917) target = $region456
          $region453: #{tpu_custom_call.1} parent=448 // loop_body
            %v923 = vld [vmem:[%s921] sm:%s914]
            %924 = vst [vmem:[%s922] sm:%s914] %v923
          $region454: #{tpu_custom_call.1} parent=448 // loop_footer
            %s920 = sadd.s32 1, %s916
          $region455: #{tpu_custom_call.1} parent=448 // loop_footer_branch
            %915 = sbr.rel target = $region451
          $region456: #{tpu_custom_call.1} parent=448 // loop_exit
            _
        $region449: #{tpu_custom_call.1} parent=433 // pred_fallthru
          _
      $region434: #{tpu_custom_call.1} parent=39 // pred_fallthru
        _
      // Predicated region
      $region435: #{tpu_custom_call.1} parent=39 // pred_check
        %p890 = pneg %p886
      $region436: #{tpu_custom_call.1} parent=39 // pred_check_branch
        %892 = sbr.rel (%p890) target = $region438
      $region437: #{tpu_custom_call.1} parent=39 // pred_region
        %s893 = sshllo.u32 0, 1
        loop: start=0, step=1, limit=1
        $region439: #{tpu_custom_call.1} parent=437 // loop_pre_header
          _
        $region440: #{tpu_custom_call.1} parent=437 // loop_header
          %s895 = sphi 0, %s899
          %p896 = scmp.ge.s32.totalorder %s895, 1
          %s900 = sphi %s836, %s836
          %s901 = sphi %s883, %s883
        $region441: #{tpu_custom_call.1} parent=437 // loop_header_branch
          %898 = sbr.rel (%p896) target = $region445
        $region442: #{tpu_custom_call.1} parent=437 // loop_body
          %v902 = vld [vmem:[%s900] sm:%s893]
          %903 = vst [vmem:[%s901] sm:%s893] %v902
        $region443: #{tpu_custom_call.1} parent=437 // loop_footer
          %s899 = sadd.s32 1, %s895
        $region444: #{tpu_custom_call.1} parent=437 // loop_footer_branch
          %894 = sbr.rel target = $region440
        $region445: #{tpu_custom_call.1} parent=437 // loop_exit
          _
      $region438: #{tpu_custom_call.1} parent=39 // pred_fallthru
        _
      // Predicated region
      $region457: #{tpu_custom_call.1} parent=39 // pred_check
        _
      $region458: #{tpu_custom_call.1} parent=39 // pred_check_branch
        %927 = sbr.rel (0) target = $region460
      $region459: #{tpu_custom_call.1} parent=39 // pred_region
        %928 = vsyncadd %s884, 16
      $region460: #{tpu_custom_call.1} parent=39 // pred_fallthru
        _
      %s929 = sadd.s32 %s268, 7
      %s930 = sld [smem:[#allocation7 + %s929]]
      %s931 = scalar_lea.vmem %s2, %s930
      %s932 = scalar_lea.vmem [#allocation2], 5
      %s933 = scalar_lea.sflag [#allocation4], 7
      %p935 = scmp.lt.u32.totalorder 1, 8
      %p936 = pneg %p935
      // Predicated region
      $region461: #{tpu_custom_call.1} parent=39 // pred_check
        _
      $region462: #{tpu_custom_call.1} parent=39 // pred_check_branch
        %938 = sbr.rel (%p935) target = $region464
      $region463: #{tpu_custom_call.1} parent=39 // pred_region
        %s953 = sand.u32 1, 7
        %p954 = scmp.eq.s32.totalorder %s953, 0
        %p955 = pneg %p954
        // Predicated region
        $region476: #{tpu_custom_call.1} parent=463 // pred_check
          _
        $region477: #{tpu_custom_call.1} parent=463 // pred_check_branch
          %957 = sbr.rel (%p954) target = $region479
        $region478: #{tpu_custom_call.1} parent=463 // pred_region
          %s958 = sand.u32 1, 7
          %s959 = ssub.s32 1, %s958
          %s960 = scalar_lea.vmem %s931, %s959
          %s961 = ssub.s32 1, %s958
          %s962 = scalar_lea.vmem %s932, %s961 [#allocation2]
          %s963 = sshllo.u32 0, %s958
          loop: start=0, step=1, limit=1
          $region480: #{tpu_custom_call.1} parent=478 // loop_pre_header
            _
          $region481: #{tpu_custom_call.1} parent=478 // loop_header
            %s965 = sphi 0, %s969
            %p966 = scmp.ge.s32.totalorder %s965, 1
            %s970 = sphi %s960, %s960
            %s971 = sphi %s962, %s962
          $region482: #{tpu_custom_call.1} parent=478 // loop_header_branch
            %968 = sbr.rel (%p966) target = $region486
          $region483: #{tpu_custom_call.1} parent=478 // loop_body
            %v972 = vld [vmem:[%s970] sm:%s963]
            %973 = vst [vmem:[%s971] sm:%s963] %v972
          $region484: #{tpu_custom_call.1} parent=478 // loop_footer
            %s969 = sadd.s32 1, %s965
          $region485: #{tpu_custom_call.1} parent=478 // loop_footer_branch
            %964 = sbr.rel target = $region481
          $region486: #{tpu_custom_call.1} parent=478 // loop_exit
            _
        $region479: #{tpu_custom_call.1} parent=463 // pred_fallthru
          _
      $region464: #{tpu_custom_call.1} parent=39 // pred_fallthru
        _
      // Predicated region
      $region465: #{tpu_custom_call.1} parent=39 // pred_check
        %p939 = pneg %p935
      $region466: #{tpu_custom_call.1} parent=39 // pred_check_branch
        %941 = sbr.rel (%p939) target = $region468
      $region467: #{tpu_custom_call.1} parent=39 // pred_region
        %s942 = sshllo.u32 0, 1
        loop: start=0, step=1, limit=1
        $region469: #{tpu_custom_call.1} parent=467 // loop_pre_header
          _
        $region470: #{tpu_custom_call.1} parent=467 // loop_header
          %s944 = sphi 0, %s948
          %p945 = scmp.ge.s32.totalorder %s944, 1
          %s949 = sphi %s931, %s931
          %s950 = sphi %s932, %s932
        $region471: #{tpu_custom_call.1} parent=467 // loop_header_branch
          %947 = sbr.rel (%p945) target = $region475
        $region472: #{tpu_custom_call.1} parent=467 // loop_body
          %v951 = vld [vmem:[%s949] sm:%s942]
          %952 = vst [vmem:[%s950] sm:%s942] %v951
        $region473: #{tpu_custom_call.1} parent=467 // loop_footer
          %s948 = sadd.s32 1, %s944
        $region474: #{tpu_custom_call.1} parent=467 // loop_footer_branch
          %943 = sbr.rel target = $region470
        $region475: #{tpu_custom_call.1} parent=467 // loop_exit
          _
      $region468: #{tpu_custom_call.1} parent=39 // pred_fallthru
        _
      // Predicated region
      $region487: #{tpu_custom_call.1} parent=39 // pred_check
        _
      $region488: #{tpu_custom_call.1} parent=39 // pred_check_branch
        %976 = sbr.rel (0) target = $region490
      $region489: #{tpu_custom_call.1} parent=39 // pred_region
        %977 = vsyncadd %s933, 16
      $region490: #{tpu_custom_call.1} parent=39 // pred_fallthru
        _
      %s978 = scalar_lea.vmem [#allocation3], 7
      %s979 = scalar_lea.sflag [#allocation5], 7
      %p981 = scmp.lt.u32.totalorder 1, 8
      %p982 = pneg %p981
      // Predicated region
      $region491: #{tpu_custom_call.1} parent=39 // pred_check
        _
      $region492: #{tpu_custom_call.1} parent=39 // pred_check_branch
        %984 = sbr.rel (%p981) target = $region494
      $region493: #{tpu_custom_call.1} parent=39 // pred_region
        %s999 = sand.u32 1, 7
        %p1000 = scmp.eq.s32.totalorder %s999, 0
        %p1001 = pneg %p1000
        // Predicated region
        $region506: #{tpu_custom_call.1} parent=493 // pred_check
          _
        $region507: #{tpu_custom_call.1} parent=493 // pred_check_branch
          %1003 = sbr.rel (%p1000) target = $region509
        $region508: #{tpu_custom_call.1} parent=493 // pred_region
          %s1004 = sand.u32 1, 7
          %s1005 = ssub.s32 1, %s1004
          %s1006 = scalar_lea.vmem %s931, %s1005
          %s1007 = ssub.s32 1, %s1004
          %s1008 = scalar_lea.vmem %s978, %s1007 [#allocation3]
          %s1009 = sshllo.u32 0, %s1004
          loop: start=0, step=1, limit=1
          $region510: #{tpu_custom_call.1} parent=508 // loop_pre_header
            _
          $region511: #{tpu_custom_call.1} parent=508 // loop_header
            %s1011 = sphi 0, %s1015
            %p1012 = scmp.ge.s32.totalorder %s1011, 1
            %s1016 = sphi %s1006, %s1006
            %s1017 = sphi %s1008, %s1008
          $region512: #{tpu_custom_call.1} parent=508 // loop_header_branch
            %1014 = sbr.rel (%p1012) target = $region516
          $region513: #{tpu_custom_call.1} parent=508 // loop_body
            %v1018 = vld [vmem:[%s1016] sm:%s1009]
            %1019 = vst [vmem:[%s1017] sm:%s1009] %v1018
          $region514: #{tpu_custom_call.1} parent=508 // loop_footer
            %s1015 = sadd.s32 1, %s1011
          $region515: #{tpu_custom_call.1} parent=508 // loop_footer_branch
            %1010 = sbr.rel target = $region511
          $region516: #{tpu_custom_call.1} parent=508 // loop_exit
            _
        $region509: #{tpu_custom_call.1} parent=493 // pred_fallthru
          _
      $region494: #{tpu_custom_call.1} parent=39 // pred_fallthru
        _
      // Predicated region
      $region495: #{tpu_custom_call.1} parent=39 // pred_check
        %p985 = pneg %p981
      $region496: #{tpu_custom_call.1} parent=39 // pred_check_branch
        %987 = sbr.rel (%p985) target = $region498
      $region497: #{tpu_custom_call.1} parent=39 // pred_region
        %s988 = sshllo.u32 0, 1
        loop: start=0, step=1, limit=1
        $region499: #{tpu_custom_call.1} parent=497 // loop_pre_header
          _
        $region500: #{tpu_custom_call.1} parent=497 // loop_header
          %s990 = sphi 0, %s994
          %p991 = scmp.ge.s32.totalorder %s990, 1
          %s995 = sphi %s931, %s931
          %s996 = sphi %s978, %s978
        $region501: #{tpu_custom_call.1} parent=497 // loop_header_branch
          %993 = sbr.rel (%p991) target = $region505
        $region502: #{tpu_custom_call.1} parent=497 // loop_body
          %v997 = vld [vmem:[%s995] sm:%s988]
          %998 = vst [vmem:[%s996] sm:%s988] %v997
        $region503: #{tpu_custom_call.1} parent=497 // loop_footer
          %s994 = sadd.s32 1, %s990
        $region504: #{tpu_custom_call.1} parent=497 // loop_footer_branch
          %989 = sbr.rel target = $region500
        $region505: #{tpu_custom_call.1} parent=497 // loop_exit
          _
      $region498: #{tpu_custom_call.1} parent=39 // pred_fallthru
        _
      // Predicated region
      $region517: #{tpu_custom_call.1} parent=39 // pred_check
        _
      $region518: #{tpu_custom_call.1} parent=39 // pred_check_branch
        %1022 = sbr.rel (0) target = $region520
      $region519: #{tpu_custom_call.1} parent=39 // pred_region
        %1023 = vsyncadd %s979, 16
      $region520: #{tpu_custom_call.1} parent=39 // pred_fallthru
        _
      %s1024 = sadd.s32 %s268, 8
      %s1025 = sld [smem:[#allocation7 + %s1024]]
      %s1026 = scalar_lea.vmem %s2, %s1025
      %s1027 = scalar_lea.vmem [#allocation2], 8
      %s1028 = scalar_lea.sflag [#allocation4], 8
      %p1030 = scmp.lt.u32.totalorder 1, 8
      %p1031 = pneg %p1030
      // Predicated region
      $region521: #{tpu_custom_call.1} parent=39 // pred_check
        _
      $region522: #{tpu_custom_call.1} parent=39 // pred_check_branch
        %1033 = sbr.rel (%p1030) target = $region524
      $region523: #{tpu_custom_call.1} parent=39 // pred_region
        %s1048 = sand.u32 1, 7
        %p1049 = scmp.eq.s32.totalorder %s1048, 0
        %p1050 = pneg %p1049
        // Predicated region
        $region536: #{tpu_custom_call.1} parent=523 // pred_check
          _
        $region537: #{tpu_custom_call.1} parent=523 // pred_check_branch
          %1052 = sbr.rel (%p1049) target = $region539
        $region538: #{tpu_custom_call.1} parent=523 // pred_region
          %s1053 = sand.u32 1, 7
          %s1054 = ssub.s32 1, %s1053
          %s1055 = scalar_lea.vmem %s1026, %s1054
          %s1056 = ssub.s32 1, %s1053
          %s1057 = scalar_lea.vmem %s1027, %s1056 [#allocation2]
          %s1058 = sshllo.u32 0, %s1053
          loop: start=0, step=1, limit=1
          $region540: #{tpu_custom_call.1} parent=538 // loop_pre_header
            _
          $region541: #{tpu_custom_call.1} parent=538 // loop_header
            %s1060 = sphi 0, %s1064
            %p1061 = scmp.ge.s32.totalorder %s1060, 1
            %s1065 = sphi %s1055, %s1055
            %s1066 = sphi %s1057, %s1057
          $region542: #{tpu_custom_call.1} parent=538 // loop_header_branch
            %1063 = sbr.rel (%p1061) target = $region546
          $region543: #{tpu_custom_call.1} parent=538 // loop_body
            %v1067 = vld [vmem:[%s1065] sm:%s1058]
            %1068 = vst [vmem:[%s1066] sm:%s1058] %v1067
          $region544: #{tpu_custom_call.1} parent=538 // loop_footer
            %s1064 = sadd.s32 1, %s1060
          $region545: #{tpu_custom_call.1} parent=538 // loop_footer_branch
            %1059 = sbr.rel target = $region541
          $region546: #{tpu_custom_call.1} parent=538 // loop_exit
            _
        $region539: #{tpu_custom_call.1} parent=523 // pred_fallthru
          _
      $region524: #{tpu_custom_call.1} parent=39 // pred_fallthru
        _
      // Predicated region
      $region525: #{tpu_custom_call.1} parent=39 // pred_check
        %p1034 = pneg %p1030
      $region526: #{tpu_custom_call.1} parent=39 // pred_check_branch
        %1036 = sbr.rel (%p1034) target = $region528
      $region527: #{tpu_custom_call.1} parent=39 // pred_region
        %s1037 = sshllo.u32 0, 1
        loop: start=0, step=1, limit=1
        $region529: #{tpu_custom_call.1} parent=527 // loop_pre_header
          _
        $region530: #{tpu_custom_call.1} parent=527 // loop_header
          %s1039 = sphi 0, %s1043
          %p1040 = scmp.ge.s32.totalorder %s1039, 1
          %s1044 = sphi %s1026, %s1026
          %s1045 = sphi %s1027, %s1027
        $region531: #{tpu_custom_call.1} parent=527 // loop_header_branch
          %1042 = sbr.rel (%p1040) target = $region535
        $region532: #{tpu_custom_call.1} parent=527 // loop_body
          %v1046 = vld [vmem:[%s1044] sm:%s1037]
          %1047 = vst [vmem:[%s1045] sm:%s1037] %v1046
        $region533: #{tpu_custom_call.1} parent=527 // loop_footer
          %s1043 = sadd.s32 1, %s1039
        $region534: #{tpu_custom_call.1} parent=527 // loop_footer_branch
          %1038 = sbr.rel target = $region530
        $region535: #{tpu_custom_call.1} parent=527 // loop_exit
          _
      $region528: #{tpu_custom_call.1} parent=39 // pred_fallthru
        _
      // Predicated region
      $region547: #{tpu_custom_call.1} parent=39 // pred_check
        _
      $region548: #{tpu_custom_call.1} parent=39 // pred_check_branch
        %1071 = sbr.rel (0) target = $region550
      $region549: #{tpu_custom_call.1} parent=39 // pred_region
        %1072 = vsyncadd %s1028, 16
      $region550: #{tpu_custom_call.1} parent=39 // pred_fallthru
        _
      %s1073 = scalar_lea.vmem [#allocation3], 8
      %s1074 = scalar_lea.sflag [#allocation5], 8
      %p1076 = scmp.lt.u32.totalorder 1, 8
      %p1077 = pneg %p1076
      // Predicated region
      $region551: #{tpu_custom_call.1} parent=39 // pred_check
        _
      $region552: #{tpu_custom_call.1} parent=39 // pred_check_branch
        %1079 = sbr.rel (%p1076) target = $region554
      $region553: #{tpu_custom_call.1} parent=39 // pred_region
        %s1094 = sand.u32 1, 7
        %p1095 = scmp.eq.s32.totalorder %s1094, 0
        %p1096 = pneg %p1095
        // Predicated region
        $region566: #{tpu_custom_call.1} parent=553 // pred_check
          _
        $region567: #{tpu_custom_call.1} parent=553 // pred_check_branch
          %1098 = sbr.rel (%p1095) target = $region569
        $region568: #{tpu_custom_call.1} parent=553 // pred_region
          %s1099 = sand.u32 1, 7
          %s1100 = ssub.s32 1, %s1099
          %s1101 = scalar_lea.vmem %s1026, %s1100
          %s1102 = ssub.s32 1, %s1099
          %s1103 = scalar_lea.vmem %s1073, %s1102 [#allocation3]
          %s1104 = sshllo.u32 0, %s1099
          loop: start=0, step=1, limit=1
          $region570: #{tpu_custom_call.1} parent=568 // loop_pre_header
            _
          $region571: #{tpu_custom_call.1} parent=568 // loop_header
            %s1106 = sphi 0, %s1110
            %p1107 = scmp.ge.s32.totalorder %s1106, 1
            %s1111 = sphi %s1101, %s1101
            %s1112 = sphi %s1103, %s1103
          $region572: #{tpu_custom_call.1} parent=568 // loop_header_branch
            %1109 = sbr.rel (%p1107) target = $region576
          $region573: #{tpu_custom_call.1} parent=568 // loop_body
            %v1113 = vld [vmem:[%s1111] sm:%s1104]
            %1114 = vst [vmem:[%s1112] sm:%s1104] %v1113
          $region574: #{tpu_custom_call.1} parent=568 // loop_footer
            %s1110 = sadd.s32 1, %s1106
          $region575: #{tpu_custom_call.1} parent=568 // loop_footer_branch
            %1105 = sbr.rel target = $region571
          $region576: #{tpu_custom_call.1} parent=568 // loop_exit
            _
        $region569: #{tpu_custom_call.1} parent=553 // pred_fallthru
          _
      $region554: #{tpu_custom_call.1} parent=39 // pred_fallthru
        _
      // Predicated region
      $region555: #{tpu_custom_call.1} parent=39 // pred_check
        %p1080 = pneg %p1076
      $region556: #{tpu_custom_call.1} parent=39 // pred_check_branch
        %1082 = sbr.rel (%p1080) target = $region558
      $region557: #{tpu_custom_call.1} parent=39 // pred_region
        %s1083 = sshllo.u32 0, 1
        loop: start=0, step=1, limit=1
        $region559: #{tpu_custom_call.1} parent=557 // loop_pre_header
          _
        $region560: #{tpu_custom_call.1} parent=557 // loop_header
          %s1085 = sphi 0, %s1089
          %p1086 = scmp.ge.s32.totalorder %s1085, 1
          %s1090 = sphi %s1026, %s1026
          %s1091 = sphi %s1073, %s1073
        $region561: #{tpu_custom_call.1} parent=557 // loop_header_branch
          %1088 = sbr.rel (%p1086) target = $region565
        $region562: #{tpu_custom_call.1} parent=557 // loop_body
          %v1092 = vld [vmem:[%s1090] sm:%s1083]
          %1093 = vst [vmem:[%s1091] sm:%s1083] %v1092
        $region563: #{tpu_custom_call.1} parent=557 // loop_footer
          %s1089 = sadd.s32 1, %s1085
        $region564: #{tpu_custom_call.1} parent=557 // loop_footer_branch
          %1084 = sbr.rel target = $region560
        $region565: #{tpu_custom_call.1} parent=557 // loop_exit
          _
      $region558: #{tpu_custom_call.1} parent=39 // pred_fallthru
        _
      // Predicated region
      $region577: #{tpu_custom_call.1} parent=39 // pred_check
        _
      $region578: #{tpu_custom_call.1} parent=39 // pred_check_branch
        %1117 = sbr.rel (0) target = $region580
      $region579: #{tpu_custom_call.1} parent=39 // pred_region
        %1118 = vsyncadd %s1074, 16
      $region580: #{tpu_custom_call.1} parent=39 // pred_fallthru
        _
      %s1119 = smul.u32 1, 1
      %s1120 = sshll.u32 %s1119, 4
      %1121 = dma.done [#allocation4], %s1120
      %s1122 = sshll.u32 %s1119, 4
      %1123 = dma.done %s363, %s1122
      %s1124 = sshll.u32 %s1119, 4
      %1125 = dma.done %s458, %s1124
      %s1126 = sshll.u32 %s1119, 4
      %1127 = dma.done %s553, %s1126
      %s1128 = sshll.u32 %s1119, 4
      %1129 = dma.done %s648, %s1128
      %s1130 = sshll.u32 %s1119, 4
      %1131 = dma.done %s743, %s1130
      %s1132 = sshll.u32 %s1119, 4
      %1133 = dma.done %s838, %s1132
      %s1134 = sshll.u32 %s1119, 4
      %1135 = dma.done %s933, %s1134
      %s1136 = sshll.u32 %s1119, 4
      %1137 = dma.done %s1028, %s1136
      %v1138 = vld [vmem:[#allocation2] sm:$0xff]
      %v1139 = vld [vmem:[#allocation2 + $0x8] sm:$0x1]
      %v1140 = vld [vmem:[%s258] sm:$0x7]
      %v1141 = vsub.s32 %v1140, 1
      %v1142 = vcvt.s32.f32 %v1140
      %v1143 = vld [vmem:[%s3] sm:$0xff]
      %v1144 = vld [vmem:[%s3 + $0x8] sm:$0xff]
      %v1145 = vld [vmem:[%s3 + $0x10] sm:$0xff]
      %v1146 = vld [vmem:[%s3 + $0x18] sm:$0xff]
      %v1147 = vld [vmem:[%s5] sm:$0x1]
      %v1149 = vlaneseq
      %v1150 = vshrl.u32 %v1149, 7
      %v1151 = vsub.s32 0, %v1150
      %v1152 = vrot.slane %v1147, %v1151
      %vm1154 = vcmask 261120
      %v1156 = vsel %vm1154, %v1138, 0
      %v1159 = vsel %vm1154, %v1139, 0
      %1161 = vmatprep.subr.mxu0 0.0
      %1162 = vmatpush1.msra.mxu0 %v1143
      %1163 = vmatprep.subr.mxu0 0.0
      %1164 = vmatpush1.msra.mxu0 %v1144
      %1165 = vmatprep.subr.mxu0 0.0
      %1166 = vmatpush1.msra.mxu0 %v1145
      %1167 = vmatprep.subr.mxu0 0.0
      %1168 = vmatpush1.msra.mxu0 %v1146
      %1169 = vmatprep.subr.mxu0 0.0
      %1170 = vmatpush1.msra.mxu0 0.0
      %1171 = vmatprep.subr.mxu0 0.0
      %1172 = vmatpush1.msra.mxu0 0.0
      %1173 = vmatprep.subr.mxu0 0.0
      %1174 = vmatpush1.msra.mxu0 0.0
      %1175 = vmatprep.subr.mxu0 0.0
      %1176 = vmatpush1.msra.mxu0 0.0
      %1177 = vmatprep.subr.mxu0 0.0
      %1178 = vmatpush1.msra.mxu0 0.0
      %1179 = vmatprep.subr.mxu0 0.0
      %1180 = vmatpush1.msra.mxu0 0.0
      %1181 = vmatprep.subr.mxu0 0.0
      %1182 = vmatpush1.msra.mxu0 0.0
      %1183 = vmatprep.subr.mxu0 0.0
      %1184 = vmatpush1.msra.mxu0 0.0
      %1185 = vmatprep.subr.mxu0 0.0
      %1186 = vmatpush1.msra.mxu0 0.0
      %1187 = vmatprep.subr.mxu0 0.0
      %1188 = vmatpush1.msra.mxu0 0.0
      %1189 = vmatprep.subr.mxu0 0.0
      %1190 = vmatpush1.msra.mxu0 0.0
      %1191 = vmatprep.subr.mxu0 0.0
      %1192 = vmatpush1.msra.mxu0 0.0
      %1193 = vmatprep.subr.mxu0 0.0
      %1194 = vmatpush1.msra.mxu0 0.0
      %1195 = vmatprep.subr.mxu0 0.0
      %1196 = vmatpush1.msra.mxu0 0.0
      %1197 = vmatprep.subr.mxu0 0.0
      %1198 = vmatpush1.msra.mxu0 0.0
      %1199 = vmatprep.subr.mxu0 0.0
      %1200 = vmatpush1.msra.mxu0 0.0
      %1201 = vmatprep.subr.mxu0 0.0
      %1202 = vmatpush1.msra.mxu0 0.0
      %1203 = vmatprep.subr.mxu0 0.0
      %1204 = vmatpush1.msra.mxu0 0.0
      %1205 = vmatprep.subr.mxu0 0.0
      %1206 = vmatpush1.msra.mxu0 0.0
      %1207 = vmatprep.subr.mxu0 0.0
      %1208 = vmatpush1.msra.mxu0 0.0
      %1209 = vmatprep.subr.mxu0 0.0
      %1210 = vmatpush1.msra.mxu0 0.0
      %1211 = vmatprep.subr.mxu0 0.0
      %1212 = vmatpush1.msra.mxu0 0.0
      %1213 = vmatprep.subr.mxu0 0.0
      %1214 = vmatpush1.msra.mxu0 0.0
      %1215 = vmatprep.subr.mxu0 0.0
      %1216 = vmatpush1.msra.mxu0 0.0
      %1217 = vmatprep.subr.mxu0 0.0
      %1218 = vmatpush1.msra.mxu0 0.0
      %1219 = vmatprep.subr.mxu0 0.0
      %1220 = vmatpush1.msra.mxu0 0.0
      %1221 = vmatprep.subr.mxu0 0.0
      %1222 = vmatpush1.msra.mxu0 0.0
      %1223 = vmatprep.subr.mxu0 0.0
      %1224 = vmatpush1.msra.mxu0 0.0
      %1225 = vmatprep.mubr.f32.mxu0 0.0
      %1226 = vmatmul.mubr.f32.gmra.mrb[0].mxu0 %v1156
      %v1227 = vpop.f32.mrb[0].mxu0
      %v1228 = vadd.f32 %v1152, %v1227
      %v1229 = vpop.f32.mrb[0].mxu0
      %1230 = vmatprep.mubr.f32.mxu0 0.0
      %1231 = vmatmul.mubr.f32.gmra.mrb[0].mxu0 %v1159
      %v1232 = vpop.f32.mrb[0].mxu0
      %v1233 = vadd.f32 %v1152, %v1232
      %v1234 = vpop.f32.mrb[0].mxu0
      %1235 = vdwg.mxu0
      %s1236 = scalar_lea.vmem %s3, 32
      %v1237 = vld [vmem:[%s1236] sm:$0xff]
      %v1238 = vld [vmem:[%s1236 + $0x8] sm:$0xff]
      %v1239 = vld [vmem:[%s1236 + $0x10] sm:$0xff]
      %v1240 = vld [vmem:[%s1236 + $0x18] sm:$0xff]
      %s1241 = scalar_lea.vmem %s5, 1
      %v1242 = vld [vmem:[%s1241] sm:$0x1]
      %v1244 = vlaneseq
      %v1245 = vshrl.u32 %v1244, 7
      %v1246 = vsub.s32 0, %v1245
      %v1247 = vrot.slane %v1242, %v1246
      %1249 = vmatprep.subr.mxu0 0.0
      %1250 = vmatpush1.msra.mxu0 %v1237
      %1251 = vmatprep.subr.mxu0 0.0
      %1252 = vmatpush1.msra.mxu0 %v1238
      %1253 = vmatprep.subr.mxu0 0.0
      %1254 = vmatpush1.msra.mxu0 %v1239
      %1255 = vmatprep.subr.mxu0 0.0
      %1256 = vmatpush1.msra.mxu0 %v1240
      %1257 = vmatprep.subr.mxu0 0.0
      %1258 = vmatpush1.msra.mxu0 0.0
      %1259 = vmatprep.subr.mxu0 0.0
      %1260 = vmatpush1.msra.mxu0 0.0
      %1261 = vmatprep.subr.mxu0 0.0
      %1262 = vmatpush1.msra.mxu0 0.0
      %1263 = vmatprep.subr.mxu0 0.0
      %1264 = vmatpush1.msra.mxu0 0.0
      %1265 = vmatprep.subr.mxu0 0.0
      %1266 = vmatpush1.msra.mxu0 0.0
      %1267 = vmatprep.subr.mxu0 0.0
      %1268 = vmatpush1.msra.mxu0 0.0
      %1269 = vmatprep.subr.mxu0 0.0
      %1270 = vmatpush1.msra.mxu0 0.0
      %1271 = vmatprep.subr.mxu0 0.0
      %1272 = vmatpush1.msra.mxu0 0.0
      %1273 = vmatprep.subr.mxu0 0.0
      %1274 = vmatpush1.msra.mxu0 0.0
      %1275 = vmatprep.subr.mxu0 0.0
      %1276 = vmatpush1.msra.mxu0 0.0
      %1277 = vmatprep.subr.mxu0 0.0
      %1278 = vmatpush1.msra.mxu0 0.0
      %1279 = vmatprep.subr.mxu0 0.0
      %1280 = vmatpush1.msra.mxu0 0.0
      %1281 = vmatprep.subr.mxu0 0.0
      %1282 = vmatpush1.msra.mxu0 0.0
      %1283 = vmatprep.subr.mxu0 0.0
      %1284 = vmatpush1.msra.mxu0 0.0
      %1285 = vmatprep.subr.mxu0 0.0
      %1286 = vmatpush1.msra.mxu0 0.0
      %1287 = vmatprep.subr.mxu0 0.0
      %1288 = vmatpush1.msra.mxu0 0.0
      %1289 = vmatprep.subr.mxu0 0.0
      %1290 = vmatpush1.msra.mxu0 0.0
      %1291 = vmatprep.subr.mxu0 0.0
      %1292 = vmatpush1.msra.mxu0 0.0
      %1293 = vmatprep.subr.mxu0 0.0
      %1294 = vmatpush1.msra.mxu0 0.0
      %1295 = vmatprep.subr.mxu0 0.0
      %1296 = vmatpush1.msra.mxu0 0.0
      %1297 = vmatprep.subr.mxu0 0.0
      %1298 = vmatpush1.msra.mxu0 0.0
      %1299 = vmatprep.subr.mxu0 0.0
      %1300 = vmatpush1.msra.mxu0 0.0
      %1301 = vmatprep.subr.mxu0 0.0
      %1302 = vmatpush1.msra.mxu0 0.0
      %1303 = vmatprep.subr.mxu0 0.0
      %1304 = vmatpush1.msra.mxu0 0.0
      %1305 = vmatprep.subr.mxu0 0.0
      %1306 = vmatpush1.msra.mxu0 0.0
      %1307 = vmatprep.subr.mxu0 0.0
      %1308 = vmatpush1.msra.mxu0 0.0
      %1309 = vmatprep.subr.mxu0 0.0
      %1310 = vmatpush1.msra.mxu0 0.0
      %1311 = vmatprep.subr.mxu0 0.0
      %1312 = vmatpush1.msra.mxu0 0.0
      %1313 = vmatprep.mubr.f32.mxu0 0.0
      %1314 = vmatmul.mubr.f32.gmra.mrb[0].mxu0 %v1156
      %v1315 = vpop.f32.mrb[0].mxu0
      %v1316 = vadd.f32 %v1247, %v1315
      %v1317 = vpop.f32.mrb[0].mxu0
      %1318 = vmatprep.mubr.f32.mxu0 0.0
      %1319 = vmatmul.mubr.f32.gmra.mrb[0].mxu0 %v1159
      %v1320 = vpop.f32.mrb[0].mxu0
      %v1321 = vadd.f32 %v1247, %v1320
      %v1322 = vpop.f32.mrb[0].mxu0
      %1323 = vdwg.mxu0
      %s1324 = scalar_lea.vmem %s3, 64
      %v1325 = vld [vmem:[%s1324] sm:$0xff]
      %v1326 = vld [vmem:[%s1324 + $0x8] sm:$0xff]
      %v1327 = vld [vmem:[%s1324 + $0x10] sm:$0xff]
      %v1328 = vld [vmem:[%s1324 + $0x18] sm:$0xff]
      %s1329 = scalar_lea.vmem %s5, 2
      %v1330 = vld [vmem:[%s1329] sm:$0x1]
      %v1332 = vlaneseq
      %v1333 = vshrl.u32 %v1332, 7
      %v1334 = vsub.s32 0, %v1333
      %v1335 = vrot.slane %v1330, %v1334
      %1337 = vmatprep.subr.mxu0 0.0
      %1338 = vmatpush1.msra.mxu0 %v1325
      %1339 = vmatprep.subr.mxu0 0.0
      %1340 = vmatpush1.msra.mxu0 %v1326
      %1341 = vmatprep.subr.mxu0 0.0
      %1342 = vmatpush1.msra.mxu0 %v1327
      %1343 = vmatprep.subr.mxu0 0.0
      %1344 = vmatpush1.msra.mxu0 %v1328
      %1345 = vmatprep.subr.mxu0 0.0
      %1346 = vmatpush1.msra.mxu0 0.0
      %1347 = vmatprep.subr.mxu0 0.0
      %1348 = vmatpush1.msra.mxu0 0.0
      %1349 = vmatprep.subr.mxu0 0.0
      %1350 = vmatpush1.msra.mxu0 0.0
      %1351 = vmatprep.subr.mxu0 0.0
      %1352 = vmatpush1.msra.mxu0 0.0
      %1353 = vmatprep.subr.mxu0 0.0
      %1354 = vmatpush1.msra.mxu0 0.0
      %1355 = vmatprep.subr.mxu0 0.0
      %1356 = vmatpush1.msra.mxu0 0.0
      %1357 = vmatprep.subr.mxu0 0.0
      %1358 = vmatpush1.msra.mxu0 0.0
      %1359 = vmatprep.subr.mxu0 0.0
      %1360 = vmatpush1.msra.mxu0 0.0
      %1361 = vmatprep.subr.mxu0 0.0
      %1362 = vmatpush1.msra.mxu0 0.0
      %1363 = vmatprep.subr.mxu0 0.0
      %1364 = vmatpush1.msra.mxu0 0.0
      %1365 = vmatprep.subr.mxu0 0.0
      %1366 = vmatpush1.msra.mxu0 0.0
      %1367 = vmatprep.subr.mxu0 0.0
      %1368 = vmatpush1.msra.mxu0 0.0
      %1369 = vmatprep.subr.mxu0 0.0
      %1370 = vmatpush1.msra.mxu0 0.0
      %1371 = vmatprep.subr.mxu0 0.0
      %1372 = vmatpush1.msra.mxu0 0.0
      %1373 = vmatprep.subr.mxu0 0.0
      %1374 = vmatpush1.msra.mxu0 0.0
      %1375 = vmatprep.subr.mxu0 0.0
      %1376 = vmatpush1.msra.mxu0 0.0
      %1377 = vmatprep.subr.mxu0 0.0
      %1378 = vmatpush1.msra.mxu0 0.0
      %1379 = vmatprep.subr.mxu0 0.0
      %1380 = vmatpush1.msra.mxu0 0.0
      %1381 = vmatprep.subr.mxu0 0.0
      %1382 = vmatpush1.msra.mxu0 0.0
      %1383 = vmatprep.subr.mxu0 0.0
      %1384 = vmatpush1.msra.mxu0 0.0
      %1385 = vmatprep.subr.mxu0 0.0
      %1386 = vmatpush1.msra.mxu0 0.0
      %1387 = vmatprep.subr.mxu0 0.0
      %1388 = vmatpush1.msra.mxu0 0.0
      %1389 = vmatprep.subr.mxu0 0.0
      %1390 = vmatpush1.msra.mxu0 0.0
      %1391 = vmatprep.subr.mxu0 0.0
      %1392 = vmatpush1.msra.mxu0 0.0
      %1393 = vmatprep.subr.mxu0 0.0
      %1394 = vmatpush1.msra.mxu0 0.0
      %1395 = vmatprep.subr.mxu0 0.0
      %1396 = vmatpush1.msra.mxu0 0.0
      %1397 = vmatprep.subr.mxu0 0.0
      %1398 = vmatpush1.msra.mxu0 0.0
      %1399 = vmatprep.subr.mxu0 0.0
      %1400 = vmatpush1.msra.mxu0 0.0
      %1401 = vmatprep.mubr.f32.mxu0 0.0
      %1402 = vmatmul.mubr.f32.gmra.mrb[0].mxu0 %v1156
      %v1403 = vpop.f32.mrb[0].mxu0
      %v1404 = vadd.f32 %v1335, %v1403
      %v1405 = vpop.f32.mrb[0].mxu0
      %1406 = vmatprep.mubr.f32.mxu0 0.0
      %1407 = vmatmul.mubr.f32.gmra.mrb[0].mxu0 %v1159
      %v1408 = vpop.f32.mrb[0].mxu0
      %v1409 = vadd.f32 %v1335, %v1408
      %v1410 = vpop.f32.mrb[0].mxu0
      %1411 = vdwg.mxu0
      %s1412 = scalar_lea.vmem %s3, 96
      %v1413 = vld [vmem:[%s1412] sm:$0xff]
      %v1414 = vld [vmem:[%s1412 + $0x8] sm:$0xff]
      %v1415 = vld [vmem:[%s1412 + $0x10] sm:$0xff]
      %v1416 = vld [vmem:[%s1412 + $0x18] sm:$0xff]
      %s1417 = scalar_lea.vmem %s5, 3
      %v1418 = vld [vmem:[%s1417] sm:$0x1]
      %v1420 = vlaneseq
      %v1421 = vshrl.u32 %v1420, 7
      %v1422 = vsub.s32 0, %v1421
      %v1423 = vrot.slane %v1418, %v1422
      %1425 = vmatprep.subr.mxu0 0.0
      %1426 = vmatpush1.msra.mxu0 %v1413
      %1427 = vmatprep.subr.mxu0 0.0
      %1428 = vmatpush1.msra.mxu0 %v1414
      %1429 = vmatprep.subr.mxu0 0.0
      %1430 = vmatpush1.msra.mxu0 %v1415
      %1431 = vmatprep.subr.mxu0 0.0
      %1432 = vmatpush1.msra.mxu0 %v1416
      %1433 = vmatprep.subr.mxu0 0.0
      %1434 = vmatpush1.msra.mxu0 0.0
      %1435 = vmatprep.subr.mxu0 0.0
      %1436 = vmatpush1.msra.mxu0 0.0
      %1437 = vmatprep.subr.mxu0 0.0
      %1438 = vmatpush1.msra.mxu0 0.0
      %1439 = vmatprep.subr.mxu0 0.0
      %1440 = vmatpush1.msra.mxu0 0.0
      %1441 = vmatprep.subr.mxu0 0.0
      %1442 = vmatpush1.msra.mxu0 0.0
      %1443 = vmatprep.subr.mxu0 0.0
      %1444 = vmatpush1.msra.mxu0 0.0
      %1445 = vmatprep.subr.mxu0 0.0
      %1446 = vmatpush1.msra.mxu0 0.0
      %1447 = vmatprep.subr.mxu0 0.0
      %1448 = vmatpush1.msra.mxu0 0.0
      %1449 = vmatprep.subr.mxu0 0.0
      %1450 = vmatpush1.msra.mxu0 0.0
      %1451 = vmatprep.subr.mxu0 0.0
      %1452 = vmatpush1.msra.mxu0 0.0
      %1453 = vmatprep.subr.mxu0 0.0
      %1454 = vmatpush1.msra.mxu0 0.0
      %1455 = vmatprep.subr.mxu0 0.0
      %1456 = vmatpush1.msra.mxu0 0.0
      %1457 = vmatprep.subr.mxu0 0.0
      %1458 = vmatpush1.msra.mxu0 0.0
      %1459 = vmatprep.subr.mxu0 0.0
      %1460 = vmatpush1.msra.mxu0 0.0
      %1461 = vmatprep.subr.mxu0 0.0
      %1462 = vmatpush1.msra.mxu0 0.0
      %1463 = vmatprep.subr.mxu0 0.0
      %1464 = vmatpush1.msra.mxu0 0.0
      %1465 = vmatprep.subr.mxu0 0.0
      %1466 = vmatpush1.msra.mxu0 0.0
      %1467 = vmatprep.subr.mxu0 0.0
      %1468 = vmatpush1.msra.mxu0 0.0
      %1469 = vmatprep.subr.mxu0 0.0
      %1470 = vmatpush1.msra.mxu0 0.0
      %1471 = vmatprep.subr.mxu0 0.0
      %1472 = vmatpush1.msra.mxu0 0.0
      %1473 = vmatprep.subr.mxu0 0.0
      %1474 = vmatpush1.msra.mxu0 0.0
      %1475 = vmatprep.subr.mxu0 0.0
      %1476 = vmatpush1.msra.mxu0 0.0
      %1477 = vmatprep.subr.mxu0 0.0
      %1478 = vmatpush1.msra.mxu0 0.0
      %1479 = vmatprep.subr.mxu0 0.0
      %1480 = vmatpush1.msra.mxu0 0.0
      %1481 = vmatprep.subr.mxu0 0.0
      %1482 = vmatpush1.msra.mxu0 0.0
      %1483 = vmatprep.subr.mxu0 0.0
      %1484 = vmatpush1.msra.mxu0 0.0
      %1485 = vmatprep.subr.mxu0 0.0
      %1486 = vmatpush1.msra.mxu0 0.0
      %1487 = vmatprep.subr.mxu0 0.0
      %1488 = vmatpush1.msra.mxu0 0.0
      %1489 = vmatprep.mubr.f32.mxu0 0.0
      %1490 = vmatmul.mubr.f32.gmra.mrb[0].mxu0 %v1156
      %v1491 = vpop.f32.mrb[0].mxu0
      %v1492 = vadd.f32 %v1423, %v1491
      %v1493 = vpop.f32.mrb[0].mxu0
      %1494 = vmatprep.mubr.f32.mxu0 0.0
      %1495 = vmatmul.mubr.f32.gmra.mrb[0].mxu0 %v1159
      %v1496 = vpop.f32.mrb[0].mxu0
      %v1497 = vadd.f32 %v1423, %v1496
      %v1498 = vpop.f32.mrb[0].mxu0
      %1499 = vdwg.mxu0
      %s1500 = scalar_lea.vmem %s3, 128
      %v1501 = vld [vmem:[%s1500] sm:$0xff]
      %v1502 = vld [vmem:[%s1500 + $0x8] sm:$0xff]
      %v1503 = vld [vmem:[%s1500 + $0x10] sm:$0xff]
      %v1504 = vld [vmem:[%s1500 + $0x18] sm:$0xff]
      %s1505 = scalar_lea.vmem %s5, 4
      %v1506 = vld [vmem:[%s1505] sm:$0x1]
      %v1508 = vlaneseq
      %v1509 = vshrl.u32 %v1508, 7
      %v1510 = vsub.s32 0, %v1509
      %v1511 = vrot.slane %v1506, %v1510
      %1513 = vmatprep.subr.mxu0 0.0
      %1514 = vmatpush1.msra.mxu0 %v1501
      %1515 = vmatprep.subr.mxu0 0.0
      %1516 = vmatpush1.msra.mxu0 %v1502
      %1517 = vmatprep.subr.mxu0 0.0
      %1518 = vmatpush1.msra.mxu0 %v1503
      %1519 = vmatprep.subr.mxu0 0.0
      %1520 = vmatpush1.msra.mxu0 %v1504
      %1521 = vmatprep.subr.mxu0 0.0
      %1522 = vmatpush1.msra.mxu0 0.0
      %1523 = vmatprep.subr.mxu0 0.0
      %1524 = vmatpush1.msra.mxu0 0.0
      %1525 = vmatprep.subr.mxu0 0.0
      %1526 = vmatpush1.msra.mxu0 0.0
      %1527 = vmatprep.subr.mxu0 0.0
      %1528 = vmatpush1.msra.mxu0 0.0
      %1529 = vmatprep.subr.mxu0 0.0
      %1530 = vmatpush1.msra.mxu0 0.0
      %1531 = vmatprep.subr.mxu0 0.0
      %1532 = vmatpush1.msra.mxu0 0.0
      %1533 = vmatprep.subr.mxu0 0.0
      %1534 = vmatpush1.msra.mxu0 0.0
      %1535 = vmatprep.subr.mxu0 0.0
      %1536 = vmatpush1.msra.mxu0 0.0
      %1537 = vmatprep.subr.mxu0 0.0
      %1538 = vmatpush1.msra.mxu0 0.0
      %1539 = vmatprep.subr.mxu0 0.0
      %1540 = vmatpush1.msra.mxu0 0.0
      %1541 = vmatprep.subr.mxu0 0.0
      %1542 = vmatpush1.msra.mxu0 0.0
      %1543 = vmatprep.subr.mxu0 0.0
      %1544 = vmatpush1.msra.mxu0 0.0
      %1545 = vmatprep.subr.mxu0 0.0
      %1546 = vmatpush1.msra.mxu0 0.0
      %1547 = vmatprep.subr.mxu0 0.0
      %1548 = vmatpush1.msra.mxu0 0.0
      %1549 = vmatprep.subr.mxu0 0.0
      %1550 = vmatpush1.msra.mxu0 0.0
      %1551 = vmatprep.subr.mxu0 0.0
      %1552 = vmatpush1.msra.mxu0 0.0
      %1553 = vmatprep.subr.mxu0 0.0
      %1554 = vmatpush1.msra.mxu0 0.0
      %1555 = vmatprep.subr.mxu0 0.0
      %1556 = vmatpush1.msra.mxu0 0.0
      %1557 = vmatprep.subr.mxu0 0.0
      %1558 = vmatpush1.msra.mxu0 0.0
      %1559 = vmatprep.subr.mxu0 0.0
      %1560 = vmatpush1.msra.mxu0 0.0
      %1561 = vmatprep.subr.mxu0 0.0
      %1562 = vmatpush1.msra.mxu0 0.0
      %1563 = vmatprep.subr.mxu0 0.0
      %1564 = vmatpush1.msra.mxu0 0.0
      %1565 = vmatprep.subr.mxu0 0.0
      %1566 = vmatpush1.msra.mxu0 0.0
      %1567 = vmatprep.subr.mxu0 0.0
      %1568 = vmatpush1.msra.mxu0 0.0
      %1569 = vmatprep.subr.mxu0 0.0
      %1570 = vmatpush1.msra.mxu0 0.0
      %1571 = vmatprep.subr.mxu0 0.0
      %1572 = vmatpush1.msra.mxu0 0.0
      %1573 = vmatprep.subr.mxu0 0.0
      %1574 = vmatpush1.msra.mxu0 0.0
      %1575 = vmatprep.subr.mxu0 0.0
      %1576 = vmatpush1.msra.mxu0 0.0
      %1577 = vmatprep.mubr.f32.mxu0 0.0
      %1578 = vmatmul.mubr.f32.gmra.mrb[0].mxu0 %v1156
      %v1579 = vpop.f32.mrb[0].mxu0
      %v1580 = vadd.f32 %v1511, %v1579
      %v1581 = vpop.f32.mrb[0].mxu0
      %1582 = vmatprep.mubr.f32.mxu0 0.0
      %1583 = vmatmul.mubr.f32.gmra.mrb[0].mxu0 %v1159
      %v1584 = vpop.f32.mrb[0].mxu0
      %v1585 = vadd.f32 %v1511, %v1584
      %v1586 = vpop.f32.mrb[0].mxu0
      %1587 = vdwg.mxu0
      %s1588 = scalar_lea.vmem %s3, 160
      %v1589 = vld [vmem:[%s1588] sm:$0xff]
      %v1590 = vld [vmem:[%s1588 + $0x8] sm:$0xff]
      %v1591 = vld [vmem:[%s1588 + $0x10] sm:$0xff]
      %v1592 = vld [vmem:[%s1588 + $0x18] sm:$0xff]
      %s1593 = scalar_lea.vmem %s5, 5
      %v1594 = vld [vmem:[%s1593] sm:$0x1]
      %v1596 = vlaneseq
      %v1597 = vshrl.u32 %v1596, 7
      %v1598 = vsub.s32 0, %v1597
      %v1599 = vrot.slane %v1594, %v1598
      %1601 = vmatprep.subr.mxu0 0.0
      %1602 = vmatpush1.msra.mxu0 %v1589
      %1603 = vmatprep.subr.mxu0 0.0
      %1604 = vmatpush1.msra.mxu0 %v1590
      %1605 = vmatprep.subr.mxu0 0.0
      %1606 = vmatpush1.msra.mxu0 %v1591
      %1607 = vmatprep.subr.mxu0 0.0
      %1608 = vmatpush1.msra.mxu0 %v1592
      %1609 = vmatprep.subr.mxu0 0.0
      %1610 = vmatpush1.msra.mxu0 0.0
      %1611 = vmatprep.subr.mxu0 0.0
      %1612 = vmatpush1.msra.mxu0 0.0
      %1613 = vmatprep.subr.mxu0 0.0
      %1614 = vmatpush1.msra.mxu0 0.0
      %1615 = vmatprep.subr.mxu0 0.0
      %1616 = vmatpush1.msra.mxu0 0.0
      %1617 = vmatprep.subr.mxu0 0.0
      %1618 = vmatpush1.msra.mxu0 0.0
      %1619 = vmatprep.subr.mxu0 0.0
      %1620 = vmatpush1.msra.mxu0 0.0
      %1621 = vmatprep.subr.mxu0 0.0
      %1622 = vmatpush1.msra.mxu0 0.0
      %1623 = vmatprep.subr.mxu0 0.0
      %1624 = vmatpush1.msra.mxu0 0.0
      %1625 = vmatprep.subr.mxu0 0.0
      %1626 = vmatpush1.msra.mxu0 0.0
      %1627 = vmatprep.subr.mxu0 0.0
      %1628 = vmatpush1.msra.mxu0 0.0
      %1629 = vmatprep.subr.mxu0 0.0
      %1630 = vmatpush1.msra.mxu0 0.0
      %1631 = vmatprep.subr.mxu0 0.0
      %1632 = vmatpush1.msra.mxu0 0.0
      %1633 = vmatprep.subr.mxu0 0.0
      %1634 = vmatpush1.msra.mxu0 0.0
      %1635 = vmatprep.subr.mxu0 0.0
      %1636 = vmatpush1.msra.mxu0 0.0
      %1637 = vmatprep.subr.mxu0 0.0
      %1638 = vmatpush1.msra.mxu0 0.0
      %1639 = vmatprep.subr.mxu0 0.0
      %1640 = vmatpush1.msra.mxu0 0.0
      %1641 = vmatprep.subr.mxu0 0.0
      %1642 = vmatpush1.msra.mxu0 0.0
      %1643 = vmatprep.subr.mxu0 0.0
      %1644 = vmatpush1.msra.mxu0 0.0
      %1645 = vmatprep.subr.mxu0 0.0
      %1646 = vmatpush1.msra.mxu0 0.0
      %1647 = vmatprep.subr.mxu0 0.0
      %1648 = vmatpush1.msra.mxu0 0.0
      %1649 = vmatprep.subr.mxu0 0.0
      %1650 = vmatpush1.msra.mxu0 0.0
      %1651 = vmatprep.subr.mxu0 0.0
      %1652 = vmatpush1.msra.mxu0 0.0
      %1653 = vmatprep.subr.mxu0 0.0
      %1654 = vmatpush1.msra.mxu0 0.0
      %1655 = vmatprep.subr.mxu0 0.0
      %1656 = vmatpush1.msra.mxu0 0.0
      %1657 = vmatprep.subr.mxu0 0.0
      %1658 = vmatpush1.msra.mxu0 0.0
      %1659 = vmatprep.subr.mxu0 0.0
      %1660 = vmatpush1.msra.mxu0 0.0
      %1661 = vmatprep.subr.mxu0 0.0
      %1662 = vmatpush1.msra.mxu0 0.0
      %1663 = vmatprep.subr.mxu0 0.0
      %1664 = vmatpush1.msra.mxu0 0.0
      %1665 = vmatprep.mubr.f32.mxu0 0.0
      %1666 = vmatmul.mubr.f32.gmra.mrb[0].mxu0 %v1156
      %v1667 = vpop.f32.mrb[0].mxu0
      %v1668 = vadd.f32 %v1599, %v1667
      %v1669 = vpop.f32.mrb[0].mxu0
      %1670 = vmatprep.mubr.f32.mxu0 0.0
      %1671 = vmatmul.mubr.f32.gmra.mrb[0].mxu0 %v1159
      %v1672 = vpop.f32.mrb[0].mxu0
      %v1673 = vadd.f32 %v1599, %v1672
      %v1674 = vpop.f32.mrb[0].mxu0
      %1675 = vdwg.mxu0
      %v1676 = vld [vmem:[%s4] sm:$0xff]
      %v1677 = vld [vmem:[%s4 + $0x8] sm:$0xff]
      %s1678 = scalar_lea.vmem %s4, 16
      %v1679 = vld [vmem:[%s1678] sm:$0xff]
      %v1680 = vld [vmem:[%s1678 + $0x8] sm:$0xff]
      %s1681 = scalar_lea.vmem %s4, 32
      %v1682 = vld [vmem:[%s1681] sm:$0xff]
      %v1683 = vld [vmem:[%s1681 + $0x8] sm:$0xff]
      %s1684 = scalar_lea.vmem %s4, 48
      %v1685 = vld [vmem:[%s1684] sm:$0xff]
      %v1686 = vld [vmem:[%s1684 + $0x8] sm:$0xff]
      %s1687 = scalar_lea.vmem %s4, 64
      %v1688 = vld [vmem:[%s1687] sm:$0xff]
      %v1689 = vld [vmem:[%s1687 + $0x8] sm:$0xff]
      %s1690 = scalar_lea.vmem %s4, 80
      %v1691 = vld [vmem:[%s1690] sm:$0xff]
      %v1692 = vld [vmem:[%s1690 + $0x8] sm:$0xff]
      %v1693 = vld [vmem:[%s6] sm:$0x1]
      %s1694 = scalar_lea.vmem %s6, 1
      %v1695 = vld [vmem:[%s1694] sm:$0x1]
      %s1696 = scalar_lea.vmem %s6, 2
      %v1697 = vld [vmem:[%s1696] sm:$0x1]
      %s1698 = scalar_lea.vmem %s6, 3
      %v1699 = vld [vmem:[%s1698] sm:$0x1]
      %s1700 = scalar_lea.vmem %s6, 4
      %v1701 = vld [vmem:[%s1700] sm:$0x1]
      %s1702 = scalar_lea.vmem %s6, 5
      %v1703 = vld [vmem:[%s1702] sm:$0x1]
      %v1705 = vlaneseq
      %v1706 = vshrl.u32 %v1705, 7
      %v1707 = vsub.s32 0, %v1706
      %v1708 = vrot.slane %v1693, %v1707
      %vm1710 = vcmask 130048
      %v1712 = vsel %vm1710, 0.0, 0
      %1714 = vmatprep.subr.mxu0 0.0
      %1715 = vmatpush1.msra.mxu0 %v1676
      %1716 = vmatprep.subr.mxu0 0.0
      %1717 = vmatpush1.msra.mxu0 %v1677
      %1718 = vmatprep.subr.mxu0 0.0
      %1719 = vmatpush1.msra.mxu0 0.0
      %1720 = vmatprep.subr.mxu0 0.0
      %1721 = vmatpush1.msra.mxu0 0.0
      %1722 = vmatprep.subr.mxu0 0.0
      %1723 = vmatpush1.msra.mxu0 0.0
      %1724 = vmatprep.subr.mxu0 0.0
      %1725 = vmatpush1.msra.mxu0 0.0
      %1726 = vmatprep.subr.mxu0 0.0
      %1727 = vmatpush1.msra.mxu0 0.0
      %1728 = vmatprep.subr.mxu0 0.0
      %1729 = vmatpush1.msra.mxu0 0.0
      %1730 = vmatprep.subr.mxu0 0.0
      %1731 = vmatpush1.msra.mxu0 0.0
      %1732 = vmatprep.subr.mxu0 0.0
      %1733 = vmatpush1.msra.mxu0 0.0
      %1734 = vmatprep.subr.mxu0 0.0
      %1735 = vmatpush1.msra.mxu0 0.0
      %1736 = vmatprep.subr.mxu0 0.0
      %1737 = vmatpush1.msra.mxu0 0.0
      %1738 = vmatprep.subr.mxu0 0.0
      %1739 = vmatpush1.msra.mxu0 0.0
      %1740 = vmatprep.subr.mxu0 0.0
      %1741 = vmatpush1.msra.mxu0 0.0
      %1742 = vmatprep.subr.mxu0 0.0
      %1743 = vmatpush1.msra.mxu0 0.0
      %1744 = vmatprep.subr.mxu0 0.0
      %1745 = vmatpush1.msra.mxu0 0.0
      %1746 = vmatprep.subr.mxu0 0.0
      %1747 = vmatpush1.msra.mxu0 0.0
      %1748 = vmatprep.subr.mxu0 0.0
      %1749 = vmatpush1.msra.mxu0 0.0
      %1750 = vmatprep.subr.mxu0 0.0
      %1751 = vmatpush1.msra.mxu0 0.0
      %1752 = vmatprep.subr.mxu0 0.0
      %1753 = vmatpush1.msra.mxu0 0.0
      %1754 = vmatprep.subr.mxu0 0.0
      %1755 = vmatpush1.msra.mxu0 0.0
      %1756 = vmatprep.subr.mxu0 0.0
      %1757 = vmatpush1.msra.mxu0 0.0
      %1758 = vmatprep.subr.mxu0 0.0
      %1759 = vmatpush1.msra.mxu0 0.0
      %1760 = vmatprep.subr.mxu0 0.0
      %1761 = vmatpush1.msra.mxu0 0.0
      %1762 = vmatprep.subr.mxu0 0.0
      %1763 = vmatpush1.msra.mxu0 0.0
      %1764 = vmatprep.subr.mxu0 0.0
      %1765 = vmatpush1.msra.mxu0 0.0
      %1766 = vmatprep.subr.mxu0 0.0
      %1767 = vmatpush1.msra.mxu0 0.0
      %1768 = vmatprep.subr.mxu0 0.0
      %1769 = vmatpush1.msra.mxu0 0.0
      %1770 = vmatprep.subr.mxu0 0.0
      %1771 = vmatpush1.msra.mxu0 0.0
      %1772 = vmatprep.subr.mxu0 0.0
      %1773 = vmatpush1.msra.mxu0 0.0
      %1774 = vmatprep.subr.mxu0 0.0
      %1775 = vmatpush1.msra.mxu0 0.0
      %1776 = vmatprep.subr.mxu0 0.0
      %1777 = vmatpush1.msra.mxu0 0.0
      %1778 = vmatprep.mubr.f32.mxu0 0.0
      %1779 = vmatmul.mubr.f32.gmra.mrb[0].mxu0 %v1712
      %v1780 = vpop.f32.mrb[0].mxu0
      %v1781 = vadd.f32 %v1708, %v1780
      %v1782 = vpop.f32.mrb[0].mxu0
      %1783 = vdwg.mxu0
      %v1785 = vlaneseq
      %v1786 = vshrl.u32 %v1785, 7
      %v1787 = vsub.s32 0, %v1786
      %v1788 = vrot.slane %v1695, %v1787
      %1790 = vmatprep.subr.mxu0 0.0
      %1791 = vmatpush1.msra.mxu0 %v1679
      %1792 = vmatprep.subr.mxu0 0.0
      %1793 = vmatpush1.msra.mxu0 %v1680
      %1794 = vmatprep.subr.mxu0 0.0
      %1795 = vmatpush1.msra.mxu0 0.0
      %1796 = vmatprep.subr.mxu0 0.0
      %1797 = vmatpush1.msra.mxu0 0.0
      %1798 = vmatprep.subr.mxu0 0.0
      %1799 = vmatpush1.msra.mxu0 0.0
      %1800 = vmatprep.subr.mxu0 0.0
      %1801 = vmatpush1.msra.mxu0 0.0
      %1802 = vmatprep.subr.mxu0 0.0
      %1803 = vmatpush1.msra.mxu0 0.0
      %1804 = vmatprep.subr.mxu0 0.0
      %1805 = vmatpush1.msra.mxu0 0.0
      %1806 = vmatprep.subr.mxu0 0.0
      %1807 = vmatpush1.msra.mxu0 0.0
      %1808 = vmatprep.subr.mxu0 0.0
      %1809 = vmatpush1.msra.mxu0 0.0
      %1810 = vmatprep.subr.mxu0 0.0
      %1811 = vmatpush1.msra.mxu0 0.0
      %1812 = vmatprep.subr.mxu0 0.0
      %1813 = vmatpush1.msra.mxu0 0.0
      %1814 = vmatprep.subr.mxu0 0.0
      %1815 = vmatpush1.msra.mxu0 0.0
      %1816 = vmatprep.subr.mxu0 0.0
      %1817 = vmatpush1.msra.mxu0 0.0
      %1818 = vmatprep.subr.mxu0 0.0
      %1819 = vmatpush1.msra.mxu0 0.0
      %1820 = vmatprep.subr.mxu0 0.0
      %1821 = vmatpush1.msra.mxu0 0.0
      %1822 = vmatprep.subr.mxu0 0.0
      %1823 = vmatpush1.msra.mxu0 0.0
      %1824 = vmatprep.subr.mxu0 0.0
      %1825 = vmatpush1.msra.mxu0 0.0
      %1826 = vmatprep.subr.mxu0 0.0
      %1827 = vmatpush1.msra.mxu0 0.0
      %1828 = vmatprep.subr.mxu0 0.0
      %1829 = vmatpush1.msra.mxu0 0.0
      %1830 = vmatprep.subr.mxu0 0.0
      %1831 = vmatpush1.msra.mxu0 0.0
      %1832 = vmatprep.subr.mxu0 0.0
      %1833 = vmatpush1.msra.mxu0 0.0
      %1834 = vmatprep.subr.mxu0 0.0
      %1835 = vmatpush1.msra.mxu0 0.0
      %1836 = vmatprep.subr.mxu0 0.0
      %1837 = vmatpush1.msra.mxu0 0.0
      %1838 = vmatprep.subr.mxu0 0.0
      %1839 = vmatpush1.msra.mxu0 0.0
      %1840 = vmatprep.subr.mxu0 0.0
      %1841 = vmatpush1.msra.mxu0 0.0
      %1842 = vmatprep.subr.mxu0 0.0
      %1843 = vmatpush1.msra.mxu0 0.0
      %1844 = vmatprep.subr.mxu0 0.0
      %1845 = vmatpush1.msra.mxu0 0.0
      %1846 = vmatprep.subr.mxu0 0.0
      %1847 = vmatpush1.msra.mxu0 0.0
      %1848 = vmatprep.subr.mxu0 0.0
      %1849 = vmatpush1.msra.mxu0 0.0
      %1850 = vmatprep.subr.mxu0 0.0
      %1851 = vmatpush1.msra.mxu0 0.0
      %1852 = vmatprep.subr.mxu0 0.0
      %1853 = vmatpush1.msra.mxu0 0.0
      %1854 = vmatprep.mubr.f32.mxu0 0.0
      %1855 = vmatmul.mubr.f32.gmra.mrb[0].mxu0 %v1712
      %v1856 = vpop.f32.mrb[0].mxu0
      %v1857 = vadd.f32 %v1788, %v1856
      %v1858 = vpop.f32.mrb[0].mxu0
      %1859 = vdwg.mxu0
      %v1861 = vlaneseq
      %v1862 = vshrl.u32 %v1861, 7
      %v1863 = vsub.s32 0, %v1862
      %v1864 = vrot.slane %v1697, %v1863
      %1866 = vmatprep.subr.mxu0 0.0
      %1867 = vmatpush1.msra.mxu0 %v1682
      %1868 = vmatprep.subr.mxu0 0.0
      %1869 = vmatpush1.msra.mxu0 %v1683
      %1870 = vmatprep.subr.mxu0 0.0
      %1871 = vmatpush1.msra.mxu0 0.0
      %1872 = vmatprep.subr.mxu0 0.0
      %1873 = vmatpush1.msra.mxu0 0.0
      %1874 = vmatprep.subr.mxu0 0.0
      %1875 = vmatpush1.msra.mxu0 0.0
      %1876 = vmatprep.subr.mxu0 0.0
      %1877 = vmatpush1.msra.mxu0 0.0
      %1878 = vmatprep.subr.mxu0 0.0
      %1879 = vmatpush1.msra.mxu0 0.0
      %1880 = vmatprep.subr.mxu0 0.0
      %1881 = vmatpush1.msra.mxu0 0.0
      %1882 = vmatprep.subr.mxu0 0.0
      %1883 = vmatpush1.msra.mxu0 0.0
      %1884 = vmatprep.subr.mxu0 0.0
      %1885 = vmatpush1.msra.mxu0 0.0
      %1886 = vmatprep.subr.mxu0 0.0
      %1887 = vmatpush1.msra.mxu0 0.0
      %1888 = vmatprep.subr.mxu0 0.0
      %1889 = vmatpush1.msra.mxu0 0.0
      %1890 = vmatprep.subr.mxu0 0.0
      %1891 = vmatpush1.msra.mxu0 0.0
      %1892 = vmatprep.subr.mxu0 0.0
      %1893 = vmatpush1.msra.mxu0 0.0
      %1894 = vmatprep.subr.mxu0 0.0
      %1895 = vmatpush1.msra.mxu0 0.0
      %1896 = vmatprep.subr.mxu0 0.0
      %1897 = vmatpush1.msra.mxu0 0.0
      %1898 = vmatprep.subr.mxu0 0.0
      %1899 = vmatpush1.msra.mxu0 0.0
      %1900 = vmatprep.subr.mxu0 0.0
      %1901 = vmatpush1.msra.mxu0 0.0
      %1902 = vmatprep.subr.mxu0 0.0
      %1903 = vmatpush1.msra.mxu0 0.0
      %1904 = vmatprep.subr.mxu0 0.0
      %1905 = vmatpush1.msra.mxu0 0.0
      %1906 = vmatprep.subr.mxu0 0.0
      %1907 = vmatpush1.msra.mxu0 0.0
      %1908 = vmatprep.subr.mxu0 0.0
      %1909 = vmatpush1.msra.mxu0 0.0
      %1910 = vmatprep.subr.mxu0 0.0
      %1911 = vmatpush1.msra.mxu0 0.0
      %1912 = vmatprep.subr.mxu0 0.0
      %1913 = vmatpush1.msra.mxu0 0.0
      %1914 = vmatprep.subr.mxu0 0.0
      %1915 = vmatpush1.msra.mxu0 0.0
      %1916 = vmatprep.subr.mxu0 0.0
      %1917 = vmatpush1.msra.mxu0 0.0
      %1918 = vmatprep.subr.mxu0 0.0
      %1919 = vmatpush1.msra.mxu0 0.0
      %1920 = vmatprep.subr.mxu0 0.0
      %1921 = vmatpush1.msra.mxu0 0.0
      %1922 = vmatprep.subr.mxu0 0.0
      %1923 = vmatpush1.msra.mxu0 0.0
      %1924 = vmatprep.subr.mxu0 0.0
      %1925 = vmatpush1.msra.mxu0 0.0
      %1926 = vmatprep.subr.mxu0 0.0
      %1927 = vmatpush1.msra.mxu0 0.0
      %1928 = vmatprep.subr.mxu0 0.0
      %1929 = vmatpush1.msra.mxu0 0.0
      %1930 = vmatprep.mubr.f32.mxu0 0.0
      %1931 = vmatmul.mubr.f32.gmra.mrb[0].mxu0 %v1712
      %v1932 = vpop.f32.mrb[0].mxu0
      %v1933 = vadd.f32 %v1864, %v1932
      %v1934 = vpop.f32.mrb[0].mxu0
      %1935 = vdwg.mxu0
      %v1936 = vadd.f32 %v1228, %v1781
      %v1937 = vxor.u32 %v1936, 2147483648
      %v1938 = vmul.f32 %v1937, 1.442695
      %v1939 = vpow.pop %v1938
      %v1940 = vadd.f32 %v1939, 1.0
      %v1941 = vrcp.pop %v1940
      %v1942 = vmul.f32 1.0, %v1941
      %v1943 = vadd.f32 %v1316, %v1857
      %v1944 = vxor.u32 %v1943, 2147483648
      %v1945 = vmul.f32 %v1944, 1.442695
      %v1946 = vpow.pop %v1945
      %v1947 = vadd.f32 %v1946, 1.0
      %v1948 = vrcp.pop %v1947
      %v1949 = vmul.f32 1.0, %v1948
      %v1950 = vmul.f32 %v1942, %v1933
      %v1951 = vadd.f32 %v1404, %v1950
      %v1952 = vtanh.pop %v1951
      %v1953 = vsub.f32 1.0, %v1949
      %v1954 = vmul.f32 %v1953, %v1952
      %v1955 = vmul.f32 %v1949, 0.0
      %v1956 = vadd.f32 %v1954, %v1955
      %vm1957 = vcmp.gt.s32.totalorder %v1140, 0
      %v1958 = vsel %vm1957, 1, 0
      %1959 = vset.pattern.permute.xlu0 0
      %1960 = vperm.xlu0 %1959, %v1958
      %v1961 = vpop.permute.xlu0 %1960
      %vm1962 = vcmp.eq.s32.totalorder %v1961, 1
      %v1963 = vsel %vm1962, %v1956, 0.0
      %v1964 = vadd.f32 %v1963, 0.0
      %v1966 = vsel %vm1710, %v1956, 0
      %1968 = vmatprep.subr.mxu0 0.0
      %1969 = vmatpush1.msra.mxu0 %v1676
      %1970 = vmatprep.subr.mxu0 0.0
      %1971 = vmatpush1.msra.mxu0 %v1677
      %1972 = vmatprep.subr.mxu0 0.0
      %1973 = vmatpush1.msra.mxu0 0.0
      %1974 = vmatprep.subr.mxu0 0.0
      %1975 = vmatpush1.msra.mxu0 0.0
      %1976 = vmatprep.subr.mxu0 0.0
      %1977 = vmatpush1.msra.mxu0 0.0
      %1978 = vmatprep.subr.mxu0 0.0
      %1979 = vmatpush1.msra.mxu0 0.0
      %1980 = vmatprep.subr.mxu0 0.0
      %1981 = vmatpush1.msra.mxu0 0.0
      %1982 = vmatprep.subr.mxu0 0.0
      %1983 = vmatpush1.msra.mxu0 0.0
      %1984 = vmatprep.subr.mxu0 0.0
      %1985 = vmatpush1.msra.mxu0 0.0
      %1986 = vmatprep.subr.mxu0 0.0
      %1987 = vmatpush1.msra.mxu0 0.0
      %1988 = vmatprep.subr.mxu0 0.0
      %1989 = vmatpush1.msra.mxu0 0.0
      %1990 = vmatprep.subr.mxu0 0.0
      %1991 = vmatpush1.msra.mxu0 0.0
      %1992 = vmatprep.subr.mxu0 0.0
      %1993 = vmatpush1.msra.mxu0 0.0
      %1994 = vmatprep.subr.mxu0 0.0
      %1995 = vmatpush1.msra.mxu0 0.0
      %1996 = vmatprep.subr.mxu0 0.0
      %1997 = vmatpush1.msra.mxu0 0.0
      %1998 = vmatprep.subr.mxu0 0.0
      %1999 = vmatpush1.msra.mxu0 0.0
      %2000 = vmatprep.subr.mxu0 0.0
      %2001 = vmatpush1.msra.mxu0 0.0
      %2002 = vmatprep.subr.mxu0 0.0
      %2003 = vmatpush1.msra.mxu0 0.0
      %2004 = vmatprep.subr.mxu0 0.0
      %2005 = vmatpush1.msra.mxu0 0.0
      %2006 = vmatprep.subr.mxu0 0.0
      %2007 = vmatpush1.msra.mxu0 0.0
      %2008 = vmatprep.subr.mxu0 0.0
      %2009 = vmatpush1.msra.mxu0 0.0
      %2010 = vmatprep.subr.mxu0 0.0
      %2011 = vmatpush1.msra.mxu0 0.0
      %2012 = vmatprep.subr.mxu0 0.0
      %2013 = vmatpush1.msra.mxu0 0.0
      %2014 = vmatprep.subr.mxu0 0.0
      %2015 = vmatpush1.msra.mxu0 0.0
      %2016 = vmatprep.subr.mxu0 0.0
      %2017 = vmatpush1.msra.mxu0 0.0
      %2018 = vmatprep.subr.mxu0 0.0
      %2019 = vmatpush1.msra.mxu0 0.0
      %2020 = vmatprep.subr.mxu0 0.0
      %2021 = vmatpush1.msra.mxu0 0.0
      %2022 = vmatprep.subr.mxu0 0.0
      %2023 = vmatpush1.msra.mxu0 0.0
      %2024 = vmatprep.subr.mxu0 0.0
      %2025 = vmatpush1.msra.mxu0 0.0
      %2026 = vmatprep.subr.mxu0 0.0
      %2027 = vmatpush1.msra.mxu0 0.0
      %2028 = vmatprep.subr.mxu0 0.0
      %2029 = vmatpush1.msra.mxu0 0.0
      %2030 = vmatprep.subr.mxu0 0.0
      %2031 = vmatpush1.msra.mxu0 0.0
      %2032 = vmatprep.mubr.f32.mxu0 0.0
      %2033 = vmatmul.mubr.f32.gmra.mrb[0].mxu0 %v1966
      %v2034 = vpop.f32.mrb[0].mxu0
      %v2035 = vadd.f32 %v1708, %v2034
      %v2036 = vpop.f32.mrb[0].mxu0
      %2037 = vdwg.mxu0
      %2038 = vmatprep.subr.mxu0 0.0
      %2039 = vmatpush1.msra.mxu0 %v1679
      %2040 = vmatprep.subr.mxu0 0.0
      %2041 = vmatpush1.msra.mxu0 %v1680
      %2042 = vmatprep.subr.mxu0 0.0
      %2043 = vmatpush1.msra.mxu0 0.0
      %2044 = vmatprep.subr.mxu0 0.0
      %2045 = vmatpush1.msra.mxu0 0.0
      %2046 = vmatprep.subr.mxu0 0.0
      %2047 = vmatpush1.msra.mxu0 0.0
      %2048 = vmatprep.subr.mxu0 0.0
      %2049 = vmatpush1.msra.mxu0 0.0
      %2050 = vmatprep.subr.mxu0 0.0
      %2051 = vmatpush1.msra.mxu0 0.0
      %2052 = vmatprep.subr.mxu0 0.0
      %2053 = vmatpush1.msra.mxu0 0.0
      %2054 = vmatprep.subr.mxu0 0.0
      %2055 = vmatpush1.msra.mxu0 0.0
      %2056 = vmatprep.subr.mxu0 0.0
      %2057 = vmatpush1.msra.mxu0 0.0
      %2058 = vmatprep.subr.mxu0 0.0
      %2059 = vmatpush1.msra.mxu0 0.0
      %2060 = vmatprep.subr.mxu0 0.0
      %2061 = vmatpush1.msra.mxu0 0.0
      %2062 = vmatprep.subr.mxu0 0.0
      %2063 = vmatpush1.msra.mxu0 0.0
      %2064 = vmatprep.subr.mxu0 0.0
      %2065 = vmatpush1.msra.mxu0 0.0
      %2066 = vmatprep.subr.mxu0 0.0
      %2067 = vmatpush1.msra.mxu0 0.0
      %2068 = vmatprep.subr.mxu0 0.0
      %2069 = vmatpush1.msra.mxu0 0.0
      %2070 = vmatprep.subr.mxu0 0.0
      %2071 = vmatpush1.msra.mxu0 0.0
      %2072 = vmatprep.subr.mxu0 0.0
      %2073 = vmatpush1.msra.mxu0 0.0
      %2074 = vmatprep.subr.mxu0 0.0
      %2075 = vmatpush1.msra.mxu0 0.0
      %2076 = vmatprep.subr.mxu0 0.0
      %2077 = vmatpush1.msra.mxu0 0.0
      %2078 = vmatprep.subr.mxu0 0.0
      %2079 = vmatpush1.msra.mxu0 0.0
      %2080 = vmatprep.subr.mxu0 0.0
      %2081 = vmatpush1.msra.mxu0 0.0
      %2082 = vmatprep.subr.mxu0 0.0
      %2083 = vmatpush1.msra.mxu0 0.0
      %2084 = vmatprep.subr.mxu0 0.0
      %2085 = vmatpush1.msra.mxu0 0.0
      %2086 = vmatprep.subr.mxu0 0.0
      %2087 = vmatpush1.msra.mxu0 0.0
      %2088 = vmatprep.subr.mxu0 0.0
      %2089 = vmatpush1.msra.mxu0 0.0
      %2090 = vmatprep.subr.mxu0 0.0
      %2091 = vmatpush1.msra.mxu0 0.0
      %2092 = vmatprep.subr.mxu0 0.0
      %2093 = vmatpush1.msra.mxu0 0.0
      %2094 = vmatprep.subr.mxu0 0.0
      %2095 = vmatpush1.msra.mxu0 0.0
      %2096 = vmatprep.subr.mxu0 0.0
      %2097 = vmatpush1.msra.mxu0 0.0
      %2098 = vmatprep.subr.mxu0 0.0
      %2099 = vmatpush1.msra.mxu0 0.0
      %2100 = vmatprep.subr.mxu0 0.0
      %2101 = vmatpush1.msra.mxu0 0.0
      %2102 = vmatprep.mubr.f32.mxu0 0.0
      %2103 = vmatmul.mubr.f32.gmra.mrb[0].mxu0 %v1966
      %v2104 = vpop.f32.mrb[0].mxu0
      %v2105 = vadd.f32 %v1788, %v2104
      %v2106 = vpop.f32.mrb[0].mxu0
      %2107 = vdwg.mxu0
      %2108 = vmatprep.subr.mxu0 0.0
      %2109 = vmatpush1.msra.mxu0 %v1682
      %2110 = vmatprep.subr.mxu0 0.0
      %2111 = vmatpush1.msra.mxu0 %v1683
      %2112 = vmatprep.subr.mxu0 0.0
      %2113 = vmatpush1.msra.mxu0 0.0
      %2114 = vmatprep.subr.mxu0 0.0
      %2115 = vmatpush1.msra.mxu0 0.0
      %2116 = vmatprep.subr.mxu0 0.0
      %2117 = vmatpush1.msra.mxu0 0.0
      %2118 = vmatprep.subr.mxu0 0.0
      %2119 = vmatpush1.msra.mxu0 0.0
      %2120 = vmatprep.subr.mxu0 0.0
      %2121 = vmatpush1.msra.mxu0 0.0
      %2122 = vmatprep.subr.mxu0 0.0
      %2123 = vmatpush1.msra.mxu0 0.0
      %2124 = vmatprep.subr.mxu0 0.0
      %2125 = vmatpush1.msra.mxu0 0.0
      %2126 = vmatprep.subr.mxu0 0.0
      %2127 = vmatpush1.msra.mxu0 0.0
      %2128 = vmatprep.subr.mxu0 0.0
      %2129 = vmatpush1.msra.mxu0 0.0
      %2130 = vmatprep.subr.mxu0 0.0
      %2131 = vmatpush1.msra.mxu0 0.0
      %2132 = vmatprep.subr.mxu0 0.0
      %2133 = vmatpush1.msra.mxu0 0.0
      %2134 = vmatprep.subr.mxu0 0.0
      %2135 = vmatpush1.msra.mxu0 0.0
      %2136 = vmatprep.subr.mxu0 0.0
      %2137 = vmatpush1.msra.mxu0 0.0
      %2138 = vmatprep.subr.mxu0 0.0
      %2139 = vmatpush1.msra.mxu0 0.0
      %2140 = vmatprep.subr.mxu0 0.0
      %2141 = vmatpush1.msra.mxu0 0.0
      %2142 = vmatprep.subr.mxu0 0.0
      %2143 = vmatpush1.msra.mxu0 0.0
      %2144 = vmatprep.subr.mxu0 0.0
      %2145 = vmatpush1.msra.mxu0 0.0
      %2146 = vmatprep.subr.mxu0 0.0
      %2147 = vmatpush1.msra.mxu0 0.0
      %2148 = vmatprep.subr.mxu0 0.0
      %2149 = vmatpush1.msra.mxu0 0.0
      %2150 = vmatprep.subr.mxu0 0.0
      %2151 = vmatpush1.msra.mxu0 0.0
      %2152 = vmatprep.subr.mxu0 0.0
      %2153 = vmatpush1.msra.mxu0 0.0
      %2154 = vmatprep.subr.mxu0 0.0
      %2155 = vmatpush1.msra.mxu0 0.0
      %2156 = vmatprep.subr.mxu0 0.0
      %2157 = vmatpush1.msra.mxu0 0.0
      %2158 = vmatprep.subr.mxu0 0.0
      %2159 = vmatpush1.msra.mxu0 0.0
      %2160 = vmatprep.subr.mxu0 0.0
      %2161 = vmatpush1.msra.mxu0 0.0
      %2162 = vmatprep.subr.mxu0 0.0
      %2163 = vmatpush1.msra.mxu0 0.0
      %2164 = vmatprep.subr.mxu0 0.0
      %2165 = vmatpush1.msra.mxu0 0.0
      %2166 = vmatprep.subr.mxu0 0.0
      %2167 = vmatpush1.msra.mxu0 0.0
      %2168 = vmatprep.subr.mxu0 0.0
      %2169 = vmatpush1.msra.mxu0 0.0
      %2170 = vmatprep.subr.mxu0 0.0
      %2171 = vmatpush1.msra.mxu0 0.0
      %2172 = vmatprep.mubr.f32.mxu0 0.0
      %2173 = vmatmul.mubr.f32.gmra.mrb[0].mxu0 %v1966
      %v2174 = vpop.f32.mrb[0].mxu0
      %v2175 = vadd.f32 %v1864, %v2174
      %v2176 = vpop.f32.mrb[0].mxu0
      %2177 = vdwg.mxu0
      %v2179 = vrot.slane %v2035, 5
      %v2181 = vadd.f32 %v1228, %v2179
      %v2182 = vxor.u32 %v2181, 2147483648
      %v2183 = vmul.f32 %v2182, 1.442695
      %v2184 = vpow.pop %v2183
      %v2185 = vadd.f32 %v2184, 1.0
      %v2186 = vrcp.pop %v2185
      %v2187 = vmul.f32 1.0, %v2186
      %v2189 = vrot.slane %v2105, 5
      %v2191 = vadd.f32 %v1316, %v2189
      %v2192 = vxor.u32 %v2191, 2147483648
      %v2193 = vmul.f32 %v2192, 1.442695
      %v2194 = vpow.pop %v2193
      %v2195 = vadd.f32 %v2194, 1.0
      %v2196 = vrcp.pop %v2195
      %v2197 = vmul.f32 1.0, %v2196
      %v2199 = vrot.slane %v2175, 5
      %v2201 = vmul.f32 %v2187, %v2199
      %v2202 = vadd.f32 %v1404, %v2201
      %v2203 = vtanh.pop %v2202
      %v2204 = vsub.f32 1.0, %v2197
      %v2205 = vmul.f32 %v2204, %v2203
      %v2206 = vrot.slane %v1956, 5
      %v2208 = vmul.f32 %v2197, %v2206
      %v2209 = vadd.f32 %v2205, %v2208
      %vm2210 = vcmp.gt.s32.totalorder %v1140, 1
      %v2211 = vsel %vm2210, 1, 0
      %2212 = vset.pattern.permute.xlu0 0
      %2213 = vperm.xlu0 %2212, %v2211
      %v2214 = vpop.permute.xlu0 %2213
      %vm2215 = vcmp.eq.s32.totalorder %v2214, 1
      %v2217 = vrot.slane %v2209, 3
      %v2219 = vsel %vm2215, %v2217, 0.0
      %v2220 = vadd.f32 %v1964, %v2219
      %v2221 = vsel %vm1710, %v2217, 0
      %2223 = vmatprep.subr.mxu0 0.0
      %2224 = vmatpush1.msra.mxu0 %v1676
      %2225 = vmatprep.subr.mxu0 0.0
      %2226 = vmatpush1.msra.mxu0 %v1677
      %2227 = vmatprep.subr.mxu0 0.0
      %2228 = vmatpush1.msra.mxu0 0.0
      %2229 = vmatprep.subr.mxu0 0.0
      %2230 = vmatpush1.msra.mxu0 0.0
      %2231 = vmatprep.subr.mxu0 0.0
      %2232 = vmatpush1.msra.mxu0 0.0
      %2233 = vmatprep.subr.mxu0 0.0
      %2234 = vmatpush1.msra.mxu0 0.0
      %2235 = vmatprep.subr.mxu0 0.0
      %2236 = vmatpush1.msra.mxu0 0.0
      %2237 = vmatprep.subr.mxu0 0.0
      %2238 = vmatpush1.msra.mxu0 0.0
      %2239 = vmatprep.subr.mxu0 0.0
      %2240 = vmatpush1.msra.mxu0 0.0
      %2241 = vmatprep.subr.mxu0 0.0
      %2242 = vmatpush1.msra.mxu0 0.0
      %2243 = vmatprep.subr.mxu0 0.0
      %2244 = vmatpush1.msra.mxu0 0.0
      %2245 = vmatprep.subr.mxu0 0.0
      %2246 = vmatpush1.msra.mxu0 0.0
      %2247 = vmatprep.subr.mxu0 0.0
      %2248 = vmatpush1.msra.mxu0 0.0
      %2249 = vmatprep.subr.mxu0 0.0
      %2250 = vmatpush1.msra.mxu0 0.0
      %2251 = vmatprep.subr.mxu0 0.0
      %2252 = vmatpush1.msra.mxu0 0.0
      %2253 = vmatprep.subr.mxu0 0.0
      %2254 = vmatpush1.msra.mxu0 0.0
      %2255 = vmatprep.subr.mxu0 0.0
      %2256 = vmatpush1.msra.mxu0 0.0
      %2257 = vmatprep.subr.mxu0 0.0
      %2258 = vmatpush1.msra.mxu0 0.0
      %2259 = vmatprep.subr.mxu0 0.0
      %2260 = vmatpush1.msra.mxu0 0.0
      %2261 = vmatprep.subr.mxu0 0.0
      %2262 = vmatpush1.msra.mxu0 0.0
      %2263 = vmatprep.subr.mxu0 0.0
      %2264 = vmatpush1.msra.mxu0 0.0
      %2265 = vmatprep.subr.mxu0 0.0
      %2266 = vmatpush1.msra.mxu0 0.0
      %2267 = vmatprep.subr.mxu0 0.0
      %2268 = vmatpush1.msra.mxu0 0.0
      %2269 = vmatprep.subr.mxu0 0.0
      %2270 = vmatpush1.msra.mxu0 0.0
      %2271 = vmatprep.subr.mxu0 0.0
      %2272 = vmatpush1.msra.mxu0 0.0
      %2273 = vmatprep.subr.mxu0 0.0
      %2274 = vmatpush1.msra.mxu0 0.0
      %2275 = vmatprep.subr.mxu0 0.0
      %2276 = vmatpush1.msra.mxu0 0.0
      %2277 = vmatprep.subr.mxu0 0.0
      %2278 = vmatpush1.msra.mxu0 0.0
      %2279 = vmatprep.subr.mxu0 0.0
      %2280 = vmatpush1.msra.mxu0 0.0
      %2281 = vmatprep.subr.mxu0 0.0
      %2282 = vmatpush1.msra.mxu0 0.0
      %2283 = vmatprep.subr.mxu0 0.0
      %2284 = vmatpush1.msra.mxu0 0.0
      %2285 = vmatprep.subr.mxu0 0.0
      %2286 = vmatpush1.msra.mxu0 0.0
      %2287 = vmatprep.mubr.f32.mxu0 0.0
      %2288 = vmatmul.mubr.f32.gmra.mrb[0].mxu0 %v2221
      %v2289 = vpop.f32.mrb[0].mxu0
      %v2290 = vadd.f32 %v1708, %v2289
      %v2291 = vpop.f32.mrb[0].mxu0
      %2292 = vdwg.mxu0
      %2293 = vmatprep.subr.mxu0 0.0
      %2294 = vmatpush1.msra.mxu0 %v1679
      %2295 = vmatprep.subr.mxu0 0.0
      %2296 = vmatpush1.msra.mxu0 %v1680
      %2297 = vmatprep.subr.mxu0 0.0
      %2298 = vmatpush1.msra.mxu0 0.0
      %2299 = vmatprep.subr.mxu0 0.0
      %2300 = vmatpush1.msra.mxu0 0.0
      %2301 = vmatprep.subr.mxu0 0.0
      %2302 = vmatpush1.msra.mxu0 0.0
      %2303 = vmatprep.subr.mxu0 0.0
      %2304 = vmatpush1.msra.mxu0 0.0
      %2305 = vmatprep.subr.mxu0 0.0
      %2306 = vmatpush1.msra.mxu0 0.0
      %2307 = vmatprep.subr.mxu0 0.0
      %2308 = vmatpush1.msra.mxu0 0.0
      %2309 = vmatprep.subr.mxu0 0.0
      %2310 = vmatpush1.msra.mxu0 0.0
      %2311 = vmatprep.subr.mxu0 0.0
      %2312 = vmatpush1.msra.mxu0 0.0
      %2313 = vmatprep.subr.mxu0 0.0
      %2314 = vmatpush1.msra.mxu0 0.0
      %2315 = vmatprep.subr.mxu0 0.0
      %2316 = vmatpush1.msra.mxu0 0.0
      %2317 = vmatprep.subr.mxu0 0.0
      %2318 = vmatpush1.msra.mxu0 0.0
      %2319 = vmatprep.subr.mxu0 0.0
      %2320 = vmatpush1.msra.mxu0 0.0
      %2321 = vmatprep.subr.mxu0 0.0
      %2322 = vmatpush1.msra.mxu0 0.0
      %2323 = vmatprep.subr.mxu0 0.0
      %2324 = vmatpush1.msra.mxu0 0.0
      %2325 = vmatprep.subr.mxu0 0.0
      %2326 = vmatpush1.msra.mxu0 0.0
      %2327 = vmatprep.subr.mxu0 0.0
      %2328 = vmatpush1.msra.mxu0 0.0
      %2329 = vmatprep.subr.mxu0 0.0
      %2330 = vmatpush1.msra.mxu0 0.0
      %2331 = vmatprep.subr.mxu0 0.0
      %2332 = vmatpush1.msra.mxu0 0.0
      %2333 = vmatprep.subr.mxu0 0.0
      %2334 = vmatpush1.msra.mxu0 0.0
      %2335 = vmatprep.subr.mxu0 0.0
      %2336 = vmatpush1.msra.mxu0 0.0
      %2337 = vmatprep.subr.mxu0 0.0
      %2338 = vmatpush1.msra.mxu0 0.0
      %2339 = vmatprep.subr.mxu0 0.0
      %2340 = vmatpush1.msra.mxu0 0.0
      %2341 = vmatprep.subr.mxu0 0.0
      %2342 = vmatpush1.msra.mxu0 0.0
      %2343 = vmatprep.subr.mxu0 0.0
      %2344 = vmatpush1.msra.mxu0 0.0
      %2345 = vmatprep.subr.mxu0 0.0
      %2346 = vmatpush1.msra.mxu0 0.0
      %2347 = vmatprep.subr.mxu0 0.0
      %2348 = vmatpush1.msra.mxu0 0.0
      %2349 = vmatprep.subr.mxu0 0.0
      %2350 = vmatpush1.msra.mxu0 0.0
      %2351 = vmatprep.subr.mxu0 0.0
      %2352 = vmatpush1.msra.mxu0 0.0
      %2353 = vmatprep.subr.mxu0 0.0
      %2354 = vmatpush1.msra.mxu0 0.0
      %2355 = vmatprep.subr.mxu0 0.0
      %2356 = vmatpush1.msra.mxu0 0.0
      %2357 = vmatprep.mubr.f32.mxu0 0.0
      %2358 = vmatmul.mubr.f32.gmra.mrb[0].mxu0 %v2221
      %v2359 = vpop.f32.mrb[0].mxu0
      %v2360 = vadd.f32 %v1788, %v2359
      %v2361 = vpop.f32.mrb[0].mxu0
      %2362 = vdwg.mxu0
      %2363 = vmatprep.subr.mxu0 0.0
      %2364 = vmatpush1.msra.mxu0 %v1682
      %2365 = vmatprep.subr.mxu0 0.0
      %2366 = vmatpush1.msra.mxu0 %v1683
      %2367 = vmatprep.subr.mxu0 0.0
      %2368 = vmatpush1.msra.mxu0 0.0
      %2369 = vmatprep.subr.mxu0 0.0
      %2370 = vmatpush1.msra.mxu0 0.0
      %2371 = vmatprep.subr.mxu0 0.0
      %2372 = vmatpush1.msra.mxu0 0.0
      %2373 = vmatprep.subr.mxu0 0.0
      %2374 = vmatpush1.msra.mxu0 0.0
      %2375 = vmatprep.subr.mxu0 0.0
      %2376 = vmatpush1.msra.mxu0 0.0
      %2377 = vmatprep.subr.mxu0 0.0
      %2378 = vmatpush1.msra.mxu0 0.0
      %2379 = vmatprep.subr.mxu0 0.0
      %2380 = vmatpush1.msra.mxu0 0.0
      %2381 = vmatprep.subr.mxu0 0.0
      %2382 = vmatpush1.msra.mxu0 0.0
      %2383 = vmatprep.subr.mxu0 0.0
      %2384 = vmatpush1.msra.mxu0 0.0
      %2385 = vmatprep.subr.mxu0 0.0
      %2386 = vmatpush1.msra.mxu0 0.0
      %2387 = vmatprep.subr.mxu0 0.0
      %2388 = vmatpush1.msra.mxu0 0.0
      %2389 = vmatprep.subr.mxu0 0.0
      %2390 = vmatpush1.msra.mxu0 0.0
      %2391 = vmatprep.subr.mxu0 0.0
      %2392 = vmatpush1.msra.mxu0 0.0
      %2393 = vmatprep.subr.mxu0 0.0
      %2394 = vmatpush1.msra.mxu0 0.0
      %2395 = vmatprep.subr.mxu0 0.0
      %2396 = vmatpush1.msra.mxu0 0.0
      %2397 = vmatprep.subr.mxu0 0.0
      %2398 = vmatpush1.msra.mxu0 0.0
      %2399 = vmatprep.subr.mxu0 0.0
      %2400 = vmatpush1.msra.mxu0 0.0
      %2401 = vmatprep.subr.mxu0 0.0
      %2402 = vmatpush1.msra.mxu0 0.0
      %2403 = vmatprep.subr.mxu0 0.0
      %2404 = vmatpush1.msra.mxu0 0.0
      %2405 = vmatprep.subr.mxu0 0.0
      %2406 = vmatpush1.msra.mxu0 0.0
      %2407 = vmatprep.subr.mxu0 0.0
      %2408 = vmatpush1.msra.mxu0 0.0
      %2409 = vmatprep.subr.mxu0 0.0
      %2410 = vmatpush1.msra.mxu0 0.0
      %2411 = vmatprep.subr.mxu0 0.0
      %2412 = vmatpush1.msra.mxu0 0.0
      %2413 = vmatprep.subr.mxu0 0.0
      %2414 = vmatpush1.msra.mxu0 0.0
      %2415 = vmatprep.subr.mxu0 0.0
      %2416 = vmatpush1.msra.mxu0 0.0
      %2417 = vmatprep.subr.mxu0 0.0
      %2418 = vmatpush1.msra.mxu0 0.0
      %2419 = vmatprep.subr.mxu0 0.0
      %2420 = vmatpush1.msra.mxu0 0.0
      %2421 = vmatprep.subr.mxu0 0.0
      %2422 = vmatpush1.msra.mxu0 0.0
      %2423 = vmatprep.subr.mxu0 0.0
      %2424 = vmatpush1.msra.mxu0 0.0
      %2425 = vmatprep.subr.mxu0 0.0
      %2426 = vmatpush1.msra.mxu0 0.0
      %2427 = vmatprep.mubr.f32.mxu0 0.0
      %2428 = vmatmul.mubr.f32.gmra.mrb[0].mxu0 %v2221
      %v2429 = vpop.f32.mrb[0].mxu0
      %v2430 = vadd.f32 %v1864, %v2429
      %v2431 = vpop.f32.mrb[0].mxu0
      %2432 = vdwg.mxu0
      %v2434 = vrot.slane %v2290, 2
      %v2436 = vadd.f32 %v1228, %v2434
      %v2437 = vadd.f32 %v1233, %v2434
      %v2438 = vxor.u32 %v2436, 2147483648
      %v2439 = vxor.u32 %v2437, 2147483648
      %v2440 = vmul.f32 %v2438, 1.442695
      %v2441 = vpow.pop %v2440
      %v2442 = vmul.f32 %v2439, 1.442695
      %v2443 = vpow.pop %v2442
      %v2444 = vadd.f32 %v2441, 1.0
      %v2445 = vadd.f32 %v2443, 1.0
      %v2446 = vrcp.pop %v2444
      %v2447 = vmul.f32 1.0, %v2446
      %v2448 = vrcp.pop %v2445
      %v2449 = vmul.f32 1.0, %v2448
      %v2451 = vrot.slane %v2360, 2
      %v2453 = vadd.f32 %v1316, %v2451
      %v2454 = vadd.f32 %v1321, %v2451
      %v2455 = vxor.u32 %v2453, 2147483648
      %v2456 = vxor.u32 %v2454, 2147483648
      %v2457 = vmul.f32 %v2455, 1.442695
      %v2458 = vpow.pop %v2457
      %v2459 = vmul.f32 %v2456, 1.442695
      %v2460 = vpow.pop %v2459
      %v2461 = vadd.f32 %v2458, 1.0
      %v2462 = vadd.f32 %v2460, 1.0
      %v2463 = vrcp.pop %v2461
      %v2464 = vmul.f32 1.0, %v2463
      %v2465 = vrcp.pop %v2462
      %v2466 = vmul.f32 1.0, %v2465
      %v2468 = vrot.slane %v2430, 2
      %v2470 = vmul.f32 %v2447, %v2468
      %v2471 = vmul.f32 %v2449, %v2468
      %v2472 = vadd.f32 %v1404, %v2470
      %v2473 = vadd.f32 %v1409, %v2471
      %v2474 = vtanh.pop %v2472
      %v2475 = vtanh.pop %v2473
      %v2476 = vsub.f32 1.0, %v2464
      %v2477 = vsub.f32 1.0, %v2466
      %v2478 = vmul.f32 %v2476, %v2474
      %v2479 = vmul.f32 %v2477, %v2475
      %v2480 = vrot.slane %v2209, 5
      %v2482 = vmul.f32 %v2464, %v2480
      %v2483 = vmul.f32 %v2466, %v2480
      %v2484 = vadd.f32 %v2478, %v2482
      %v2485 = vadd.f32 %v2479, %v2483
      %vm2486 = vcmp.gt.s32.totalorder %v1140, 2
      %v2487 = vsel %vm2486, 1, 0
      %2488 = vset.pattern.permute.xlu0 0
      %2489 = vperm.xlu0 %2488, %v2487
      %v2490 = vpop.permute.xlu0 %2489
      %vm2491 = vcmp.eq.s32.totalorder %v2490, 1
      %vm2494 = vcmask 1041408
      %v2495 = vrot.slane %v2484, 6
      %v2496 = vrot.slane %v2485, 6
      %v2497 = vsel %vm2494, %v2495, %v2496
      %v2499 = vsel %vm2491, %v2497, 0.0
      %v2500 = vadd.f32 %v2220, %v2499
      %v2502 = vlaneseq
      %v2503 = vshrl.u32 %v2502, 7
      %v2504 = vsub.s32 0, %v2503
      %v2505 = vrot.slane %v1699, %v2504
      %2507 = vmatprep.subr.mxu0 0.0
      %2508 = vmatpush1.msra.mxu0 %v1685
      %2509 = vmatprep.subr.mxu0 0.0
      %2510 = vmatpush1.msra.mxu0 %v1686
      %2511 = vmatprep.subr.mxu0 0.0
      %2512 = vmatpush1.msra.mxu0 0.0
      %2513 = vmatprep.subr.mxu0 0.0
      %2514 = vmatpush1.msra.mxu0 0.0
      %2515 = vmatprep.subr.mxu0 0.0
      %2516 = vmatpush1.msra.mxu0 0.0
      %2517 = vmatprep.subr.mxu0 0.0
      %2518 = vmatpush1.msra.mxu0 0.0
      %2519 = vmatprep.subr.mxu0 0.0
      %2520 = vmatpush1.msra.mxu0 0.0
      %2521 = vmatprep.subr.mxu0 0.0
      %2522 = vmatpush1.msra.mxu0 0.0
      %2523 = vmatprep.subr.mxu0 0.0
      %2524 = vmatpush1.msra.mxu0 0.0
      %2525 = vmatprep.subr.mxu0 0.0
      %2526 = vmatpush1.msra.mxu0 0.0
      %2527 = vmatprep.subr.mxu0 0.0
      %2528 = vmatpush1.msra.mxu0 0.0
      %2529 = vmatprep.subr.mxu0 0.0
      %2530 = vmatpush1.msra.mxu0 0.0
      %2531 = vmatprep.subr.mxu0 0.0
      %2532 = vmatpush1.msra.mxu0 0.0
      %2533 = vmatprep.subr.mxu0 0.0
      %2534 = vmatpush1.msra.mxu0 0.0
      %2535 = vmatprep.subr.mxu0 0.0
      %2536 = vmatpush1.msra.mxu0 0.0
      %2537 = vmatprep.subr.mxu0 0.0
      %2538 = vmatpush1.msra.mxu0 0.0
      %2539 = vmatprep.subr.mxu0 0.0
      %2540 = vmatpush1.msra.mxu0 0.0
      %2541 = vmatprep.subr.mxu0 0.0
      %2542 = vmatpush1.msra.mxu0 0.0
      %2543 = vmatprep.subr.mxu0 0.0
      %2544 = vmatpush1.msra.mxu0 0.0
      %2545 = vmatprep.subr.mxu0 0.0
      %2546 = vmatpush1.msra.mxu0 0.0
      %2547 = vmatprep.subr.mxu0 0.0
      %2548 = vmatpush1.msra.mxu0 0.0
      %2549 = vmatprep.subr.mxu0 0.0
      %2550 = vmatpush1.msra.mxu0 0.0
      %2551 = vmatprep.subr.mxu0 0.0
      %2552 = vmatpush1.msra.mxu0 0.0
      %2553 = vmatprep.subr.mxu0 0.0
      %2554 = vmatpush1.msra.mxu0 0.0
      %2555 = vmatprep.subr.mxu0 0.0
      %2556 = vmatpush1.msra.mxu0 0.0
      %2557 = vmatprep.subr.mxu0 0.0
      %2558 = vmatpush1.msra.mxu0 0.0
      %2559 = vmatprep.subr.mxu0 0.0
      %2560 = vmatpush1.msra.mxu0 0.0
      %2561 = vmatprep.subr.mxu0 0.0
      %2562 = vmatpush1.msra.mxu0 0.0
      %2563 = vmatprep.subr.mxu0 0.0
      %2564 = vmatpush1.msra.mxu0 0.0
      %2565 = vmatprep.subr.mxu0 0.0
      %2566 = vmatpush1.msra.mxu0 0.0
      %2567 = vmatprep.subr.mxu0 0.0
      %2568 = vmatpush1.msra.mxu0 0.0
      %2569 = vmatprep.subr.mxu0 0.0
      %2570 = vmatpush1.msra.mxu0 0.0
      %2571 = vmatprep.mubr.f32.mxu0 0.0
      %2572 = vmatmul.mubr.f32.gmra.mrb[0].mxu0 %v1712
      %v2573 = vpop.f32.mrb[0].mxu0
      %v2574 = vadd.f32 %v2505, %v2573
      %v2575 = vpop.f32.mrb[0].mxu0
      %2576 = vdwg.mxu0
      %v2578 = vlaneseq
      %v2579 = vshrl.u32 %v2578, 7
      %v2580 = vsub.s32 0, %v2579
      %v2581 = vrot.slane %v1701, %v2580
      %2583 = vmatprep.subr.mxu0 0.0
      %2584 = vmatpush1.msra.mxu0 %v1688
      %2585 = vmatprep.subr.mxu0 0.0
      %2586 = vmatpush1.msra.mxu0 %v1689
      %2587 = vmatprep.subr.mxu0 0.0
      %2588 = vmatpush1.msra.mxu0 0.0
      %2589 = vmatprep.subr.mxu0 0.0
      %2590 = vmatpush1.msra.mxu0 0.0
      %2591 = vmatprep.subr.mxu0 0.0
      %2592 = vmatpush1.msra.mxu0 0.0
      %2593 = vmatprep.subr.mxu0 0.0
      %2594 = vmatpush1.msra.mxu0 0.0
      %2595 = vmatprep.subr.mxu0 0.0
      %2596 = vmatpush1.msra.mxu0 0.0
      %2597 = vmatprep.subr.mxu0 0.0
      %2598 = vmatpush1.msra.mxu0 0.0
      %2599 = vmatprep.subr.mxu0 0.0
      %2600 = vmatpush1.msra.mxu0 0.0
      %2601 = vmatprep.subr.mxu0 0.0
      %2602 = vmatpush1.msra.mxu0 0.0
      %2603 = vmatprep.subr.mxu0 0.0
      %2604 = vmatpush1.msra.mxu0 0.0
      %2605 = vmatprep.subr.mxu0 0.0
      %2606 = vmatpush1.msra.mxu0 0.0
      %2607 = vmatprep.subr.mxu0 0.0
      %2608 = vmatpush1.msra.mxu0 0.0
      %2609 = vmatprep.subr.mxu0 0.0
      %2610 = vmatpush1.msra.mxu0 0.0
      %2611 = vmatprep.subr.mxu0 0.0
      %2612 = vmatpush1.msra.mxu0 0.0
      %2613 = vmatprep.subr.mxu0 0.0
      %2614 = vmatpush1.msra.mxu0 0.0
      %2615 = vmatprep.subr.mxu0 0.0
      %2616 = vmatpush1.msra.mxu0 0.0
      %2617 = vmatprep.subr.mxu0 0.0
      %2618 = vmatpush1.msra.mxu0 0.0
      %2619 = vmatprep.subr.mxu0 0.0
      %2620 = vmatpush1.msra.mxu0 0.0
      %2621 = vmatprep.subr.mxu0 0.0
      %2622 = vmatpush1.msra.mxu0 0.0
      %2623 = vmatprep.subr.mxu0 0.0
      %2624 = vmatpush1.msra.mxu0 0.0
      %2625 = vmatprep.subr.mxu0 0.0
      %2626 = vmatpush1.msra.mxu0 0.0
      %2627 = vmatprep.subr.mxu0 0.0
      %2628 = vmatpush1.msra.mxu0 0.0
      %2629 = vmatprep.subr.mxu0 0.0
      %2630 = vmatpush1.msra.mxu0 0.0
      %2631 = vmatprep.subr.mxu0 0.0
      %2632 = vmatpush1.msra.mxu0 0.0
      %2633 = vmatprep.subr.mxu0 0.0
      %2634 = vmatpush1.msra.mxu0 0.0
      %2635 = vmatprep.subr.mxu0 0.0
      %2636 = vmatpush1.msra.mxu0 0.0
      %2637 = vmatprep.subr.mxu0 0.0
      %2638 = vmatpush1.msra.mxu0 0.0
      %2639 = vmatprep.subr.mxu0 0.0
      %2640 = vmatpush1.msra.mxu0 0.0
      %2641 = vmatprep.subr.mxu0 0.0
      %2642 = vmatpush1.msra.mxu0 0.0
      %2643 = vmatprep.subr.mxu0 0.0
      %2644 = vmatpush1.msra.mxu0 0.0
      %2645 = vmatprep.subr.mxu0 0.0
      %2646 = vmatpush1.msra.mxu0 0.0
      %2647 = vmatprep.mubr.f32.mxu0 0.0
      %2648 = vmatmul.mubr.f32.gmra.mrb[0].mxu0 %v1712
      %v2649 = vpop.f32.mrb[0].mxu0
      %v2650 = vadd.f32 %v2581, %v2649
      %v2651 = vpop.f32.mrb[0].mxu0
      %2652 = vdwg.mxu0
      %v2654 = vlaneseq
      %v2655 = vshrl.u32 %v2654, 7
      %v2656 = vsub.s32 0, %v2655
      %v2657 = vrot.slane %v1703, %v2656
      %2659 = vmatprep.subr.mxu0 0.0
      %2660 = vmatpush1.msra.mxu0 %v1691
      %2661 = vmatprep.subr.mxu0 0.0
      %2662 = vmatpush1.msra.mxu0 %v1692
      %2663 = vmatprep.subr.mxu0 0.0
      %2664 = vmatpush1.msra.mxu0 0.0
      %2665 = vmatprep.subr.mxu0 0.0
      %2666 = vmatpush1.msra.mxu0 0.0
      %2667 = vmatprep.subr.mxu0 0.0
      %2668 = vmatpush1.msra.mxu0 0.0
      %2669 = vmatprep.subr.mxu0 0.0
      %2670 = vmatpush1.msra.mxu0 0.0
      %2671 = vmatprep.subr.mxu0 0.0
      %2672 = vmatpush1.msra.mxu0 0.0
      %2673 = vmatprep.subr.mxu0 0.0
      %2674 = vmatpush1.msra.mxu0 0.0
      %2675 = vmatprep.subr.mxu0 0.0
      %2676 = vmatpush1.msra.mxu0 0.0
      %2677 = vmatprep.subr.mxu0 0.0
      %2678 = vmatpush1.msra.mxu0 0.0
      %2679 = vmatprep.subr.mxu0 0.0
      %2680 = vmatpush1.msra.mxu0 0.0
      %2681 = vmatprep.subr.mxu0 0.0
      %2682 = vmatpush1.msra.mxu0 0.0
      %2683 = vmatprep.subr.mxu0 0.0
      %2684 = vmatpush1.msra.mxu0 0.0
      %2685 = vmatprep.subr.mxu0 0.0
      %2686 = vmatpush1.msra.mxu0 0.0
      %2687 = vmatprep.subr.mxu0 0.0
      %2688 = vmatpush1.msra.mxu0 0.0
      %2689 = vmatprep.subr.mxu0 0.0
      %2690 = vmatpush1.msra.mxu0 0.0
      %2691 = vmatprep.subr.mxu0 0.0
      %2692 = vmatpush1.msra.mxu0 0.0
      %2693 = vmatprep.subr.mxu0 0.0
      %2694 = vmatpush1.msra.mxu0 0.0
      %2695 = vmatprep.subr.mxu0 0.0
      %2696 = vmatpush1.msra.mxu0 0.0
      %2697 = vmatprep.subr.mxu0 0.0
      %2698 = vmatpush1.msra.mxu0 0.0
      %2699 = vmatprep.subr.mxu0 0.0
      %2700 = vmatpush1.msra.mxu0 0.0
      %2701 = vmatprep.subr.mxu0 0.0
      %2702 = vmatpush1.msra.mxu0 0.0
      %2703 = vmatprep.subr.mxu0 0.0
      %2704 = vmatpush1.msra.mxu0 0.0
      %2705 = vmatprep.subr.mxu0 0.0
      %2706 = vmatpush1.msra.mxu0 0.0
      %2707 = vmatprep.subr.mxu0 0.0
      %2708 = vmatpush1.msra.mxu0 0.0
      %2709 = vmatprep.subr.mxu0 0.0
      %2710 = vmatpush1.msra.mxu0 0.0
      %2711 = vmatprep.subr.mxu0 0.0
      %2712 = vmatpush1.msra.mxu0 0.0
      %2713 = vmatprep.subr.mxu0 0.0
      %2714 = vmatpush1.msra.mxu0 0.0
      %2715 = vmatprep.subr.mxu0 0.0
      %2716 = vmatpush1.msra.mxu0 0.0
      %2717 = vmatprep.subr.mxu0 0.0
      %2718 = vmatpush1.msra.mxu0 0.0
      %2719 = vmatprep.subr.mxu0 0.0
      %2720 = vmatpush1.msra.mxu0 0.0
      %2721 = vmatprep.subr.mxu0 0.0
      %2722 = vmatpush1.msra.mxu0 0.0
      %2723 = vmatprep.mubr.f32.mxu0 0.0
      %2724 = vmatmul.mubr.f32.gmra.mrb[0].mxu0 %v1712
      %v2725 = vpop.f32.mrb[0].mxu0
      %v2726 = vadd.f32 %v2657, %v2725
      %v2727 = vpop.f32.mrb[0].mxu0
      %2728 = vdwg.mxu0
      %v2730 = vrot.slane %v2574, 2
      %v2732 = vadd.f32 %v1492, %v2730
      %v2733 = vadd.f32 %v1497, %v2730
      %v2734 = vxor.u32 %v2732, 2147483648
      %v2735 = vxor.u32 %v2733, 2147483648
      %v2736 = vmul.f32 %v2734, 1.442695
      %v2737 = vpow.pop %v2736
      %v2738 = vmul.f32 %v2735, 1.442695
      %v2739 = vpow.pop %v2738
      %v2740 = vadd.f32 %v2737, 1.0
      %v2741 = vadd.f32 %v2739, 1.0
      %v2742 = vrcp.pop %v2740
      %v2743 = vmul.f32 1.0, %v2742
      %v2744 = vrcp.pop %v2741
      %v2745 = vmul.f32 1.0, %v2744
      %v2747 = vrot.slane %v2650, 2
      %v2749 = vadd.f32 %v1580, %v2747
      %v2750 = vadd.f32 %v1585, %v2747
      %v2751 = vxor.u32 %v2749, 2147483648
      %v2752 = vxor.u32 %v2750, 2147483648
      %v2753 = vmul.f32 %v2751, 1.442695
      %v2754 = vpow.pop %v2753
      %v2755 = vmul.f32 %v2752, 1.442695
      %v2756 = vpow.pop %v2755
      %v2757 = vadd.f32 %v2754, 1.0
      %v2758 = vadd.f32 %v2756, 1.0
      %v2759 = vrcp.pop %v2757
      %v2760 = vmul.f32 1.0, %v2759
      %v2761 = vrcp.pop %v2758
      %v2762 = vmul.f32 1.0, %v2761
      %v2764 = vrot.slane %v2726, 2
      %v2766 = vmul.f32 %v2743, %v2764
      %v2767 = vmul.f32 %v2745, %v2764
      %v2768 = vadd.f32 %v1668, %v2766
      %v2769 = vadd.f32 %v1673, %v2767
      %v2770 = vtanh.pop %v2768
      %v2771 = vtanh.pop %v2769
      %v2772 = vsub.f32 1.0, %v2760
      %v2773 = vsub.f32 1.0, %v2762
      %v2774 = vmul.f32 %v2772, %v2770
      %v2775 = vmul.f32 %v2773, %v2771
      %v2776 = vmul.f32 %v2760, 0.0
      %v2777 = vmul.f32 %v2762, 0.0
      %v2778 = vadd.f32 %v2774, %v2776
      %v2779 = vadd.f32 %v2775, %v2777
      %v2782 = vrot.slane %v2778, 6
      %v2783 = vrot.slane %v2779, 6
      %v2784 = vsel %vm2494, %v2782, %v2783
      %v2786 = vsel %vm2491, %v2784, 0.0
      %v2787 = vadd.f32 %v2786, 0.0
      %vm2788 = vcmp.le.s32.totalorder %v1141, 1
      %v2789 = vsel %vm2788, 1, 0
      %2790 = vset.pattern.permute.xlu0 0
      %2791 = vperm.xlu0 %2790, %v2789
      %v2792 = vpop.permute.xlu0 %2791
      %vm2793 = vcmp.eq.s32.totalorder %v2792, 1
      %v2794 = vsel %vm2793, 0.0, %v2784
      %v2796 = vsel %vm1710, %v2794, 0
      %2798 = vmatprep.subr.mxu0 0.0
      %2799 = vmatpush1.msra.mxu0 %v1685
      %2800 = vmatprep.subr.mxu0 0.0
      %2801 = vmatpush1.msra.mxu0 %v1686
      %2802 = vmatprep.subr.mxu0 0.0
      %2803 = vmatpush1.msra.mxu0 0.0
      %2804 = vmatprep.subr.mxu0 0.0
      %2805 = vmatpush1.msra.mxu0 0.0
      %2806 = vmatprep.subr.mxu0 0.0
      %2807 = vmatpush1.msra.mxu0 0.0
      %2808 = vmatprep.subr.mxu0 0.0
      %2809 = vmatpush1.msra.mxu0 0.0
      %2810 = vmatprep.subr.mxu0 0.0
      %2811 = vmatpush1.msra.mxu0 0.0
      %2812 = vmatprep.subr.mxu0 0.0
      %2813 = vmatpush1.msra.mxu0 0.0
      %2814 = vmatprep.subr.mxu0 0.0
      %2815 = vmatpush1.msra.mxu0 0.0
      %2816 = vmatprep.subr.mxu0 0.0
      %2817 = vmatpush1.msra.mxu0 0.0
      %2818 = vmatprep.subr.mxu0 0.0
      %2819 = vmatpush1.msra.mxu0 0.0
      %2820 = vmatprep.subr.mxu0 0.0
      %2821 = vmatpush1.msra.mxu0 0.0
      %2822 = vmatprep.subr.mxu0 0.0
      %2823 = vmatpush1.msra.mxu0 0.0
      %2824 = vmatprep.subr.mxu0 0.0
      %2825 = vmatpush1.msra.mxu0 0.0
      %2826 = vmatprep.subr.mxu0 0.0
      %2827 = vmatpush1.msra.mxu0 0.0
      %2828 = vmatprep.subr.mxu0 0.0
      %2829 = vmatpush1.msra.mxu0 0.0
      %2830 = vmatprep.subr.mxu0 0.0
      %2831 = vmatpush1.msra.mxu0 0.0
      %2832 = vmatprep.subr.mxu0 0.0
      %2833 = vmatpush1.msra.mxu0 0.0
      %2834 = vmatprep.subr.mxu0 0.0
      %2835 = vmatpush1.msra.mxu0 0.0
      %2836 = vmatprep.subr.mxu0 0.0
      %2837 = vmatpush1.msra.mxu0 0.0
      %2838 = vmatprep.subr.mxu0 0.0
      %2839 = vmatpush1.msra.mxu0 0.0
      %2840 = vmatprep.subr.mxu0 0.0
      %2841 = vmatpush1.msra.mxu0 0.0
      %2842 = vmatprep.subr.mxu0 0.0
      %2843 = vmatpush1.msra.mxu0 0.0
      %2844 = vmatprep.subr.mxu0 0.0
      %2845 = vmatpush1.msra.mxu0 0.0
      %2846 = vmatprep.subr.mxu0 0.0
      %2847 = vmatpush1.msra.mxu0 0.0
      %2848 = vmatprep.subr.mxu0 0.0
      %2849 = vmatpush1.msra.mxu0 0.0
      %2850 = vmatprep.subr.mxu0 0.0
      %2851 = vmatpush1.msra.mxu0 0.0
      %2852 = vmatprep.subr.mxu0 0.0
      %2853 = vmatpush1.msra.mxu0 0.0
      %2854 = vmatprep.subr.mxu0 0.0
      %2855 = vmatpush1.msra.mxu0 0.0
      %2856 = vmatprep.subr.mxu0 0.0
      %2857 = vmatpush1.msra.mxu0 0.0
      %2858 = vmatprep.subr.mxu0 0.0
      %2859 = vmatpush1.msra.mxu0 0.0
      %2860 = vmatprep.subr.mxu0 0.0
      %2861 = vmatpush1.msra.mxu0 0.0
      %2862 = vmatprep.mubr.f32.mxu0 0.0
      %2863 = vmatmul.mubr.f32.gmra.mrb[0].mxu0 %v2796
      %v2864 = vpop.f32.mrb[0].mxu0
      %v2865 = vadd.f32 %v2505, %v2864
      %v2866 = vpop.f32.mrb[0].mxu0
      %2867 = vdwg.mxu0
      %2868 = vmatprep.subr.mxu0 0.0
      %2869 = vmatpush1.msra.mxu0 %v1688
      %2870 = vmatprep.subr.mxu0 0.0
      %2871 = vmatpush1.msra.mxu0 %v1689
      %2872 = vmatprep.subr.mxu0 0.0
      %2873 = vmatpush1.msra.mxu0 0.0
      %2874 = vmatprep.subr.mxu0 0.0
      %2875 = vmatpush1.msra.mxu0 0.0
      %2876 = vmatprep.subr.mxu0 0.0
      %2877 = vmatpush1.msra.mxu0 0.0
      %2878 = vmatprep.subr.mxu0 0.0
      %2879 = vmatpush1.msra.mxu0 0.0
      %2880 = vmatprep.subr.mxu0 0.0
      %2881 = vmatpush1.msra.mxu0 0.0
      %2882 = vmatprep.subr.mxu0 0.0
      %2883 = vmatpush1.msra.mxu0 0.0
      %2884 = vmatprep.subr.mxu0 0.0
      %2885 = vmatpush1.msra.mxu0 0.0
      %2886 = vmatprep.subr.mxu0 0.0
      %2887 = vmatpush1.msra.mxu0 0.0
      %2888 = vmatprep.subr.mxu0 0.0
      %2889 = vmatpush1.msra.mxu0 0.0
      %2890 = vmatprep.subr.mxu0 0.0
      %2891 = vmatpush1.msra.mxu0 0.0
      %2892 = vmatprep.subr.mxu0 0.0
      %2893 = vmatpush1.msra.mxu0 0.0
      %2894 = vmatprep.subr.mxu0 0.0
      %2895 = vmatpush1.msra.mxu0 0.0
      %2896 = vmatprep.subr.mxu0 0.0
      %2897 = vmatpush1.msra.mxu0 0.0
      %2898 = vmatprep.subr.mxu0 0.0
      %2899 = vmatpush1.msra.mxu0 0.0
      %2900 = vmatprep.subr.mxu0 0.0
      %2901 = vmatpush1.msra.mxu0 0.0
      %2902 = vmatprep.subr.mxu0 0.0
      %2903 = vmatpush1.msra.mxu0 0.0
      %2904 = vmatprep.subr.mxu0 0.0
      %2905 = vmatpush1.msra.mxu0 0.0
      %2906 = vmatprep.subr.mxu0 0.0
      %2907 = vmatpush1.msra.mxu0 0.0
      %2908 = vmatprep.subr.mxu0 0.0
      %2909 = vmatpush1.msra.mxu0 0.0
      %2910 = vmatprep.subr.mxu0 0.0
      %2911 = vmatpush1.msra.mxu0 0.0
      %2912 = vmatprep.subr.mxu0 0.0
      %2913 = vmatpush1.msra.mxu0 0.0
      %2914 = vmatprep.subr.mxu0 0.0
      %2915 = vmatpush1.msra.mxu0 0.0
      %2916 = vmatprep.subr.mxu0 0.0
      %2917 = vmatpush1.msra.mxu0 0.0
      %2918 = vmatprep.subr.mxu0 0.0
      %2919 = vmatpush1.msra.mxu0 0.0
      %2920 = vmatprep.subr.mxu0 0.0
      %2921 = vmatpush1.msra.mxu0 0.0
      %2922 = vmatprep.subr.mxu0 0.0
      %2923 = vmatpush1.msra.mxu0 0.0
      %2924 = vmatprep.subr.mxu0 0.0
      %2925 = vmatpush1.msra.mxu0 0.0
      %2926 = vmatprep.subr.mxu0 0.0
      %2927 = vmatpush1.msra.mxu0 0.0
      %2928 = vmatprep.subr.mxu0 0.0
      %2929 = vmatpush1.msra.mxu0 0.0
      %2930 = vmatprep.subr.mxu0 0.0
      %2931 = vmatpush1.msra.mxu0 0.0
      %2932 = vmatprep.mubr.f32.mxu0 0.0
      %2933 = vmatmul.mubr.f32.gmra.mrb[0].mxu0 %v2796
      %v2934 = vpop.f32.mrb[0].mxu0
      %v2935 = vadd.f32 %v2581, %v2934
      %v2936 = vpop.f32.mrb[0].mxu0
      %2937 = vdwg.mxu0
      %2938 = vmatprep.subr.mxu0 0.0
      %2939 = vmatpush1.msra.mxu0 %v1691
      %2940 = vmatprep.subr.mxu0 0.0
      %2941 = vmatpush1.msra.mxu0 %v1692
      %2942 = vmatprep.subr.mxu0 0.0
      %2943 = vmatpush1.msra.mxu0 0.0
      %2944 = vmatprep.subr.mxu0 0.0
      %2945 = vmatpush1.msra.mxu0 0.0
      %2946 = vmatprep.subr.mxu0 0.0
      %2947 = vmatpush1.msra.mxu0 0.0
      %2948 = vmatprep.subr.mxu0 0.0
      %2949 = vmatpush1.msra.mxu0 0.0
      %2950 = vmatprep.subr.mxu0 0.0
      %2951 = vmatpush1.msra.mxu0 0.0
      %2952 = vmatprep.subr.mxu0 0.0
      %2953 = vmatpush1.msra.mxu0 0.0
      %2954 = vmatprep.subr.mxu0 0.0
      %2955 = vmatpush1.msra.mxu0 0.0
      %2956 = vmatprep.subr.mxu0 0.0
      %2957 = vmatpush1.msra.mxu0 0.0
      %2958 = vmatprep.subr.mxu0 0.0
      %2959 = vmatpush1.msra.mxu0 0.0
      %2960 = vmatprep.subr.mxu0 0.0
      %2961 = vmatpush1.msra.mxu0 0.0
      %2962 = vmatprep.subr.mxu0 0.0
      %2963 = vmatpush1.msra.mxu0 0.0
      %2964 = vmatprep.subr.mxu0 0.0
      %2965 = vmatpush1.msra.mxu0 0.0
      %2966 = vmatprep.subr.mxu0 0.0
      %2967 = vmatpush1.msra.mxu0 0.0
      %2968 = vmatprep.subr.mxu0 0.0
      %2969 = vmatpush1.msra.mxu0 0.0
      %2970 = vmatprep.subr.mxu0 0.0
      %2971 = vmatpush1.msra.mxu0 0.0
      %2972 = vmatprep.subr.mxu0 0.0
      %2973 = vmatpush1.msra.mxu0 0.0
      %2974 = vmatprep.subr.mxu0 0.0
      %2975 = vmatpush1.msra.mxu0 0.0
      %2976 = vmatprep.subr.mxu0 0.0
      %2977 = vmatpush1.msra.mxu0 0.0
      %2978 = vmatprep.subr.mxu0 0.0
      %2979 = vmatpush1.msra.mxu0 0.0
      %2980 = vmatprep.subr.mxu0 0.0
      %2981 = vmatpush1.msra.mxu0 0.0
      %2982 = vmatprep.subr.mxu0 0.0
      %2983 = vmatpush1.msra.mxu0 0.0
      %2984 = vmatprep.subr.mxu0 0.0
      %2985 = vmatpush1.msra.mxu0 0.0
      %2986 = vmatprep.subr.mxu0 0.0
      %2987 = vmatpush1.msra.mxu0 0.0
      %2988 = vmatprep.subr.mxu0 0.0
      %2989 = vmatpush1.msra.mxu0 0.0
      %2990 = vmatprep.subr.mxu0 0.0
      %2991 = vmatpush1.msra.mxu0 0.0
      %2992 = vmatprep.subr.mxu0 0.0
      %2993 = vmatpush1.msra.mxu0 0.0
      %2994 = vmatprep.subr.mxu0 0.0
      %2995 = vmatpush1.msra.mxu0 0.0
      %2996 = vmatprep.subr.mxu0 0.0
      %2997 = vmatpush1.msra.mxu0 0.0
      %2998 = vmatprep.subr.mxu0 0.0
      %2999 = vmatpush1.msra.mxu0 0.0
      %3000 = vmatprep.subr.mxu0 0.0
      %3001 = vmatpush1.msra.mxu0 0.0
      %3002 = vmatprep.mubr.f32.mxu0 0.0
      %3003 = vmatmul.mubr.f32.gmra.mrb[0].mxu0 %v2796
      %v3004 = vpop.f32.mrb[0].mxu0
      %v3005 = vadd.f32 %v2657, %v3004
      %v3006 = vpop.f32.mrb[0].mxu0
      %3007 = vdwg.mxu0
      %v3009 = vrot.slane %v2865, 5
      %v3011 = vadd.f32 %v1492, %v3009
      %v3012 = vxor.u32 %v3011, 2147483648
      %v3013 = vmul.f32 %v3012, 1.442695
      %v3014 = vpow.pop %v3013
      %v3015 = vadd.f32 %v3014, 1.0
      %v3016 = vrcp.pop %v3015
      %v3017 = vmul.f32 1.0, %v3016
      %v3019 = vrot.slane %v2935, 5
      %v3021 = vadd.f32 %v1580, %v3019
      %v3022 = vxor.u32 %v3021, 2147483648
      %v3023 = vmul.f32 %v3022, 1.442695
      %v3024 = vpow.pop %v3023
      %v3025 = vadd.f32 %v3024, 1.0
      %v3026 = vrcp.pop %v3025
      %v3027 = vmul.f32 1.0, %v3026
      %v3029 = vrot.slane %v3005, 5
      %v3031 = vmul.f32 %v3017, %v3029
      %v3032 = vadd.f32 %v1668, %v3031
      %v3033 = vtanh.pop %v3032
      %v3034 = vsub.f32 1.0, %v3027
      %v3035 = vmul.f32 %v3034, %v3033
      %v3036 = vrot.slane %v2794, 5
      %v3038 = vmul.f32 %v3027, %v3036
      %v3039 = vadd.f32 %v3035, %v3038
      %v3041 = vrot.slane %v3039, 3
      %v3043 = vsel %vm2215, %v3041, 0.0
      %v3044 = vadd.f32 %v2787, %v3043
      %vm3045 = vcmp.le.s32.totalorder %v1141, 0
      %v3046 = vsel %vm3045, 1, 0
      %3047 = vset.pattern.permute.xlu0 0
      %3048 = vperm.xlu0 %3047, %v3046
      %v3049 = vpop.permute.xlu0 %3048
      %vm3050 = vcmp.eq.s32.totalorder %v3049, 1
      %v3051 = vsel %vm3050, 0.0, %v3041
      %v3053 = vsel %vm1710, %v3051, 0
      %3055 = vmatprep.subr.mxu0 0.0
      %3056 = vmatpush1.msra.mxu0 %v1685
      %3057 = vmatprep.subr.mxu0 0.0
      %3058 = vmatpush1.msra.mxu0 %v1686
      %3059 = vmatprep.subr.mxu0 0.0
      %3060 = vmatpush1.msra.mxu0 0.0
      %3061 = vmatprep.subr.mxu0 0.0
      %3062 = vmatpush1.msra.mxu0 0.0
      %3063 = vmatprep.subr.mxu0 0.0
      %3064 = vmatpush1.msra.mxu0 0.0
      %3065 = vmatprep.subr.mxu0 0.0
      %3066 = vmatpush1.msra.mxu0 0.0
      %3067 = vmatprep.subr.mxu0 0.0
      %3068 = vmatpush1.msra.mxu0 0.0
      %3069 = vmatprep.subr.mxu0 0.0
      %3070 = vmatpush1.msra.mxu0 0.0
      %3071 = vmatprep.subr.mxu0 0.0
      %3072 = vmatpush1.msra.mxu0 0.0
      %3073 = vmatprep.subr.mxu0 0.0
      %3074 = vmatpush1.msra.mxu0 0.0
      %3075 = vmatprep.subr.mxu0 0.0
      %3076 = vmatpush1.msra.mxu0 0.0
      %3077 = vmatprep.subr.mxu0 0.0
      %3078 = vmatpush1.msra.mxu0 0.0
      %3079 = vmatprep.subr.mxu0 0.0
      %3080 = vmatpush1.msra.mxu0 0.0
      %3081 = vmatprep.subr.mxu0 0.0
      %3082 = vmatpush1.msra.mxu0 0.0
      %3083 = vmatprep.subr.mxu0 0.0
      %3084 = vmatpush1.msra.mxu0 0.0
      %3085 = vmatprep.subr.mxu0 0.0
      %3086 = vmatpush1.msra.mxu0 0.0
      %3087 = vmatprep.subr.mxu0 0.0
      %3088 = vmatpush1.msra.mxu0 0.0
      %3089 = vmatprep.subr.mxu0 0.0
      %3090 = vmatpush1.msra.mxu0 0.0
      %3091 = vmatprep.subr.mxu0 0.0
      %3092 = vmatpush1.msra.mxu0 0.0
      %3093 = vmatprep.subr.mxu0 0.0
      %3094 = vmatpush1.msra.mxu0 0.0
      %3095 = vmatprep.subr.mxu0 0.0
      %3096 = vmatpush1.msra.mxu0 0.0
      %3097 = vmatprep.subr.mxu0 0.0
      %3098 = vmatpush1.msra.mxu0 0.0
      %3099 = vmatprep.subr.mxu0 0.0
      %3100 = vmatpush1.msra.mxu0 0.0
      %3101 = vmatprep.subr.mxu0 0.0
      %3102 = vmatpush1.msra.mxu0 0.0
      %3103 = vmatprep.subr.mxu0 0.0
      %3104 = vmatpush1.msra.mxu0 0.0
      %3105 = vmatprep.subr.mxu0 0.0
      %3106 = vmatpush1.msra.mxu0 0.0
      %3107 = vmatprep.subr.mxu0 0.0
      %3108 = vmatpush1.msra.mxu0 0.0
      %3109 = vmatprep.subr.mxu0 0.0
      %3110 = vmatpush1.msra.mxu0 0.0
      %3111 = vmatprep.subr.mxu0 0.0
      %3112 = vmatpush1.msra.mxu0 0.0
      %3113 = vmatprep.subr.mxu0 0.0
      %3114 = vmatpush1.msra.mxu0 0.0
      %3115 = vmatprep.subr.mxu0 0.0
      %3116 = vmatpush1.msra.mxu0 0.0
      %3117 = vmatprep.subr.mxu0 0.0
      %3118 = vmatpush1.msra.mxu0 0.0
      %3119 = vmatprep.mubr.f32.mxu0 0.0
      %3120 = vmatmul.mubr.f32.gmra.mrb[0].mxu0 %v3053
      %v3121 = vpop.f32.mrb[0].mxu0
      %v3122 = vadd.f32 %v2505, %v3121
      %v3123 = vpop.f32.mrb[0].mxu0
      %3124 = vdwg.mxu0
      %3125 = vmatprep.subr.mxu0 0.0
      %3126 = vmatpush1.msra.mxu0 %v1688
      %3127 = vmatprep.subr.mxu0 0.0
      %3128 = vmatpush1.msra.mxu0 %v1689
      %3129 = vmatprep.subr.mxu0 0.0
      %3130 = vmatpush1.msra.mxu0 0.0
      %3131 = vmatprep.subr.mxu0 0.0
      %3132 = vmatpush1.msra.mxu0 0.0
      %3133 = vmatprep.subr.mxu0 0.0
      %3134 = vmatpush1.msra.mxu0 0.0
      %3135 = vmatprep.subr.mxu0 0.0
      %3136 = vmatpush1.msra.mxu0 0.0
      %3137 = vmatprep.subr.mxu0 0.0
      %3138 = vmatpush1.msra.mxu0 0.0
      %3139 = vmatprep.subr.mxu0 0.0
      %3140 = vmatpush1.msra.mxu0 0.0
      %3141 = vmatprep.subr.mxu0 0.0
      %3142 = vmatpush1.msra.mxu0 0.0
      %3143 = vmatprep.subr.mxu0 0.0
      %3144 = vmatpush1.msra.mxu0 0.0
      %3145 = vmatprep.subr.mxu0 0.0
      %3146 = vmatpush1.msra.mxu0 0.0
      %3147 = vmatprep.subr.mxu0 0.0
      %3148 = vmatpush1.msra.mxu0 0.0
      %3149 = vmatprep.subr.mxu0 0.0
      %3150 = vmatpush1.msra.mxu0 0.0
      %3151 = vmatprep.subr.mxu0 0.0
      %3152 = vmatpush1.msra.mxu0 0.0
      %3153 = vmatprep.subr.mxu0 0.0
      %3154 = vmatpush1.msra.mxu0 0.0
      %3155 = vmatprep.subr.mxu0 0.0
      %3156 = vmatpush1.msra.mxu0 0.0
      %3157 = vmatprep.subr.mxu0 0.0
      %3158 = vmatpush1.msra.mxu0 0.0
      %3159 = vmatprep.subr.mxu0 0.0
      %3160 = vmatpush1.msra.mxu0 0.0
      %3161 = vmatprep.subr.mxu0 0.0
      %3162 = vmatpush1.msra.mxu0 0.0
      %3163 = vmatprep.subr.mxu0 0.0
      %3164 = vmatpush1.msra.mxu0 0.0
      %3165 = vmatprep.subr.mxu0 0.0
      %3166 = vmatpush1.msra.mxu0 0.0
      %3167 = vmatprep.subr.mxu0 0.0
      %3168 = vmatpush1.msra.mxu0 0.0
      %3169 = vmatprep.subr.mxu0 0.0
      %3170 = vmatpush1.msra.mxu0 0.0
      %3171 = vmatprep.subr.mxu0 0.0
      %3172 = vmatpush1.msra.mxu0 0.0
      %3173 = vmatprep.subr.mxu0 0.0
      %3174 = vmatpush1.msra.mxu0 0.0
      %3175 = vmatprep.subr.mxu0 0.0
      %3176 = vmatpush1.msra.mxu0 0.0
      %3177 = vmatprep.subr.mxu0 0.0
      %3178 = vmatpush1.msra.mxu0 0.0
      %3179 = vmatprep.subr.mxu0 0.0
      %3180 = vmatpush1.msra.mxu0 0.0
      %3181 = vmatprep.subr.mxu0 0.0
      %3182 = vmatpush1.msra.mxu0 0.0
      %3183 = vmatprep.subr.mxu0 0.0
      %3184 = vmatpush1.msra.mxu0 0.0
      %3185 = vmatprep.subr.mxu0 0.0
      %3186 = vmatpush1.msra.mxu0 0.0
      %3187 = vmatprep.subr.mxu0 0.0
      %3188 = vmatpush1.msra.mxu0 0.0
      %3189 = vmatprep.mubr.f32.mxu0 0.0
      %3190 = vmatmul.mubr.f32.gmra.mrb[0].mxu0 %v3053
      %v3191 = vpop.f32.mrb[0].mxu0
      %v3192 = vadd.f32 %v2581, %v3191
      %v3193 = vpop.f32.mrb[0].mxu0
      %3194 = vdwg.mxu0
      %3195 = vmatprep.subr.mxu0 0.0
      %3196 = vmatpush1.msra.mxu0 %v1691
      %3197 = vmatprep.subr.mxu0 0.0
      %3198 = vmatpush1.msra.mxu0 %v1692
      %3199 = vmatprep.subr.mxu0 0.0
      %3200 = vmatpush1.msra.mxu0 0.0
      %3201 = vmatprep.subr.mxu0 0.0
      %3202 = vmatpush1.msra.mxu0 0.0
      %3203 = vmatprep.subr.mxu0 0.0
      %3204 = vmatpush1.msra.mxu0 0.0
      %3205 = vmatprep.subr.mxu0 0.0
      %3206 = vmatpush1.msra.mxu0 0.0
      %3207 = vmatprep.subr.mxu0 0.0
      %3208 = vmatpush1.msra.mxu0 0.0
      %3209 = vmatprep.subr.mxu0 0.0
      %3210 = vmatpush1.msra.mxu0 0.0
      %3211 = vmatprep.subr.mxu0 0.0
      %3212 = vmatpush1.msra.mxu0 0.0
      %3213 = vmatprep.subr.mxu0 0.0
      %3214 = vmatpush1.msra.mxu0 0.0
      %3215 = vmatprep.subr.mxu0 0.0
      %3216 = vmatpush1.msra.mxu0 0.0
      %3217 = vmatprep.subr.mxu0 0.0
      %3218 = vmatpush1.msra.mxu0 0.0
      %3219 = vmatprep.subr.mxu0 0.0
      %3220 = vmatpush1.msra.mxu0 0.0
      %3221 = vmatprep.subr.mxu0 0.0
      %3222 = vmatpush1.msra.mxu0 0.0
      %3223 = vmatprep.subr.mxu0 0.0
      %3224 = vmatpush1.msra.mxu0 0.0
      %3225 = vmatprep.subr.mxu0 0.0
      %3226 = vmatpush1.msra.mxu0 0.0
      %3227 = vmatprep.subr.mxu0 0.0
      %3228 = vmatpush1.msra.mxu0 0.0
      %3229 = vmatprep.subr.mxu0 0.0
      %3230 = vmatpush1.msra.mxu0 0.0
      %3231 = vmatprep.subr.mxu0 0.0
      %3232 = vmatpush1.msra.mxu0 0.0
      %3233 = vmatprep.subr.mxu0 0.0
      %3234 = vmatpush1.msra.mxu0 0.0
      %3235 = vmatprep.subr.mxu0 0.0
      %3236 = vmatpush1.msra.mxu0 0.0
      %3237 = vmatprep.subr.mxu0 0.0
      %3238 = vmatpush1.msra.mxu0 0.0
      %3239 = vmatprep.subr.mxu0 0.0
      %3240 = vmatpush1.msra.mxu0 0.0
      %3241 = vmatprep.subr.mxu0 0.0
      %3242 = vmatpush1.msra.mxu0 0.0
      %3243 = vmatprep.subr.mxu0 0.0
      %3244 = vmatpush1.msra.mxu0 0.0
      %3245 = vmatprep.subr.mxu0 0.0
      %3246 = vmatpush1.msra.mxu0 0.0
      %3247 = vmatprep.subr.mxu0 0.0
      %3248 = vmatpush1.msra.mxu0 0.0
      %3249 = vmatprep.subr.mxu0 0.0
      %3250 = vmatpush1.msra.mxu0 0.0
      %3251 = vmatprep.subr.mxu0 0.0
      %3252 = vmatpush1.msra.mxu0 0.0
      %3253 = vmatprep.subr.mxu0 0.0
      %3254 = vmatpush1.msra.mxu0 0.0
      %3255 = vmatprep.subr.mxu0 0.0
      %3256 = vmatpush1.msra.mxu0 0.0
      %3257 = vmatprep.subr.mxu0 0.0
      %3258 = vmatpush1.msra.mxu0 0.0
      %3259 = vmatprep.mubr.f32.mxu0 0.0
      %3260 = vmatmul.mubr.f32.gmra.mrb[0].mxu0 %v3053
      %v3261 = vpop.f32.mrb[0].mxu0
      %v3262 = vadd.f32 %v2657, %v3261
      %v3263 = vpop.f32.mrb[0].mxu0
      %3264 = vdwg.mxu0
      %v3265 = vadd.f32 %v1492, %v3122
      %v3266 = vxor.u32 %v3265, 2147483648
      %v3267 = vmul.f32 %v3266, 1.442695
      %v3268 = vpow.pop %v3267
      %v3269 = vadd.f32 %v3268, 1.0
      %v3270 = vrcp.pop %v3269
      %v3271 = vmul.f32 1.0, %v3270
      %v3272 = vadd.f32 %v1580, %v3192
      %v3273 = vxor.u32 %v3272, 2147483648
      %v3274 = vmul.f32 %v3273, 1.442695
      %v3275 = vpow.pop %v3274
      %v3276 = vadd.f32 %v3275, 1.0
      %v3277 = vrcp.pop %v3276
      %v3278 = vmul.f32 1.0, %v3277
      %v3279 = vmul.f32 %v3271, %v3262
      %v3280 = vadd.f32 %v1668, %v3279
      %v3281 = vtanh.pop %v3280
      %v3282 = vsub.f32 1.0, %v3278
      %v3283 = vmul.f32 %v3282, %v3281
      %v3284 = vmul.f32 %v3278, %v3051
      %v3285 = vadd.f32 %v3283, %v3284
      %v3286 = vsel %vm1962, %v3285, 0.0
      %v3287 = vadd.f32 %v3044, %v3286
      %v3288 = vmax.f32 %v1142, 1.0
      %v3289 = vrcp.pop %v3288
      %3291 = vset.pattern.permute.xlu0 0
      %3292 = vperm.xlu0 %3291, %v3289
      %v3293 = vpop.permute.xlu0 %3292
      %v3295 = vmul.f32 %v2500, %v3293
      %v3296 = vmul.f32 %v3287, %v3293
      %3298 = vrot.lane.b32.xlu0 %v3296, 16
      %v3299 = vpop.permute.xlu0 %3298
      %v3301 = vsel %vm1710, %v3295, %v3299
      %vm3302 = vcmask 256000
      %3303 = vst.msk [vmem:[%s262] sm:$0x7] %vm3302, %v3301
      %s3304 = sshll.u32 %s1119, 4
      %3305 = dma.done [#allocation5], %s3304
      %s3306 = sshll.u32 %s1119, 4
      %3307 = dma.done %s409, %s3306
      %s3308 = sshll.u32 %s1119, 4
      %3309 = dma.done %s504, %s3308
      %s3310 = sshll.u32 %s1119, 4
      %3311 = dma.done %s599, %s3310
      %s3312 = sshll.u32 %s1119, 4
      %3313 = dma.done %s694, %s3312
      %s3314 = sshll.u32 %s1119, 4
      %3315 = dma.done %s789, %s3314
      %s3316 = sshll.u32 %s1119, 4
      %3317 = dma.done %s884, %s3316
      %s3318 = sshll.u32 %s1119, 4
      %3319 = dma.done %s979, %s3318
      %s3320 = sshll.u32 %s1119, 4
      %3321 = dma.done %s1074, %s3320
      %v3322 = vld [vmem:[#allocation3] sm:$0xff]
      %v3323 = vld [vmem:[#allocation3 + $0x8] sm:$0x1]
      %3324 = vst.msk [vmem:[%s267] sm:$0xff] %vm1154, %v3322
      %vm3325 = vcmask 253952
      %3326 = vst.msk [vmem:[%s267 + $0x8] sm:$0x1] %vm3325, %v3323
      %p3327 = scmp.lt.s32.totalorder %s26, 1
      %s3328 = scalar_select %p3327, %s26, 1
      %s3329 = smul.addr %s3328, 4
      %s3330 = scalar_lea.vmem %s7, %s3329
      %p3331 = scmp.lt.s32.totalorder %s26, 1
      %s3332 = scalar_select %p3331, %s26, 1
      %s3333 = smul.addr %s3332, 2
      %s3334 = smul.addr %s3333, 8
      %s3335 = scalar_lea.vmem %s8, %s3334
      // Predicated region
      $region581: #{tpu_custom_call.1} parent=39 // pred_check
        %p3336 = pneg %p154
      $region582: #{tpu_custom_call.1} parent=39 // pred_check_branch
        %3338 = sbr.rel (%p3336) target = $region584
      $region583: #{tpu_custom_call.1} parent=39 // pred_region
        _
      $region584: #{tpu_custom_call.1} parent=39 // pred_fallthru
        _
      // Predicated region
      $region585: #{tpu_custom_call.1} parent=39 // pred_check
        %p3339 = pneg %p180
      $region586: #{tpu_custom_call.1} parent=39 // pred_check_branch
        %3341 = sbr.rel (%p3339) target = $region588
      $region587: #{tpu_custom_call.1} parent=39 // pred_region
        _
      $region588: #{tpu_custom_call.1} parent=39 // pred_fallthru
        _
    $region40: #{tpu_custom_call.1} parent=5 // pred_fallthru
      _
    %p3342 = scmp.le.s32.totalorder 2, %s21
    // Predicated region
    $region589: #{tpu_custom_call.1} parent=5 // pred_check
      %p3343 = pneg %p3342
    $region590: #{tpu_custom_call.1} parent=5 // pred_check_branch
      %3345 = sbr.rel (%p3343) target = $region592
    $region591: #{tpu_custom_call.1} parent=5 // pred_region
      %s3346 = ssub.s32 %s21, 2
      // Predicated region
      $region593: #{tpu_custom_call.1} parent=591 // pred_check
        %p3347 = pneg %p160
      $region594: #{tpu_custom_call.1} parent=591 // pred_check_branch
        %3349 = sbr.rel (%p3347) target = $region596
      $region595: #{tpu_custom_call.1} parent=591 // pred_region
        %p3350 = scmp.lt.s32.totalorder %s27, 1
        %s3351 = scalar_select %p3350, %s27, 1
        %s3352 = smul.addr %s3351, 4
        %s3353 = scalar_lea.vmem %s7, %s3352
      $region596: #{tpu_custom_call.1} parent=591 // pred_fallthru
        _
      // Predicated region
      $region597: #{tpu_custom_call.1} parent=591 // pred_check
        %p3354 = pneg %p186
      $region598: #{tpu_custom_call.1} parent=591 // pred_check_branch
        %3356 = sbr.rel (%p3354) target = $region600
      $region599: #{tpu_custom_call.1} parent=591 // pred_region
        %p3357 = scmp.lt.s32.totalorder %s27, 1
        %s3358 = scalar_select %p3357, %s27, 1
        %s3359 = smul.addr %s3358, 2
        %s3360 = smul.addr %s3359, 8
        %s3361 = scalar_lea.vmem %s8, %s3360
      $region600: #{tpu_custom_call.1} parent=591 // pred_fallthru
        _
    $region592: #{tpu_custom_call.1} parent=5 // pred_fallthru
      _
  $region6: #{tpu_custom_call.1} parent=0 // loop_footer
    %s25 = sadd.s32 1, %s21
  $region7: #{tpu_custom_call.1} parent=0 // loop_footer_branch
    %20 = sbr.rel target = $region3
  $region8: #{tpu_custom_call.1} parent=0 // loop_exit
    _
  %3362 = vsyncmov [#allocation4]
  %s3363 = vpop.sfrf %3362
  %p3364 = scmp.eq.s32.totalorder %s3363, 0
  %p3365 = pneg %p3364
  %3367 = shalt.err (%p3365)
  %s3368 = scalar_lea.sflag [#allocation4], 1
  %3369 = vsyncmov %s3368
  %s3370 = vpop.sfrf %3369
  %p3371 = scmp.eq.s32.totalorder %s3370, 0
  %p3372 = pneg %p3371
  %3374 = shalt.err (%p3372)
  %s3375 = scalar_lea.sflag [#allocation4], 2
  %3376 = vsyncmov %s3375
  %s3377 = vpop.sfrf %3376
  %p3378 = scmp.eq.s32.totalorder %s3377, 0
  %p3379 = pneg %p3378
  %3381 = shalt.err (%p3379)
  %s3382 = scalar_lea.sflag [#allocation4], 3
  %3383 = vsyncmov %s3382
  %s3384 = vpop.sfrf %3383
  %p3385 = scmp.eq.s32.totalorder %s3384, 0
  %p3386 = pneg %p3385
  %3388 = shalt.err (%p3386)
  %s3389 = scalar_lea.sflag [#allocation4], 4
  %3390 = vsyncmov %s3389
  %s3391 = vpop.sfrf %3390
  %p3392 = scmp.eq.s32.totalorder %s3391, 0
  %p3393 = pneg %p3392
  %3395 = shalt.err (%p3393)
  %s3396 = scalar_lea.sflag [#allocation4], 5
  %3397 = vsyncmov %s3396
  %s3398 = vpop.sfrf %3397
  %p3399 = scmp.eq.s32.totalorder %s3398, 0
  %p3400 = pneg %p3399
  %3402 = shalt.err (%p3400)
  %s3403 = scalar_lea.sflag [#allocation4], 6
  %3404 = vsyncmov %s3403
  %s3405 = vpop.sfrf %3404
  %p3406 = scmp.eq.s32.totalorder %s3405, 0
  %p3407 = pneg %p3406
  %3409 = shalt.err (%p3407)
  %s3410 = scalar_lea.sflag [#allocation4], 7
  %3411 = vsyncmov %s3410
  %s3412 = vpop.sfrf %3411
  %p3413 = scmp.eq.s32.totalorder %s3412, 0
  %p3414 = pneg %p3413
  %3416 = shalt.err (%p3414)
  %s3417 = scalar_lea.sflag [#allocation4], 8
  %3418 = vsyncmov %s3417
  %s3419 = vpop.sfrf %3418
  %p3420 = scmp.eq.s32.totalorder %s3419, 0
  %p3421 = pneg %p3420
  %3423 = shalt.err (%p3421)
  %3424 = vsyncmov [#allocation5]
  %s3425 = vpop.sfrf %3424
  %p3426 = scmp.eq.s32.totalorder %s3425, 0
  %p3427 = pneg %p3426
  %3429 = shalt.err (%p3427)
  %s3430 = scalar_lea.sflag [#allocation5], 1
  %3431 = vsyncmov %s3430
  %s3432 = vpop.sfrf %3431
  %p3433 = scmp.eq.s32.totalorder %s3432, 0
  %p3434 = pneg %p3433
  %3436 = shalt.err (%p3434)
  %s3437 = scalar_lea.sflag [#allocation5], 2
  %3438 = vsyncmov %s3437
  %s3439 = vpop.sfrf %3438
  %p3440 = scmp.eq.s32.totalorder %s3439, 0
  %p3441 = pneg %p3440
  %3443 = shalt.err (%p3441)
  %s3444 = scalar_lea.sflag [#allocation5], 3
  %3445 = vsyncmov %s3444
  %s3446 = vpop.sfrf %3445
  %p3447 = scmp.eq.s32.totalorder %s3446, 0
  %p3448 = pneg %p3447
  %3450 = shalt.err (%p3448)
  %s3451 = scalar_lea.sflag [#allocation5], 4
  %3452 = vsyncmov %s3451
  %s3453 = vpop.sfrf %3452
  %p3454 = scmp.eq.s32.totalorder %s3453, 0
  %p3455 = pneg %p3454
  %3457 = shalt.err (%p3455)
  %s3458 = scalar_lea.sflag [#allocation5], 5
  %3459 = vsyncmov %s3458
  %s3460 = vpop.sfrf %3459
  %p3461 = scmp.eq.s32.totalorder %s3460, 0
  %p3462 = pneg %p3461
  %3464 = shalt.err (%p3462)
  %s3465 = scalar_lea.sflag [#allocation5], 6
  %3466 = vsyncmov %s3465
  %s3467 = vpop.sfrf %3466
  %p3468 = scmp.eq.s32.totalorder %s3467, 0
  %p3469 = pneg %p3468
  %3471 = shalt.err (%p3469)
  %s3472 = scalar_lea.sflag [#allocation5], 7
  %3473 = vsyncmov %s3472
  %s3474 = vpop.sfrf %3473
  %p3475 = scmp.eq.s32.totalorder %s3474, 0
  %p3476 = pneg %p3475
  %3478 = shalt.err (%p3476)
  %s3479 = scalar_lea.sflag [#allocation5], 8
  %3480 = vsyncmov %s3479
  %s3481 = vpop.sfrf %3480
  %p3482 = scmp.eq.s32.totalorder %s3481, 0
  %p3483 = pneg %p3482
  %3485 = shalt.err (%p3483)

</llo_original>
